<compile_context>
chip_gen: v6e
topology: v6e:2x2x1
jax: 0.10.0
libtpu: 0.0.40
codegen_flags: <defaults>
</compile_context>

<pallas_src>
import jax
import jax.numpy as jnp
from jax.experimental import pallas as pl
from jax.experimental.pallas import tpu as pltpu

ZSA_DIM = 512
HIDDEN = 512


# ----------------------------------------------------------------------------
# Kernel
# ----------------------------------------------------------------------------
def _value_kernel(zsa_ref, w14_ref, b14_ref, w2_ref, w5_ref, b25_ref,
                  w36_ref, bh_ref, q_ref):
    # MXU operands in bf16, f32 accumulation. astype is a no-op if the caller
    # already fed bf16 activations.
    x = zsa_ref[...].astype(jnp.bfloat16)

    # Fused layer 1 for both Q branches: [TB, 2*HIDDEN]
    h14 = jnp.dot(x, w14_ref[...], preferred_element_type=jnp.float32)
    h14 = jnp.maximum(h14 + b14_ref[...], 0.0)

    h1 = h14[:, :HIDDEN].astype(jnp.bfloat16)   # Q1 branch
    h4 = h14[:, HIDDEN:].astype(jnp.bfloat16)   # Q2 branch

    b25 = b25_ref[...]                          # [2, HIDDEN] f32

    # Layer 2, per branch.  Outputs stay f32 (heads are computed on the VPU).
    h2 = jnp.dot(h1, w2_ref[...], preferred_element_type=jnp.float32)
    h2 = jnp.maximum(h2 + b25[0:1, :], 0.0)

    h5 = jnp.dot(h4, w5_ref[...], preferred_element_type=jnp.float32)
    h5 = jnp.maximum(h5 + b25[1:2, :], 0.0)

    # 1-wide heads on VPU + XLU (lane reduce) instead of an N=2 MXU matmul:
    # no [TB, 2*HIDDEN] concat buffer, no zero-padded MACs.
    w36 = w36_ref[...]                          # [2, HIDDEN] f32 (row0=w3, row1=w6)
    q1 = jnp.sum(h2 * w36[0:1, :], axis=-1, keepdims=True)   # [TB, 1]
    q2 = jnp.sum(h5 * w36[1:2, :], axis=-1, keepdims=True)   # [TB, 1]
    q_ref[...] = jnp.concatenate([q1, q2], axis=1) + bh_ref[...]


# ----------------------------------------------------------------------------
# Wrapper
# ----------------------------------------------------------------------------
def _round_up(x, m):
    return ((x + m - 1) // m) * m


def _pick_batch_tile(B):
    """Batch tile selection.

    - B <= 256: one tile (nothing worth sharding; small-batch cost is weight DMA).
    - B  > 256: split into >= 2 grid steps so v7x's two TensorCores both get work,
      tiles a multiple of 8 rows, capped at 1024 to amortize the ~0.35 us per-step
      overhead while staying comfortably inside every generation's VMEM.
    """
    B8 = _round_up(max(B, 8), 8)
    if B8 <= 256:
        return B8
    return min(1024, _round_up(pl.cdiv(B8, 2), 8))


def value_network_forward(zsa, packed):
    """zsa: [B, ZSA_DIM] (f32 or bf16); packed: dict from pack_params(). -> (q1, q2)."""
    B = zsa.shape[0]

    TB = _pick_batch_tile(B)
    Bp = _round_up(B, TB)
    if Bp != B:
        zsa = jnp.pad(zsa, ((0, Bp - B), (0, 0)))

    grid = (Bp // TB,)

    in_specs = [
        pl.BlockSpec((TB, ZSA_DIM), lambda i: (i, 0)),          # zsa (tiled on batch)
        pl.BlockSpec((ZSA_DIM, 2 * HIDDEN), lambda i: (0, 0)),  # w14  (resident)
        pl.BlockSpec((1, 2 * HIDDEN), lambda i: (0, 0)),        # b14  (resident)
        pl.BlockSpec((HIDDEN, HIDDEN), lambda i: (0, 0)),       # w2   (resident)
        pl.BlockSpec((HIDDEN, HIDDEN), lambda i: (0, 0)),       # w5   (resident)
        pl.BlockSpec((2, HIDDEN), lambda i: (0, 0)),            # b25  (resident)
        pl.BlockSpec((2, HIDDEN), lambda i: (0, 0)),            # w36  (resident, f32)
        pl.BlockSpec((1, 2), lambda i: (0, 0)),                 # bh   (resident)
    ]
    out_specs = pl.BlockSpec((TB, 2), lambda i: (i, 0))

    zsa_bytes = zsa.size * zsa.dtype.itemsize
    weight_bytes = sum(packed[k].size * packed[k].dtype.itemsize
                       for k in ("w14", "b14", "w2", "w5", "b25", "w36", "bh"))
    flops = 2 * Bp * (ZSA_DIM * 2 * HIDDEN + 2 * HIDDEN * HIDDEN + 2 * HIDDEN)
    cost = pl.CostEstimate(
        flops=flops,
        transcendentals=0,
        bytes_accessed=weight_bytes + zsa_bytes + Bp * 2 * 4,
    )

    q = pl.pallas_call(
        _value_kernel,
        out_shape=jax.ShapeDtypeStruct((Bp, 2), jnp.float32),
        grid=grid,
        in_specs=in_specs,
        out_specs=out_specs,
        compiler_params=pltpu.CompilerParams(
            dimension_semantics=("parallel",),
            # TB up to 1024 needs ~20 MiB of scoped VMEM (f32 h14/h2/h5 plus
            # double-buffered zsa tiles + resident weights); raise the limit so
            # v5e's 16 MiB default doesn't spill.  48 MiB fits every generation
            # (v7x physical VMEM is 64 MiB per TensorCore).
            vmem_limit_bytes=48 * 1024 * 1024,
        ),
        cost_estimate=cost,
    )(zsa, packed["w14"], packed["b14"], packed["w2"], packed["w5"],
      packed["b25"], packed["w36"], packed["bh"])

    q = q[:B]
    return q[:, 0:1], q[:, 1:2]


# ----------------------------------------------------------------------------
# Parameter init (mirrors the PyTorch module) + packing for the kernel
# ----------------------------------------------------------------------------
def _xavier_uniform_relu(key, fan_in, fan_out):
    # xavier_uniform_ with gain = calculate_gain('relu') = sqrt(2); stored
    # transposed to [in, out] so each layer is `x @ W + b`.
    gain = jnp.sqrt(2.0)
    limit = gain * jnp.sqrt(6.0 / (fan_in + fan_out))
    return jax.random.uniform(key, (fan_in, fan_out), jnp.float32, -limit, limit)


def init_value_network_params(key):
    ks = jax.random.split(key, 6)
    return {
        "w1": _xavier_uniform_relu(ks[0], ZSA_DIM, HIDDEN), "b1": jnp.zeros((1, HIDDEN), jnp.float32),
        "w2": _xavier_uniform_relu(ks[1], HIDDEN, HIDDEN),  "b2": jnp.zeros((1, HIDDEN), jnp.float32),
        "w3": _xavier_uniform_relu(ks[2], HIDDEN, 1),       "b3": jnp.zeros((1, 1), jnp.float32),
        "w4": _xavier_uniform_relu(ks[3], ZSA_DIM, HIDDEN), "b4": jnp.zeros((1, HIDDEN), jnp.float32),
        "w5": _xavier_uniform_relu(ks[4], HIDDEN, HIDDEN),  "b5": jnp.zeros((1, HIDDEN), jnp.float32),
        "w6": _xavier_uniform_relu(ks[5], HIDDEN, 1),       "b6": jnp.zeros((1, 1), jnp.float32),
    }


def pack_params(p):
    """Fuse / repack the six Linear layers for the kernel.

    Large matmul weights go to bf16 (MXU operands); biases and the two 1-wide
    head rows stay f32 (they feed f32 VPU math).
    """
    w14 = jnp.concatenate([p["w1"], p["w4"]], axis=1).astype(jnp.bfloat16)   # [512, 1024]
    b14 = jnp.concatenate([p["b1"], p["b4"]], axis=1)                        # [1, 1024] f32
    b25 = jnp.concatenate([p["b2"], p["b5"]], axis=0)                        # [2, 512]  f32
    w36 = jnp.concatenate([p["w3"].T, p["w6"].T], axis=0)                    # [2, 512]  f32
    bh = jnp.concatenate([p["b3"], p["b6"]], axis=1)                         # [1, 2]    f32
    return {
        "w14": w14, "b14": b14,
        "w2": p["w2"].astype(jnp.bfloat16), "w5": p["w5"].astype(jnp.bfloat16),
        "b25": b25,
        "w36": w36, "bh": bh,
    }


# ----------------------------------------------------------------------------
# References
# ----------------------------------------------------------------------------
def _reference_forward_f32(zsa, p):
    """Pure-f32 reference matching the PyTorch module exactly."""
    h = jax.nn.relu(zsa @ p["w1"] + p["b1"])
    h = jax.nn.relu(h @ p["w2"] + p["b2"])
    q1 = h @ p["w3"] + p["b3"]
    g = jax.nn.relu(zsa @ p["w4"] + p["b4"])
    g = jax.nn.relu(g @ p["w5"] + p["b5"])
    q2 = g @ p["w6"] + p["b6"]
    return q1, q2


def _reference_forward_bf16(zsa, packed):
    """Reference mirroring the kernel's bf16-operand / f32-accumulate math."""
    x = zsa.astype(jnp.bfloat16)
    h14 = jnp.dot(x, packed["w14"], preferred_element_type=jnp.float32) + packed["b14"]
    h14 = jnp.maximum(h14, 0.0)
    h2 = jnp.dot(h14[:, :HIDDEN].astype(jnp.bfloat16), packed["w2"],
                 preferred_element_type=jnp.float32) + packed["b25"][0:1, :]
    h2 = jnp.maximum(h2, 0.0)
    h5 = jnp.dot(h14[:, HIDDEN:].astype(jnp.bfloat16), packed["w5"],
                 preferred_element_type=jnp.float32) + packed["b25"][1:2, :]
    h5 = jnp.maximum(h5, 0.0)
    q1 = jnp.sum(h2 * packed["w36"][0:1, :], axis=-1, keepdims=True) + packed["bh"][:, 0:1]
    q2 = jnp.sum(h5 * packed["w36"][1:2, :], axis=-1, keepdims=True) + packed["bh"][:, 1:2]
    return q1, q2


# ----------------------------------------------------------------------------
# Demo / self-test
# ----------------------------------------------------------------------------
if __name__ == "__main__":
    key = jax.random.PRNGKey(0)
    k_params, k_input = jax.random.split(key)

    params = init_value_network_params(k_params)
    packed = pack_params(params)

    B = 8  # small demo batch
    zsa = jax.random.normal(k_input, (B, ZSA_DIM), jnp.float32)

    q1, q2 = value_network_forward(zsa, packed)
    jax.block_until_ready((q1, q2))
    assert q1.shape == (B, 1) and q2.shape == (B, 1)

    # Tight check against a reference doing the same bf16-operand math.
    q1_b, q2_b = _reference_forward_bf16(zsa, packed)
    assert jnp.allclose(q1, q1_b, atol=1e-2, rtol=1e-2)
    assert jnp.allclose(q2, q2_b, atol=1e-2, rtol=1e-2)

    # Loose check against the exact f32 PyTorch-equivalent semantics
    # (bf16 weights/activations introduce ~0.1-1% relative error).
    q1_f, q2_f = _reference_forward_f32(zsa, params)
    assert jnp.allclose(q1, q1_f, atol=1e-1, rtol=1e-1)
    assert jnp.allclose(q2, q2_f, atol=1e-1, rtol=1e-1)

    print("KERNEL_OK")
</pallas_src>

<mosaic_0001>
module attributes {stable_mosaic.version = 11 : i64} {
  func.func @_value_kernel(%arg0: i32, %arg1: memref<8x512xf32, #tpu.memory_space<vmem>>, %arg2: memref<512x1024xbf16, #tpu.memory_space<vmem>>, %arg3: memref<1x1024xf32, #tpu.memory_space<vmem>>, %arg4: memref<512x512xbf16, #tpu.memory_space<vmem>>, %arg5: memref<512x512xbf16, #tpu.memory_space<vmem>>, %arg6: memref<2x512xf32, #tpu.memory_space<vmem>>, %arg7: memref<2x512xf32, #tpu.memory_space<vmem>>, %arg8: memref<1x2xf32, #tpu.memory_space<vmem>>, %arg9: memref<8x2xf32, #tpu.memory_space<vmem>>) attributes {dimension_semantics = [#tpu.dimension_semantics<parallel>], iteration_bounds = array<i64: 1>, scalar_prefetch = 0 : i64, scratch_operands = 0 : i64, tpu.core_type = #tpu.core_type<tc>, window_params = [{transform_indices = @transform_0, window_bounds = array<i64: 8, 512>}, {pipeline_mode = #tpu.pipeline_mode<synchronous>, transform_indices = @transform_1, window_bounds = array<i64: 512, 1024>}, {pipeline_mode = #tpu.pipeline_mode<synchronous>, transform_indices = @transform_2, window_bounds = array<i64: 1, 1024>}, {pipeline_mode = #tpu.pipeline_mode<synchronous>, transform_indices = @transform_3, window_bounds = array<i64: 512, 512>}, {pipeline_mode = #tpu.pipeline_mode<synchronous>, transform_indices = @transform_4, window_bounds = array<i64: 512, 512>}, {pipeline_mode = #tpu.pipeline_mode<synchronous>, transform_indices = @transform_5, window_bounds = array<i64: 2, 512>}, {pipeline_mode = #tpu.pipeline_mode<synchronous>, transform_indices = @transform_6, window_bounds = array<i64: 2, 512>}, {pipeline_mode = #tpu.pipeline_mode<synchronous>, transform_indices = @transform_7, window_bounds = array<i64: 1, 2>}, {transform_indices = @transform_8, window_bounds = array<i64: 8, 2>}]} {
    %c0 = arith.constant 0 : index
    %c0_0 = arith.constant 0 : index
    %0 = vector.load %arg1[%c0, %c0_0] : memref<8x512xf32, #tpu.memory_space<vmem>>, vector<8x512xf32>
    %1 = arith.truncf %0 : vector<8x512xf32> to vector<8x512xbf16>
    %c0_1 = arith.constant 0 : index
    %c0_2 = arith.constant 0 : index
    %2 = vector.load %arg2[%c0_1, %c0_2] : memref<512x1024xbf16, #tpu.memory_space<vmem>>, vector<512x1024xbf16>
    %cst = arith.constant dense<0.000000e+00> : vector<8x1024xf32>
    %3 = tpu.matmul %1, %2, %cst {dimension_numbers = #tpu.dot_dimension_numbers<[1], [0], [0], [1], [0, 0, 1, 1], [], []>} : vector<8x512xbf16>, vector<512x1024xbf16>, vector<8x1024xf32> -> vector<8x1024xf32>
    %c0_3 = arith.constant 0 : index
    %c0_4 = arith.constant 0 : index
    %4 = vector.load %arg3[%c0_3, %c0_4] : memref<1x1024xf32, #tpu.memory_space<vmem>>, vector<1x1024xf32>
    %5 = vector.broadcast %4 : vector<1x1024xf32> to vector<8x1024xf32>
    %6 = arith.addf %3, %5 : vector<8x1024xf32>
    %cst_5 = arith.constant 0.000000e+00 : f32
    %7 = vector.broadcast %cst_5 : f32 to vector<8x1024xf32>
    %8 = arith.maximumf %6, %7 : vector<8x1024xf32>
    %9 = vector.extract_strided_slice %8 {offsets = [0, 0], sizes = [8, 512], strides = [1, 1]} : vector<8x1024xf32> to vector<8x512xf32>
    %10 = arith.truncf %9 : vector<8x512xf32> to vector<8x512xbf16>
    %11 = vector.extract_strided_slice %8 {offsets = [0, 512], sizes = [8, 512], strides = [1, 1]} : vector<8x1024xf32> to vector<8x512xf32>
    %12 = arith.truncf %11 : vector<8x512xf32> to vector<8x512xbf16>
    %c0_6 = arith.constant 0 : index
    %c0_7 = arith.constant 0 : index
    %13 = vector.load %arg6[%c0_6, %c0_7] : memref<2x512xf32, #tpu.memory_space<vmem>>, vector<2x512xf32>
    %c0_8 = arith.constant 0 : index
    %c0_9 = arith.constant 0 : index
    %14 = vector.load %arg4[%c0_8, %c0_9] : memref<512x512xbf16, #tpu.memory_space<vmem>>, vector<512x512xbf16>
    %cst_10 = arith.constant dense<0.000000e+00> : vector<8x512xf32>
    %15 = tpu.matmul %10, %14, %cst_10 {dimension_numbers = #tpu.dot_dimension_numbers<[1], [0], [0], [1], [0, 0, 1, 1], [], []>} : vector<8x512xbf16>, vector<512x512xbf16>, vector<8x512xf32> -> vector<8x512xf32>
    %16 = vector.extract_strided_slice %13 {offsets = [0, 0], sizes = [1, 512], strides = [1, 1]} : vector<2x512xf32> to vector<1x512xf32>
    %17 = vector.broadcast %16 : vector<1x512xf32> to vector<8x512xf32>
    %18 = arith.addf %15, %17 : vector<8x512xf32>
    %cst_11 = arith.constant 0.000000e+00 : f32
    %19 = vector.broadcast %cst_11 : f32 to vector<8x512xf32>
    %20 = arith.maximumf %18, %19 : vector<8x512xf32>
    %c0_12 = arith.constant 0 : index
    %c0_13 = arith.constant 0 : index
    %21 = vector.load %arg5[%c0_12, %c0_13] : memref<512x512xbf16, #tpu.memory_space<vmem>>, vector<512x512xbf16>
    %cst_14 = arith.constant dense<0.000000e+00> : vector<8x512xf32>
    %22 = tpu.matmul %12, %21, %cst_14 {dimension_numbers = #tpu.dot_dimension_numbers<[1], [0], [0], [1], [0, 0, 1, 1], [], []>} : vector<8x512xbf16>, vector<512x512xbf16>, vector<8x512xf32> -> vector<8x512xf32>
    %23 = vector.extract_strided_slice %13 {offsets = [1, 0], sizes = [1, 512], strides = [1, 1]} : vector<2x512xf32> to vector<1x512xf32>
    %24 = vector.broadcast %23 : vector<1x512xf32> to vector<8x512xf32>
    %25 = arith.addf %22, %24 : vector<8x512xf32>
    %cst_15 = arith.constant 0.000000e+00 : f32
    %26 = vector.broadcast %cst_15 : f32 to vector<8x512xf32>
    %27 = arith.maximumf %25, %26 : vector<8x512xf32>
    %c0_16 = arith.constant 0 : index
    %c0_17 = arith.constant 0 : index
    %28 = vector.load %arg7[%c0_16, %c0_17] : memref<2x512xf32, #tpu.memory_space<vmem>>, vector<2x512xf32>
    %29 = vector.extract_strided_slice %28 {offsets = [0, 0], sizes = [1, 512], strides = [1, 1]} : vector<2x512xf32> to vector<1x512xf32>
    %30 = vector.broadcast %29 : vector<1x512xf32> to vector<8x512xf32>
    %31 = arith.mulf %20, %30 : vector<8x512xf32>
    %cst_18 = arith.constant dense<0.000000e+00> : vector<8xf32>
    %32 = vector.multi_reduction <add>, %31, %cst_18 [1] : vector<8x512xf32> to vector<8xf32>
    %33 = vector.shape_cast %32 : vector<8xf32> to vector<8x1xf32>
    %34 = vector.extract_strided_slice %28 {offsets = [1, 0], sizes = [1, 512], strides = [1, 1]} : vector<2x512xf32> to vector<1x512xf32>
    %35 = vector.broadcast %34 : vector<1x512xf32> to vector<8x512xf32>
    %36 = arith.mulf %27, %35 : vector<8x512xf32>
    %cst_19 = arith.constant dense<0.000000e+00> : vector<8xf32>
    %37 = vector.multi_reduction <add>, %36, %cst_19 [1] : vector<8x512xf32> to vector<8xf32>
    %38 = vector.shape_cast %37 : vector<8xf32> to vector<8x1xf32>
    %39 = tpu.concatenate %33, %38 in 1 : vector<8x1xf32>, vector<8x1xf32> -> vector<8x2xf32>
    %c0_20 = arith.constant 0 : index
    %c0_21 = arith.constant 0 : index
    %40 = vector.load %arg8[%c0_20, %c0_21] : memref<1x2xf32, #tpu.memory_space<vmem>>, vector<1x2xf32>
    %41 = vector.broadcast %40 : vector<1x2xf32> to vector<8x2xf32>
    %42 = arith.addf %39, %41 : vector<8x2xf32>
    %c0_22 = arith.constant 0 : index
    %c0_23 = arith.constant 0 : index
    %43 = vector.load %arg9[%c0_22, %c0_23] : memref<8x2xf32, #tpu.memory_space<vmem>>, vector<8x2xf32>
    tpu.vector_store %arg9[%c0_22, %c0_23], %42 {strides = array<i32>} : memref<8x2xf32, #tpu.memory_space<vmem>>, vector<8x2xf32>,
    return
  }
  func.func @transform_0(%arg0: i32) -> (i32, i32) {
    %c0_i32 = arith.constant 0 : i32
    %c0_i32_0 = arith.constant 0 : i32
    return %arg0, %c0_i32 : i32, i32
  }
  func.func @transform_1(%arg0: i32) -> (i32, i32) {
    %c0_i32 = arith.constant 0 : i32
    %c0_i32_0 = arith.constant 0 : i32
    %c0_i32_1 = arith.constant 0 : i32
    return %c0_i32, %c0_i32_0 : i32, i32
  }
  func.func @transform_2(%arg0: i32) -> (i32, i32) {
    %c0_i32 = arith.constant 0 : i32
    %c0_i32_0 = arith.constant 0 : i32
    %c0_i32_1 = arith.constant 0 : i32
    return %c0_i32, %c0_i32_0 : i32, i32
  }
  func.func @transform_3(%arg0: i32) -> (i32, i32) {
    %c0_i32 = arith.constant 0 : i32
    %c0_i32_0 = arith.constant 0 : i32
    %c0_i32_1 = arith.constant 0 : i32
    return %c0_i32, %c0_i32_0 : i32, i32
  }
  func.func @transform_4(%arg0: i32) -> (i32, i32) {
    %c0_i32 = arith.constant 0 : i32
    %c0_i32_0 = arith.constant 0 : i32
    %c0_i32_1 = arith.constant 0 : i32
    return %c0_i32, %c0_i32_0 : i32, i32
  }
  func.func @transform_5(%arg0: i32) -> (i32, i32) {
    %c0_i32 = arith.constant 0 : i32
    %c0_i32_0 = arith.constant 0 : i32
    %c0_i32_1 = arith.constant 0 : i32
    return %c0_i32, %c0_i32_0 : i32, i32
  }
  func.func @transform_6(%arg0: i32) -> (i32, i32) {
    %c0_i32 = arith.constant 0 : i32
    %c0_i32_0 = arith.constant 0 : i32
    %c0_i32_1 = arith.constant 0 : i32
    return %c0_i32, %c0_i32_0 : i32, i32
  }
  func.func @transform_7(%arg0: i32) -> (i32, i32) {
    %c0_i32 = arith.constant 0 : i32
    %c0_i32_0 = arith.constant 0 : i32
    %c0_i32_1 = arith.constant 0 : i32
    return %c0_i32, %c0_i32_0 : i32, i32
  }
  func.func @transform_8(%arg0: i32) -> (i32, i32) {
    %c0_i32 = arith.constant 0 : i32
    %c0_i32_0 = arith.constant 0 : i32
    return %arg0, %c0_i32 : i32, i32
  }
}

</mosaic_0001>

<llo_original>
// kernel: tpu_custom_call.1
$region0: #{tpu_custom_call.1}
  #allocation0 [shape = 'u32[]', space=smem, size = 0x4, offset = 0x4, fixed_abs, tag = 'smem constant byte address 0x4 - core index']
  #allocation1 [shape = 'u32[144,128]{1,0:T(1,128)}', space=vmem, size = 0x12000, scoped, tag = 'internal scratch']
  %s0 = inlined_call_operand.hbm [shape: f32[8,512], index: 0, kind: input, shape index: {}]
  %s1 = inlined_call_operand.hbm [shape: bf16[512,1024], index: 1, kind: input, shape index: {}]
  %s2 = inlined_call_operand.hbm [shape: f32[1,1024], index: 2, kind: input, shape index: {}]
  %s3 = inlined_call_operand.hbm [shape: bf16[512,512], index: 3, kind: input, shape index: {}]
  %s4 = inlined_call_operand.hbm [shape: bf16[512,512], index: 4, kind: input, shape index: {}]
  %s5 = inlined_call_operand.vmem [shape: f32[2,512], index: 5, kind: input, shape index: {}]
  %s6 = inlined_call_operand.hbm [shape: f32[2,512], index: 6, kind: input, shape index: {}]
  %s7 = inlined_call_operand.vmem [shape: f32[1,2], index: 7, kind: input, shape index: {}]
  %s8 = inlined_call_operand.vmem [shape: f32[8,2], index: 8, kind: output, shape index: {}]
  %s9 = sld [smem:[#allocation0]]
  $region66: #{tpu_custom_call.1} parent=0
    _
  %s11 = ssub.s32 1, %s9
  %s12 = scalar_select 0, %s11, %s9
  $region1: #{tpu_custom_call.1} parent=0
    #allocation2 [shape = 'u8[16384]{0}', space=vmem, size = 0x4000, scoped, tag = 'input window, operand 0, single buffered']
    #allocation3 [shape = 's32[1]{0}', space=sflag, size = 0x4, scoped, tag = 'scoped memory for tpu_custom_call.1']
    #allocation4 [shape = 'u8[1048576]{0}', space=vmem, size = 0x100000, scoped, tag = 'input window, operand 1, single buffered']
    #allocation5 [shape = 's32[1]{0}', space=sflag, size = 0x4, scoped, tag = 'scoped memory for tpu_custom_call.1']
    #allocation6 [shape = 'u8[4096]{0}', space=vmem, size = 0x1000, scoped, tag = 'input window, operand 2, single buffered']
    #allocation7 [shape = 'u8[524288]{0}', space=vmem, size = 0x80000, scoped, tag = 'input window, operand 3, single buffered']
    #allocation8 [shape = 's32[1]{0}', space=sflag, size = 0x4, scoped, tag = 'scoped memory for tpu_custom_call.1']
    #allocation9 [shape = 'u8[524288]{0}', space=vmem, size = 0x80000, scoped, tag = 'input window, operand 4, single buffered']
    #allocation10 [shape = 'u8[4096]{0}', space=vmem, size = 0x1000, scoped, tag = 'input window, operand 6, single buffered']
    #allocation11 [shape = 's32[1]{0}', space=sflag, size = 0x4, scoped, tag = 'scoped memory for tpu_custom_call.1']
    %13 = vsyncpa [#allocation3], 0
    %14 = vsyncpa [#allocation5], 0
    %15 = vsyncpa [#allocation8], 0
    %16 = vsyncpa [#allocation11], 0
    // Predicated region
    $region2: #{tpu_custom_call.1} parent=1 // pred_check
      _
    $region3: #{tpu_custom_call.1} parent=1 // pred_check_branch
      %18 = sbr.rel (0) target = $region5
    $region4: #{tpu_custom_call.1} parent=1 // pred_region
      %s20 = ssub.s32 512, 512
      %21 = vsyncadd [#allocation3], %s20
      %s23 = sshll.u32 [#allocation2], 4
      %s24 = int_to_ptr.vmem [resolvable:$true] %s23
      %26 = dma.hbm_to_vmem [thread:$0]  %s0, 512, %s24, [#allocation3]
    $region5: #{tpu_custom_call.1} parent=1 // pred_fallthru
      _
    // Predicated region
    $region6: #{tpu_custom_call.1} parent=1 // pred_check
      _
    $region7: #{tpu_custom_call.1} parent=1 // pred_check_branch
      %28 = sbr.rel (0) target = $region9
    $region8: #{tpu_custom_call.1} parent=1 // pred_region
      %s30 = ssub.s32 32768, 32768
      %31 = vsyncadd [#allocation5], %s30
      %s32 = sshll.u32 [#allocation4], 4
      %s33 = int_to_ptr.vmem [resolvable:$true] %s32
      %38 = dma.hbm_to_vmem [thread:$0]  %s1, 32768, %s33, [#allocation5], 512, 512, 32
    $region9: #{tpu_custom_call.1} parent=1 // pred_fallthru
      _
    // Predicated region
    $region10: #{tpu_custom_call.1} parent=1 // pred_check
      _
    $region11: #{tpu_custom_call.1} parent=1 // pred_check_branch
      %40 = sbr.rel (0) target = $region13
    $region12: #{tpu_custom_call.1} parent=1 // pred_region
      %s42 = ssub.s32 128, 128
      %43 = vsyncadd [#allocation5], %s42
      %s45 = sshll.u32 [#allocation6], 4
      %s46 = int_to_ptr.vmem [resolvable:$true] %s45
      %48 = dma.hbm_to_vmem [thread:$0]  %s2, 128, %s46, [#allocation5]
    $region13: #{tpu_custom_call.1} parent=1 // pred_fallthru
      _
    // Predicated region
    $region14: #{tpu_custom_call.1} parent=1 // pred_check
      _
    $region15: #{tpu_custom_call.1} parent=1 // pred_check_branch
      %50 = sbr.rel (0) target = $region17
    $region16: #{tpu_custom_call.1} parent=1 // pred_region
      %s52 = ssub.s32 16384, 16384
      %53 = vsyncadd [#allocation8], %s52
      %s54 = sshll.u32 [#allocation7], 4
      %s55 = int_to_ptr.vmem [resolvable:$true] %s54
      %60 = dma.hbm_to_vmem [thread:$0]  %s3, 16384, %s55, [#allocation8], 256, 256, 16
    $region17: #{tpu_custom_call.1} parent=1 // pred_fallthru
      _
    // Predicated region
    $region18: #{tpu_custom_call.1} parent=1 // pred_check
      _
    $region19: #{tpu_custom_call.1} parent=1 // pred_check_branch
      %62 = sbr.rel (0) target = $region21
    $region20: #{tpu_custom_call.1} parent=1 // pred_region
      %s64 = ssub.s32 16384, 16384
      %65 = vsyncadd [#allocation8], %s64
      %s66 = sshll.u32 [#allocation9], 4
      %s67 = int_to_ptr.vmem [resolvable:$true] %s66
      %72 = dma.hbm_to_vmem [thread:$0]  %s4, 16384, %s67, [#allocation8], 256, 256, 16
    $region21: #{tpu_custom_call.1} parent=1 // pred_fallthru
      _
    // Predicated region
    $region22: #{tpu_custom_call.1} parent=1 // pred_check
      _
    $region23: #{tpu_custom_call.1} parent=1 // pred_check_branch
      %74 = sbr.rel (0) target = $region25
    $region24: #{tpu_custom_call.1} parent=1 // pred_region
      _
    $region25: #{tpu_custom_call.1} parent=1 // pred_fallthru
      _
    // Predicated region
    $region26: #{tpu_custom_call.1} parent=1 // pred_check
      _
    $region27: #{tpu_custom_call.1} parent=1 // pred_check_branch
      %76 = sbr.rel (0) target = $region29
    $region28: #{tpu_custom_call.1} parent=1 // pred_region
      %s78 = ssub.s32 128, 128
      %79 = vsyncadd [#allocation11], %s78
      %s81 = sshll.u32 [#allocation10], 4
      %s82 = int_to_ptr.vmem [resolvable:$true] %s81
      %84 = dma.hbm_to_vmem [thread:$0]  %s6, 128, %s82, [#allocation11]
    $region29: #{tpu_custom_call.1} parent=1 // pred_fallthru
      _
    // Predicated region
    $region30: #{tpu_custom_call.1} parent=1 // pred_check
      _
    $region31: #{tpu_custom_call.1} parent=1 // pred_check_branch
      %86 = sbr.rel (0) target = $region33
    $region32: #{tpu_custom_call.1} parent=1 // pred_region
      _
    $region33: #{tpu_custom_call.1} parent=1 // pred_fallthru
      _
    // Predicated region
    $region34: #{tpu_custom_call.1} parent=1 // pred_check
      _
    $region35: #{tpu_custom_call.1} parent=1 // pred_check_branch
      %88 = sbr.rel (0) target = $region37
    $region36: #{tpu_custom_call.1} parent=1 // pred_region
      %89 = dma.done [#allocation3], 512
    $region37: #{tpu_custom_call.1} parent=1 // pred_fallthru
      _
    // Predicated region
    $region38: #{tpu_custom_call.1} parent=1 // pred_check
      _
    $region39: #{tpu_custom_call.1} parent=1 // pred_check_branch
      %91 = sbr.rel (0) target = $region41
    $region40: #{tpu_custom_call.1} parent=1 // pred_region
      %92 = dma.done [#allocation5], 32768
    $region41: #{tpu_custom_call.1} parent=1 // pred_fallthru
      _
    // Predicated region
    $region42: #{tpu_custom_call.1} parent=1 // pred_check
      _
    $region43: #{tpu_custom_call.1} parent=1 // pred_check_branch
      %94 = sbr.rel (0) target = $region45
    $region44: #{tpu_custom_call.1} parent=1 // pred_region
      %95 = dma.done [#allocation5], 128
    $region45: #{tpu_custom_call.1} parent=1 // pred_fallthru
      _
    // Predicated region
    $region46: #{tpu_custom_call.1} parent=1 // pred_check
      _
    $region47: #{tpu_custom_call.1} parent=1 // pred_check_branch
      %97 = sbr.rel (0) target = $region49
    $region48: #{tpu_custom_call.1} parent=1 // pred_region
      %98 = dma.done [#allocation8], 16384
    $region49: #{tpu_custom_call.1} parent=1 // pred_fallthru
      _
    // Predicated region
    $region50: #{tpu_custom_call.1} parent=1 // pred_check
      _
    $region51: #{tpu_custom_call.1} parent=1 // pred_check_branch
      %100 = sbr.rel (0) target = $region53
    $region52: #{tpu_custom_call.1} parent=1 // pred_region
      %101 = dma.done [#allocation8], 16384
    $region53: #{tpu_custom_call.1} parent=1 // pred_fallthru
      _
    // Predicated region
    $region54: #{tpu_custom_call.1} parent=1 // pred_check
      _
    $region55: #{tpu_custom_call.1} parent=1 // pred_check_branch
      %103 = sbr.rel (0) target = $region57
    $region56: #{tpu_custom_call.1} parent=1 // pred_region
      %104 = dma.done [#allocation11], 128
    $region57: #{tpu_custom_call.1} parent=1 // pred_fallthru
      _
    %v105 = vld [vmem:[#allocation2] sm:$0xff]
    %v106 = vld [vmem:[#allocation2 + $0x8] sm:$0xff]
    %v107 = vld [vmem:[#allocation2 + $0x10] sm:$0xff]
    %v108 = vld [vmem:[#allocation2 + $0x18] sm:$0xff]
    %v109 = vpack.c.bf16 %v105, %v105
    %v110 = vpack.c.bf16 %v106, %v106
    %v111 = vpack.c.bf16 %v107, %v107
    %v112 = vpack.c.bf16 %v108, %v108
    %v113 = vld [vmem:[#allocation4] sm:$0xff]
    %v114 = vld [vmem:[#allocation4 + $0x8] sm:$0xff]
    %v115 = vld [vmem:[#allocation4 + $0x10] sm:$0xff]
    %v116 = vld [vmem:[#allocation4 + $0x18] sm:$0xff]
    %v117 = vld [vmem:[#allocation4 + $0x20] sm:$0xff]
    %v118 = vld [vmem:[#allocation4 + $0x28] sm:$0xff]
    %v119 = vld [vmem:[#allocation4 + $0x30] sm:$0xff]
    %v120 = vld [vmem:[#allocation4 + $0x38] sm:$0xff]
    %v121 = vld [vmem:[#allocation4 + $0x40] sm:$0xff]
    %v122 = vld [vmem:[#allocation4 + $0x48] sm:$0xff]
    %v123 = vld [vmem:[#allocation4 + $0x50] sm:$0xff]
    %v124 = vld [vmem:[#allocation4 + $0x58] sm:$0xff]
    %v125 = vld [vmem:[#allocation4 + $0x60] sm:$0xff]
    %v126 = vld [vmem:[#allocation4 + $0x68] sm:$0xff]
    %v127 = vld [vmem:[#allocation4 + $0x70] sm:$0xff]
    %v128 = vld [vmem:[#allocation4 + $0x78] sm:$0xff]
    %v129 = vld [vmem:[#allocation4 + $0x80] sm:$0xff]
    %v130 = vld [vmem:[#allocation4 + $0x88] sm:$0xff]
    %v131 = vld [vmem:[#allocation4 + $0x90] sm:$0xff]
    %v132 = vld [vmem:[#allocation4 + $0x98] sm:$0xff]
    %v133 = vld [vmem:[#allocation4 + $0xa0] sm:$0xff]
    %v134 = vld [vmem:[#allocation4 + $0xa8] sm:$0xff]
    %v135 = vld [vmem:[#allocation4 + $0xb0] sm:$0xff]
    %v136 = vld [vmem:[#allocation4 + $0xb8] sm:$0xff]
    %v137 = vld [vmem:[#allocation4 + $0xc0] sm:$0xff]
    %v138 = vld [vmem:[#allocation4 + $0xc8] sm:$0xff]
    %v139 = vld [vmem:[#allocation4 + $0xd0] sm:$0xff]
    %v140 = vld [vmem:[#allocation4 + $0xd8] sm:$0xff]
    %v141 = vld [vmem:[#allocation4 + $0xe0] sm:$0xff]
    %v142 = vld [vmem:[#allocation4 + $0xe8] sm:$0xff]
    %v143 = vld [vmem:[#allocation4 + $0xf0] sm:$0xff]
    %v144 = vld [vmem:[#allocation4 + $0xf8] sm:$0xff]
    %v145 = vld [vmem:[#allocation4 + $0x100] sm:$0xff]
    %v146 = vld [vmem:[#allocation4 + $0x108] sm:$0xff]
    %v147 = vld [vmem:[#allocation4 + $0x110] sm:$0xff]
    %v148 = vld [vmem:[#allocation4 + $0x118] sm:$0xff]
    %v149 = vld [vmem:[#allocation4 + $0x120] sm:$0xff]
    %v150 = vld [vmem:[#allocation4 + $0x128] sm:$0xff]
    %v151 = vld [vmem:[#allocation4 + $0x130] sm:$0xff]
    %v152 = vld [vmem:[#allocation4 + $0x138] sm:$0xff]
    %v153 = vld [vmem:[#allocation4 + $0x140] sm:$0xff]
    %v154 = vld [vmem:[#allocation4 + $0x148] sm:$0xff]
    %v155 = vld [vmem:[#allocation4 + $0x150] sm:$0xff]
    %v156 = vld [vmem:[#allocation4 + $0x158] sm:$0xff]
    %v157 = vld [vmem:[#allocation4 + $0x160] sm:$0xff]
    %v158 = vld [vmem:[#allocation4 + $0x168] sm:$0xff]
    %v159 = vld [vmem:[#allocation4 + $0x170] sm:$0xff]
    %v160 = vld [vmem:[#allocation4 + $0x178] sm:$0xff]
    %v161 = vld [vmem:[#allocation4 + $0x180] sm:$0xff]
    %v162 = vld [vmem:[#allocation4 + $0x188] sm:$0xff]
    %v163 = vld [vmem:[#allocation4 + $0x190] sm:$0xff]
    %v164 = vld [vmem:[#allocation4 + $0x198] sm:$0xff]
    %v165 = vld [vmem:[#allocation4 + $0x1a0] sm:$0xff]
    %v166 = vld [vmem:[#allocation4 + $0x1a8] sm:$0xff]
    %v167 = vld [vmem:[#allocation4 + $0x1b0] sm:$0xff]
    %v168 = vld [vmem:[#allocation4 + $0x1b8] sm:$0xff]
    %v169 = vld [vmem:[#allocation4 + $0x1c0] sm:$0xff]
    %v170 = vld [vmem:[#allocation4 + $0x1c8] sm:$0xff]
    %v171 = vld [vmem:[#allocation4 + $0x1d0] sm:$0xff]
    %v172 = vld [vmem:[#allocation4 + $0x1d8] sm:$0xff]
    %v173 = vld [vmem:[#allocation4 + $0x1e0] sm:$0xff]
    %v174 = vld [vmem:[#allocation4 + $0x1e8] sm:$0xff]
    %v175 = vld [vmem:[#allocation4 + $0x1f0] sm:$0xff]
    %v176 = vld [vmem:[#allocation4 + $0x1f8] sm:$0xff]
    %v177 = vld [vmem:[#allocation4 + $0x200] sm:$0xff]
    %v178 = vld [vmem:[#allocation4 + $0x208] sm:$0xff]
    %v179 = vld [vmem:[#allocation4 + $0x210] sm:$0xff]
    %v180 = vld [vmem:[#allocation4 + $0x218] sm:$0xff]
    %v181 = vld [vmem:[#allocation4 + $0x220] sm:$0xff]
    %v182 = vld [vmem:[#allocation4 + $0x228] sm:$0xff]
    %v183 = vld [vmem:[#allocation4 + $0x230] sm:$0xff]
    %v184 = vld [vmem:[#allocation4 + $0x238] sm:$0xff]
    %v185 = vld [vmem:[#allocation4 + $0x240] sm:$0xff]
    %v186 = vld [vmem:[#allocation4 + $0x248] sm:$0xff]
    %v187 = vld [vmem:[#allocation4 + $0x250] sm:$0xff]
    %v188 = vld [vmem:[#allocation4 + $0x258] sm:$0xff]
    %v189 = vld [vmem:[#allocation4 + $0x260] sm:$0xff]
    %v190 = vld [vmem:[#allocation4 + $0x268] sm:$0xff]
    %v191 = vld [vmem:[#allocation4 + $0x270] sm:$0xff]
    %v192 = vld [vmem:[#allocation4 + $0x278] sm:$0xff]
    %v193 = vld [vmem:[#allocation4 + $0x280] sm:$0xff]
    %v194 = vld [vmem:[#allocation4 + $0x288] sm:$0xff]
    %v195 = vld [vmem:[#allocation4 + $0x290] sm:$0xff]
    %v196 = vld [vmem:[#allocation4 + $0x298] sm:$0xff]
    %v197 = vld [vmem:[#allocation4 + $0x2a0] sm:$0xff]
    %v198 = vld [vmem:[#allocation4 + $0x2a8] sm:$0xff]
    %v199 = vld [vmem:[#allocation4 + $0x2b0] sm:$0xff]
    %v200 = vld [vmem:[#allocation4 + $0x2b8] sm:$0xff]
    %v201 = vld [vmem:[#allocation4 + $0x2c0] sm:$0xff]
    %v202 = vld [vmem:[#allocation4 + $0x2c8] sm:$0xff]
    %v203 = vld [vmem:[#allocation4 + $0x2d0] sm:$0xff]
    %v204 = vld [vmem:[#allocation4 + $0x2d8] sm:$0xff]
    %v205 = vld [vmem:[#allocation4 + $0x2e0] sm:$0xff]
    %v206 = vld [vmem:[#allocation4 + $0x2e8] sm:$0xff]
    %v207 = vld [vmem:[#allocation4 + $0x2f0] sm:$0xff]
    %v208 = vld [vmem:[#allocation4 + $0x2f8] sm:$0xff]
    %v209 = vld [vmem:[#allocation4 + $0x300] sm:$0xff]
    %v210 = vld [vmem:[#allocation4 + $0x308] sm:$0xff]
    %v211 = vld [vmem:[#allocation4 + $0x310] sm:$0xff]
    %v212 = vld [vmem:[#allocation4 + $0x318] sm:$0xff]
    %v213 = vld [vmem:[#allocation4 + $0x320] sm:$0xff]
    %v214 = vld [vmem:[#allocation4 + $0x328] sm:$0xff]
    %v215 = vld [vmem:[#allocation4 + $0x330] sm:$0xff]
    %v216 = vld [vmem:[#allocation4 + $0x338] sm:$0xff]
    %v217 = vld [vmem:[#allocation4 + $0x340] sm:$0xff]
    %v218 = vld [vmem:[#allocation4 + $0x348] sm:$0xff]
    %v219 = vld [vmem:[#allocation4 + $0x350] sm:$0xff]
    %v220 = vld [vmem:[#allocation4 + $0x358] sm:$0xff]
    %v221 = vld [vmem:[#allocation4 + $0x360] sm:$0xff]
    %v222 = vld [vmem:[#allocation4 + $0x368] sm:$0xff]
    %v223 = vld [vmem:[#allocation4 + $0x370] sm:$0xff]
    %v224 = vld [vmem:[#allocation4 + $0x378] sm:$0xff]
    %v225 = vld [vmem:[#allocation4 + $0x380] sm:$0xff]
    %v226 = vld [vmem:[#allocation4 + $0x388] sm:$0xff]
    %v227 = vld [vmem:[#allocation4 + $0x390] sm:$0xff]
    %v228 = vld [vmem:[#allocation4 + $0x398] sm:$0xff]
    %v229 = vld [vmem:[#allocation4 + $0x3a0] sm:$0xff]
    %v230 = vld [vmem:[#allocation4 + $0x3a8] sm:$0xff]
    %v231 = vld [vmem:[#allocation4 + $0x3b0] sm:$0xff]
    %v232 = vld [vmem:[#allocation4 + $0x3b8] sm:$0xff]
    %v233 = vld [vmem:[#allocation4 + $0x3c0] sm:$0xff]
    %v234 = vld [vmem:[#allocation4 + $0x3c8] sm:$0xff]
    %v235 = vld [vmem:[#allocation4 + $0x3d0] sm:$0xff]
    %v236 = vld [vmem:[#allocation4 + $0x3d8] sm:$0xff]
    %v237 = vld [vmem:[#allocation4 + $0x3e0] sm:$0xff]
    %v238 = vld [vmem:[#allocation4 + $0x3e8] sm:$0xff]
    %v239 = vld [vmem:[#allocation4 + $0x3f0] sm:$0xff]
    %v240 = vld [vmem:[#allocation4 + $0x3f8] sm:$0xff]
    %v241 = vld [vmem:[#allocation4 + $0x400] sm:$0xff]
    %v242 = vld [vmem:[#allocation4 + $0x408] sm:$0xff]
    %v243 = vld [vmem:[#allocation4 + $0x410] sm:$0xff]
    %v244 = vld [vmem:[#allocation4 + $0x418] sm:$0xff]
    %v245 = vld [vmem:[#allocation4 + $0x420] sm:$0xff]
    %v246 = vld [vmem:[#allocation4 + $0x428] sm:$0xff]
    %v247 = vld [vmem:[#allocation4 + $0x430] sm:$0xff]
    %v248 = vld [vmem:[#allocation4 + $0x438] sm:$0xff]
    %v249 = vld [vmem:[#allocation4 + $0x440] sm:$0xff]
    %v250 = vld [vmem:[#allocation4 + $0x448] sm:$0xff]
    %v251 = vld [vmem:[#allocation4 + $0x450] sm:$0xff]
    %v252 = vld [vmem:[#allocation4 + $0x458] sm:$0xff]
    %v253 = vld [vmem:[#allocation4 + $0x460] sm:$0xff]
    %v254 = vld [vmem:[#allocation4 + $0x468] sm:$0xff]
    %v255 = vld [vmem:[#allocation4 + $0x470] sm:$0xff]
    %v256 = vld [vmem:[#allocation4 + $0x478] sm:$0xff]
    %v257 = vld [vmem:[#allocation4 + $0x480] sm:$0xff]
    %v258 = vld [vmem:[#allocation4 + $0x488] sm:$0xff]
    %v259 = vld [vmem:[#allocation4 + $0x490] sm:$0xff]
    %v260 = vld [vmem:[#allocation4 + $0x498] sm:$0xff]
    %v261 = vld [vmem:[#allocation4 + $0x4a0] sm:$0xff]
    %v262 = vld [vmem:[#allocation4 + $0x4a8] sm:$0xff]
    %v263 = vld [vmem:[#allocation4 + $0x4b0] sm:$0xff]
    %v264 = vld [vmem:[#allocation4 + $0x4b8] sm:$0xff]
    %v265 = vld [vmem:[#allocation4 + $0x4c0] sm:$0xff]
    %v266 = vld [vmem:[#allocation4 + $0x4c8] sm:$0xff]
    %v267 = vld [vmem:[#allocation4 + $0x4d0] sm:$0xff]
    %v268 = vld [vmem:[#allocation4 + $0x4d8] sm:$0xff]
    %v269 = vld [vmem:[#allocation4 + $0x4e0] sm:$0xff]
    %v270 = vld [vmem:[#allocation4 + $0x4e8] sm:$0xff]
    %v271 = vld [vmem:[#allocation4 + $0x4f0] sm:$0xff]
    %v272 = vld [vmem:[#allocation4 + $0x4f8] sm:$0xff]
    %v273 = vld [vmem:[#allocation4 + $0x500] sm:$0xff]
    %v274 = vld [vmem:[#allocation4 + $0x508] sm:$0xff]
    %v275 = vld [vmem:[#allocation4 + $0x510] sm:$0xff]
    %v276 = vld [vmem:[#allocation4 + $0x518] sm:$0xff]
    %v277 = vld [vmem:[#allocation4 + $0x520] sm:$0xff]
    %v278 = vld [vmem:[#allocation4 + $0x528] sm:$0xff]
    %v279 = vld [vmem:[#allocation4 + $0x530] sm:$0xff]
    %v280 = vld [vmem:[#allocation4 + $0x538] sm:$0xff]
    %v281 = vld [vmem:[#allocation4 + $0x540] sm:$0xff]
    %v282 = vld [vmem:[#allocation4 + $0x548] sm:$0xff]
    %v283 = vld [vmem:[#allocation4 + $0x550] sm:$0xff]
    %v284 = vld [vmem:[#allocation4 + $0x558] sm:$0xff]
    %v285 = vld [vmem:[#allocation4 + $0x560] sm:$0xff]
    %v286 = vld [vmem:[#allocation4 + $0x568] sm:$0xff]
    %v287 = vld [vmem:[#allocation4 + $0x570] sm:$0xff]
    %v288 = vld [vmem:[#allocation4 + $0x578] sm:$0xff]
    %v289 = vld [vmem:[#allocation4 + $0x580] sm:$0xff]
    %v290 = vld [vmem:[#allocation4 + $0x588] sm:$0xff]
    %v291 = vld [vmem:[#allocation4 + $0x590] sm:$0xff]
    %v292 = vld [vmem:[#allocation4 + $0x598] sm:$0xff]
    %v293 = vld [vmem:[#allocation4 + $0x5a0] sm:$0xff]
    %v294 = vld [vmem:[#allocation4 + $0x5a8] sm:$0xff]
    %v295 = vld [vmem:[#allocation4 + $0x5b0] sm:$0xff]
    %v296 = vld [vmem:[#allocation4 + $0x5b8] sm:$0xff]
    %v297 = vld [vmem:[#allocation4 + $0x5c0] sm:$0xff]
    %v298 = vld [vmem:[#allocation4 + $0x5c8] sm:$0xff]
    %v299 = vld [vmem:[#allocation4 + $0x5d0] sm:$0xff]
    %v300 = vld [vmem:[#allocation4 + $0x5d8] sm:$0xff]
    %v301 = vld [vmem:[#allocation4 + $0x5e0] sm:$0xff]
    %v302 = vld [vmem:[#allocation4 + $0x5e8] sm:$0xff]
    %v303 = vld [vmem:[#allocation4 + $0x5f0] sm:$0xff]
    %v304 = vld [vmem:[#allocation4 + $0x5f8] sm:$0xff]
    %v305 = vld [vmem:[#allocation4 + $0x600] sm:$0xff]
    %v306 = vld [vmem:[#allocation4 + $0x608] sm:$0xff]
    %v307 = vld [vmem:[#allocation4 + $0x610] sm:$0xff]
    %v308 = vld [vmem:[#allocation4 + $0x618] sm:$0xff]
    %v309 = vld [vmem:[#allocation4 + $0x620] sm:$0xff]
    %v310 = vld [vmem:[#allocation4 + $0x628] sm:$0xff]
    %v311 = vld [vmem:[#allocation4 + $0x630] sm:$0xff]
    %v312 = vld [vmem:[#allocation4 + $0x638] sm:$0xff]
    %v313 = vld [vmem:[#allocation4 + $0x640] sm:$0xff]
    %v314 = vld [vmem:[#allocation4 + $0x648] sm:$0xff]
    %v315 = vld [vmem:[#allocation4 + $0x650] sm:$0xff]
    %v316 = vld [vmem:[#allocation4 + $0x658] sm:$0xff]
    %v317 = vld [vmem:[#allocation4 + $0x660] sm:$0xff]
    %v318 = vld [vmem:[#allocation4 + $0x668] sm:$0xff]
    %v319 = vld [vmem:[#allocation4 + $0x670] sm:$0xff]
    %v320 = vld [vmem:[#allocation4 + $0x678] sm:$0xff]
    %v321 = vld [vmem:[#allocation4 + $0x680] sm:$0xff]
    %v322 = vld [vmem:[#allocation4 + $0x688] sm:$0xff]
    %v323 = vld [vmem:[#allocation4 + $0x690] sm:$0xff]
    %v324 = vld [vmem:[#allocation4 + $0x698] sm:$0xff]
    %v325 = vld [vmem:[#allocation4 + $0x6a0] sm:$0xff]
    %v326 = vld [vmem:[#allocation4 + $0x6a8] sm:$0xff]
    %v327 = vld [vmem:[#allocation4 + $0x6b0] sm:$0xff]
    %v328 = vld [vmem:[#allocation4 + $0x6b8] sm:$0xff]
    %v329 = vld [vmem:[#allocation4 + $0x6c0] sm:$0xff]
    %v330 = vld [vmem:[#allocation4 + $0x6c8] sm:$0xff]
    %v331 = vld [vmem:[#allocation4 + $0x6d0] sm:$0xff]
    %v332 = vld [vmem:[#allocation4 + $0x6d8] sm:$0xff]
    %v333 = vld [vmem:[#allocation4 + $0x6e0] sm:$0xff]
    %v334 = vld [vmem:[#allocation4 + $0x6e8] sm:$0xff]
    %v335 = vld [vmem:[#allocation4 + $0x6f0] sm:$0xff]
    %v336 = vld [vmem:[#allocation4 + $0x6f8] sm:$0xff]
    %v337 = vld [vmem:[#allocation4 + $0x700] sm:$0xff]
    %v338 = vld [vmem:[#allocation4 + $0x708] sm:$0xff]
    %v339 = vld [vmem:[#allocation4 + $0x710] sm:$0xff]
    %v340 = vld [vmem:[#allocation4 + $0x718] sm:$0xff]
    %v341 = vld [vmem:[#allocation4 + $0x720] sm:$0xff]
    %v342 = vld [vmem:[#allocation4 + $0x728] sm:$0xff]
    %v343 = vld [vmem:[#allocation4 + $0x730] sm:$0xff]
    %v344 = vld [vmem:[#allocation4 + $0x738] sm:$0xff]
    %v345 = vld [vmem:[#allocation4 + $0x740] sm:$0xff]
    %v346 = vld [vmem:[#allocation4 + $0x748] sm:$0xff]
    %v347 = vld [vmem:[#allocation4 + $0x750] sm:$0xff]
    %v348 = vld [vmem:[#allocation4 + $0x758] sm:$0xff]
    %v349 = vld [vmem:[#allocation4 + $0x760] sm:$0xff]
    %v350 = vld [vmem:[#allocation4 + $0x768] sm:$0xff]
    %v351 = vld [vmem:[#allocation4 + $0x770] sm:$0xff]
    %v352 = vld [vmem:[#allocation4 + $0x778] sm:$0xff]
    %v353 = vld [vmem:[#allocation4 + $0x780] sm:$0xff]
    %v354 = vld [vmem:[#allocation4 + $0x788] sm:$0xff]
    %v355 = vld [vmem:[#allocation4 + $0x790] sm:$0xff]
    %v356 = vld [vmem:[#allocation4 + $0x798] sm:$0xff]
    %v357 = vld [vmem:[#allocation4 + $0x7a0] sm:$0xff]
    %v358 = vld [vmem:[#allocation4 + $0x7a8] sm:$0xff]
    %v359 = vld [vmem:[#allocation4 + $0x7b0] sm:$0xff]
    %v360 = vld [vmem:[#allocation4 + $0x7b8] sm:$0xff]
    %v361 = vld [vmem:[#allocation4 + $0x7c0] sm:$0xff]
    %v362 = vld [vmem:[#allocation4 + $0x7c8] sm:$0xff]
    %v363 = vld [vmem:[#allocation4 + $0x7d0] sm:$0xff]
    %v364 = vld [vmem:[#allocation4 + $0x7d8] sm:$0xff]
    %v365 = vld [vmem:[#allocation4 + $0x7e0] sm:$0xff]
    %v366 = vld [vmem:[#allocation4 + $0x7e8] sm:$0xff]
    %v367 = vld [vmem:[#allocation4 + $0x7f0] sm:$0xff]
    %v368 = vld [vmem:[#allocation4 + $0x7f8] sm:$0xff]
    %v369 = vld [vmem:[#allocation6] sm:$0xff]
    %v371 = vlaneseq
    %v372 = vshrl.u32 %v371, 7
    %v373 = vsub.s32 0, %v372
    %v374 = vrot.slane %v369, %v373
    %v375 = vlaneseq
    %v376 = vshrl.u32 %v375, 7
    %v377 = vsub.s32 1, %v376
    %v378 = vrot.slane %v369, %v377
    %v379 = vlaneseq
    %v380 = vshrl.u32 %v379, 7
    %v381 = vsub.s32 2, %v380
    %v382 = vrot.slane %v369, %v381
    %v383 = vlaneseq
    %v384 = vshrl.u32 %v383, 7
    %v385 = vsub.s32 3, %v384
    %v386 = vrot.slane %v369, %v385
    %v387 = vlaneseq
    %v388 = vshrl.u32 %v387, 7
    %v389 = vsub.s32 4, %v388
    %v390 = vrot.slane %v369, %v389
    %v391 = vlaneseq
    %v392 = vshrl.u32 %v391, 7
    %v393 = vsub.s32 5, %v392
    %v394 = vrot.slane %v369, %v393
    %v395 = vlaneseq
    %v396 = vshrl.u32 %v395, 7
    %v397 = vsub.s32 6, %v396
    %v398 = vrot.slane %v369, %v397
    %v399 = vlaneseq
    %v400 = vshrl.u32 %v399, 7
    %v401 = vsub.s32 7, %v400
    %v402 = vrot.slane %v369, %v401
    %v667 = vunpack.c.l.b16 %v113
    %v668 = vunpack.c.h.b16 %v113
    %v669 = vunpack.c.l.b16 %v114
    %v670 = vunpack.c.h.b16 %v114
    %v671 = vunpack.c.l.b16 %v115
    %v672 = vunpack.c.h.b16 %v115
    %v673 = vunpack.c.l.b16 %v116
    %v674 = vunpack.c.h.b16 %v116
    %v675 = vunpack.c.l.b16 %v117
    %v676 = vunpack.c.h.b16 %v117
    %v677 = vunpack.c.l.b16 %v118
    %v678 = vunpack.c.h.b16 %v118
    %v679 = vunpack.c.l.b16 %v119
    %v680 = vunpack.c.h.b16 %v119
    %v681 = vunpack.c.l.b16 %v120
    %v682 = vunpack.c.h.b16 %v120
    %v683 = vunpack.c.l.b16 %v121
    %v684 = vunpack.c.h.b16 %v121
    %v685 = vunpack.c.l.b16 %v122
    %v686 = vunpack.c.h.b16 %v122
    %v687 = vunpack.c.l.b16 %v123
    %v688 = vunpack.c.h.b16 %v123
    %v689 = vunpack.c.l.b16 %v124
    %v690 = vunpack.c.h.b16 %v124
    %v691 = vunpack.c.l.b16 %v125
    %v692 = vunpack.c.h.b16 %v125
    %v693 = vunpack.c.l.b16 %v126
    %v694 = vunpack.c.h.b16 %v126
    %v695 = vunpack.c.l.b16 %v127
    %v696 = vunpack.c.h.b16 %v127
    %v697 = vunpack.c.l.b16 %v128
    %v698 = vunpack.c.h.b16 %v128
    %v699 = vunpack.c.l.b16 %v129
    %v700 = vunpack.c.h.b16 %v129
    %v701 = vunpack.c.l.b16 %v130
    %v702 = vunpack.c.h.b16 %v130
    %v703 = vunpack.c.l.b16 %v131
    %v704 = vunpack.c.h.b16 %v131
    %v705 = vunpack.c.l.b16 %v132
    %v706 = vunpack.c.h.b16 %v132
    %v707 = vunpack.c.l.b16 %v133
    %v708 = vunpack.c.h.b16 %v133
    %v709 = vunpack.c.l.b16 %v134
    %v710 = vunpack.c.h.b16 %v134
    %v711 = vunpack.c.l.b16 %v135
    %v712 = vunpack.c.h.b16 %v135
    %v713 = vunpack.c.l.b16 %v136
    %v714 = vunpack.c.h.b16 %v136
    %v715 = vunpack.c.l.b16 %v137
    %v716 = vunpack.c.h.b16 %v137
    %v717 = vunpack.c.l.b16 %v138
    %v718 = vunpack.c.h.b16 %v138
    %v719 = vunpack.c.l.b16 %v139
    %v720 = vunpack.c.h.b16 %v139
    %v721 = vunpack.c.l.b16 %v140
    %v722 = vunpack.c.h.b16 %v140
    %v723 = vunpack.c.l.b16 %v141
    %v724 = vunpack.c.h.b16 %v141
    %v725 = vunpack.c.l.b16 %v142
    %v726 = vunpack.c.h.b16 %v142
    %v727 = vunpack.c.l.b16 %v143
    %v728 = vunpack.c.h.b16 %v143
    %v729 = vunpack.c.l.b16 %v144
    %v730 = vunpack.c.h.b16 %v144
    %v731 = vunpack.c.l.b16 %v145
    %v732 = vunpack.c.h.b16 %v145
    %v733 = vunpack.c.l.b16 %v146
    %v734 = vunpack.c.h.b16 %v146
    %v735 = vunpack.c.l.b16 %v147
    %v736 = vunpack.c.h.b16 %v147
    %v737 = vunpack.c.l.b16 %v148
    %v738 = vunpack.c.h.b16 %v148
    %v739 = vunpack.c.l.b16 %v149
    %v740 = vunpack.c.h.b16 %v149
    %v741 = vunpack.c.l.b16 %v150
    %v742 = vunpack.c.h.b16 %v150
    %v743 = vunpack.c.l.b16 %v151
    %v744 = vunpack.c.h.b16 %v151
    %v745 = vunpack.c.l.b16 %v152
    %v746 = vunpack.c.h.b16 %v152
    %v747 = vunpack.c.l.b16 %v153
    %v748 = vunpack.c.h.b16 %v153
    %v749 = vunpack.c.l.b16 %v154
    %v750 = vunpack.c.h.b16 %v154
    %v751 = vunpack.c.l.b16 %v155
    %v752 = vunpack.c.h.b16 %v155
    %v753 = vunpack.c.l.b16 %v156
    %v754 = vunpack.c.h.b16 %v156
    %v755 = vunpack.c.l.b16 %v157
    %v756 = vunpack.c.h.b16 %v157
    %v757 = vunpack.c.l.b16 %v158
    %v758 = vunpack.c.h.b16 %v158
    %v759 = vunpack.c.l.b16 %v159
    %v760 = vunpack.c.h.b16 %v159
    %v761 = vunpack.c.l.b16 %v160
    %v762 = vunpack.c.h.b16 %v160
    %v763 = vunpack.c.l.b16 %v161
    %v764 = vunpack.c.h.b16 %v161
    %v765 = vunpack.c.l.b16 %v162
    %v766 = vunpack.c.h.b16 %v162
    %v767 = vunpack.c.l.b16 %v163
    %v768 = vunpack.c.h.b16 %v163
    %v769 = vunpack.c.l.b16 %v164
    %v770 = vunpack.c.h.b16 %v164
    %v771 = vunpack.c.l.b16 %v165
    %v772 = vunpack.c.h.b16 %v165
    %v773 = vunpack.c.l.b16 %v166
    %v774 = vunpack.c.h.b16 %v166
    %v775 = vunpack.c.l.b16 %v167
    %v776 = vunpack.c.h.b16 %v167
    %v777 = vunpack.c.l.b16 %v168
    %v778 = vunpack.c.h.b16 %v168
    %v779 = vunpack.c.l.b16 %v169
    %v780 = vunpack.c.h.b16 %v169
    %v781 = vunpack.c.l.b16 %v170
    %v782 = vunpack.c.h.b16 %v170
    %v783 = vunpack.c.l.b16 %v171
    %v784 = vunpack.c.h.b16 %v171
    %v785 = vunpack.c.l.b16 %v172
    %v786 = vunpack.c.h.b16 %v172
    %v787 = vunpack.c.l.b16 %v173
    %v788 = vunpack.c.h.b16 %v173
    %v789 = vunpack.c.l.b16 %v174
    %v790 = vunpack.c.h.b16 %v174
    %v791 = vunpack.c.l.b16 %v175
    %v792 = vunpack.c.h.b16 %v175
    %v793 = vunpack.c.l.b16 %v176
    %v794 = vunpack.c.h.b16 %v176
    %v795 = vunpack.c.l.b16 %v177
    %v796 = vunpack.c.h.b16 %v177
    %v797 = vunpack.c.l.b16 %v178
    %v798 = vunpack.c.h.b16 %v178
    %v799 = vunpack.c.l.b16 %v179
    %v800 = vunpack.c.h.b16 %v179
    %v801 = vunpack.c.l.b16 %v180
    %v802 = vunpack.c.h.b16 %v180
    %v803 = vunpack.c.l.b16 %v181
    %v804 = vunpack.c.h.b16 %v181
    %v805 = vunpack.c.l.b16 %v182
    %v806 = vunpack.c.h.b16 %v182
    %v807 = vunpack.c.l.b16 %v183
    %v808 = vunpack.c.h.b16 %v183
    %v809 = vunpack.c.l.b16 %v184
    %v810 = vunpack.c.h.b16 %v184
    %v811 = vunpack.c.l.b16 %v185
    %v812 = vunpack.c.h.b16 %v185
    %v813 = vunpack.c.l.b16 %v186
    %v814 = vunpack.c.h.b16 %v186
    %v815 = vunpack.c.l.b16 %v187
    %v816 = vunpack.c.h.b16 %v187
    %v817 = vunpack.c.l.b16 %v188
    %v818 = vunpack.c.h.b16 %v188
    %v819 = vunpack.c.l.b16 %v189
    %v820 = vunpack.c.h.b16 %v189
    %v821 = vunpack.c.l.b16 %v190
    %v822 = vunpack.c.h.b16 %v190
    %v823 = vunpack.c.l.b16 %v191
    %v824 = vunpack.c.h.b16 %v191
    %v825 = vunpack.c.l.b16 %v192
    %v826 = vunpack.c.h.b16 %v192
    %v827 = vunpack.c.l.b16 %v193
    %v828 = vunpack.c.h.b16 %v193
    %v829 = vunpack.c.l.b16 %v194
    %v830 = vunpack.c.h.b16 %v194
    %v831 = vunpack.c.l.b16 %v195
    %v832 = vunpack.c.h.b16 %v195
    %v833 = vunpack.c.l.b16 %v196
    %v834 = vunpack.c.h.b16 %v196
    %v835 = vunpack.c.l.b16 %v197
    %v836 = vunpack.c.h.b16 %v197
    %v837 = vunpack.c.l.b16 %v198
    %v838 = vunpack.c.h.b16 %v198
    %v839 = vunpack.c.l.b16 %v199
    %v840 = vunpack.c.h.b16 %v199
    %v841 = vunpack.c.l.b16 %v200
    %v842 = vunpack.c.h.b16 %v200
    %v843 = vunpack.c.l.b16 %v201
    %v844 = vunpack.c.h.b16 %v201
    %v845 = vunpack.c.l.b16 %v202
    %v846 = vunpack.c.h.b16 %v202
    %v847 = vunpack.c.l.b16 %v203
    %v848 = vunpack.c.h.b16 %v203
    %v849 = vunpack.c.l.b16 %v204
    %v850 = vunpack.c.h.b16 %v204
    %v851 = vunpack.c.l.b16 %v205
    %v852 = vunpack.c.h.b16 %v205
    %v853 = vunpack.c.l.b16 %v206
    %v854 = vunpack.c.h.b16 %v206
    %v855 = vunpack.c.l.b16 %v207
    %v856 = vunpack.c.h.b16 %v207
    %v857 = vunpack.c.l.b16 %v208
    %v858 = vunpack.c.h.b16 %v208
    %v859 = vunpack.c.l.b16 %v209
    %v860 = vunpack.c.h.b16 %v209
    %v861 = vunpack.c.l.b16 %v210
    %v862 = vunpack.c.h.b16 %v210
    %v863 = vunpack.c.l.b16 %v211
    %v864 = vunpack.c.h.b16 %v211
    %v865 = vunpack.c.l.b16 %v212
    %v866 = vunpack.c.h.b16 %v212
    %v867 = vunpack.c.l.b16 %v213
    %v868 = vunpack.c.h.b16 %v213
    %v869 = vunpack.c.l.b16 %v214
    %v870 = vunpack.c.h.b16 %v214
    %v871 = vunpack.c.l.b16 %v215
    %v872 = vunpack.c.h.b16 %v215
    %v873 = vunpack.c.l.b16 %v216
    %v874 = vunpack.c.h.b16 %v216
    %v875 = vunpack.c.l.b16 %v217
    %v876 = vunpack.c.h.b16 %v217
    %v877 = vunpack.c.l.b16 %v218
    %v878 = vunpack.c.h.b16 %v218
    %v879 = vunpack.c.l.b16 %v219
    %v880 = vunpack.c.h.b16 %v219
    %v881 = vunpack.c.l.b16 %v220
    %v882 = vunpack.c.h.b16 %v220
    %v883 = vunpack.c.l.b16 %v221
    %v884 = vunpack.c.h.b16 %v221
    %v885 = vunpack.c.l.b16 %v222
    %v886 = vunpack.c.h.b16 %v222
    %v887 = vunpack.c.l.b16 %v223
    %v888 = vunpack.c.h.b16 %v223
    %v889 = vunpack.c.l.b16 %v224
    %v890 = vunpack.c.h.b16 %v224
    %v891 = vunpack.c.l.b16 %v225
    %v892 = vunpack.c.h.b16 %v225
    %v893 = vunpack.c.l.b16 %v226
    %v894 = vunpack.c.h.b16 %v226
    %v895 = vunpack.c.l.b16 %v227
    %v896 = vunpack.c.h.b16 %v227
    %v897 = vunpack.c.l.b16 %v228
    %v898 = vunpack.c.h.b16 %v228
    %v899 = vunpack.c.l.b16 %v229
    %v900 = vunpack.c.h.b16 %v229
    %v901 = vunpack.c.l.b16 %v230
    %v902 = vunpack.c.h.b16 %v230
    %v903 = vunpack.c.l.b16 %v231
    %v904 = vunpack.c.h.b16 %v231
    %v905 = vunpack.c.l.b16 %v232
    %v906 = vunpack.c.h.b16 %v232
    %v907 = vunpack.c.l.b16 %v233
    %v908 = vunpack.c.h.b16 %v233
    %v909 = vunpack.c.l.b16 %v234
    %v910 = vunpack.c.h.b16 %v234
    %v911 = vunpack.c.l.b16 %v235
    %v912 = vunpack.c.h.b16 %v235
    %v913 = vunpack.c.l.b16 %v236
    %v914 = vunpack.c.h.b16 %v236
    %v915 = vunpack.c.l.b16 %v237
    %v916 = vunpack.c.h.b16 %v237
    %v917 = vunpack.c.l.b16 %v238
    %v918 = vunpack.c.h.b16 %v238
    %v919 = vunpack.c.l.b16 %v239
    %v920 = vunpack.c.h.b16 %v239
    %v921 = vunpack.c.l.b16 %v240
    %v922 = vunpack.c.h.b16 %v240
    %v923 = vunpack.c.l.b16 %v241
    %v924 = vunpack.c.h.b16 %v241
    %v925 = vunpack.c.l.b16 %v242
    %v926 = vunpack.c.h.b16 %v242
    %v927 = vunpack.c.l.b16 %v243
    %v928 = vunpack.c.h.b16 %v243
    %v929 = vunpack.c.l.b16 %v244
    %v930 = vunpack.c.h.b16 %v244
    %v931 = vunpack.c.l.b16 %v245
    %v932 = vunpack.c.h.b16 %v245
    %v933 = vunpack.c.l.b16 %v246
    %v934 = vunpack.c.h.b16 %v246
    %v935 = vunpack.c.l.b16 %v247
    %v936 = vunpack.c.h.b16 %v247
    %v937 = vunpack.c.l.b16 %v248
    %v938 = vunpack.c.h.b16 %v248
    %v939 = vunpack.c.l.b16 %v249
    %v940 = vunpack.c.h.b16 %v249
    %v941 = vunpack.c.l.b16 %v250
    %v942 = vunpack.c.h.b16 %v250
    %v943 = vunpack.c.l.b16 %v251
    %v944 = vunpack.c.h.b16 %v251
    %v945 = vunpack.c.l.b16 %v252
    %v946 = vunpack.c.h.b16 %v252
    %v947 = vunpack.c.l.b16 %v253
    %v948 = vunpack.c.h.b16 %v253
    %v949 = vunpack.c.l.b16 %v254
    %v950 = vunpack.c.h.b16 %v254
    %v951 = vunpack.c.l.b16 %v255
    %v952 = vunpack.c.h.b16 %v255
    %v953 = vunpack.c.l.b16 %v256
    %v954 = vunpack.c.h.b16 %v256
    %v955 = vunpack.c.l.b16 %v257
    %v956 = vunpack.c.h.b16 %v257
    %v957 = vunpack.c.l.b16 %v258
    %v958 = vunpack.c.h.b16 %v258
    %v959 = vunpack.c.l.b16 %v259
    %v960 = vunpack.c.h.b16 %v259
    %v961 = vunpack.c.l.b16 %v260
    %v962 = vunpack.c.h.b16 %v260
    %v963 = vunpack.c.l.b16 %v261
    %v964 = vunpack.c.h.b16 %v261
    %v965 = vunpack.c.l.b16 %v262
    %v966 = vunpack.c.h.b16 %v262
    %v967 = vunpack.c.l.b16 %v263
    %v968 = vunpack.c.h.b16 %v263
    %v969 = vunpack.c.l.b16 %v264
    %v970 = vunpack.c.h.b16 %v264
    %v971 = vunpack.c.l.b16 %v265
    %v972 = vunpack.c.h.b16 %v265
    %v973 = vunpack.c.l.b16 %v266
    %v974 = vunpack.c.h.b16 %v266
    %v975 = vunpack.c.l.b16 %v267
    %v976 = vunpack.c.h.b16 %v267
    %v977 = vunpack.c.l.b16 %v268
    %v978 = vunpack.c.h.b16 %v268
    %v979 = vunpack.c.l.b16 %v269
    %v980 = vunpack.c.h.b16 %v269
    %v981 = vunpack.c.l.b16 %v270
    %v982 = vunpack.c.h.b16 %v270
    %v983 = vunpack.c.l.b16 %v271
    %v984 = vunpack.c.h.b16 %v271
    %v985 = vunpack.c.l.b16 %v272
    %v986 = vunpack.c.h.b16 %v272
    %v987 = vunpack.c.l.b16 %v273
    %v988 = vunpack.c.h.b16 %v273
    %v989 = vunpack.c.l.b16 %v274
    %v990 = vunpack.c.h.b16 %v274
    %v991 = vunpack.c.l.b16 %v275
    %v992 = vunpack.c.h.b16 %v275
    %v993 = vunpack.c.l.b16 %v276
    %v994 = vunpack.c.h.b16 %v276
    %v995 = vunpack.c.l.b16 %v277
    %v996 = vunpack.c.h.b16 %v277
    %v997 = vunpack.c.l.b16 %v278
    %v998 = vunpack.c.h.b16 %v278
    %v999 = vunpack.c.l.b16 %v279
    %v1000 = vunpack.c.h.b16 %v279
    %v1001 = vunpack.c.l.b16 %v280
    %v1002 = vunpack.c.h.b16 %v280
    %v1003 = vunpack.c.l.b16 %v281
    %v1004 = vunpack.c.h.b16 %v281
    %v1005 = vunpack.c.l.b16 %v282
    %v1006 = vunpack.c.h.b16 %v282
    %v1007 = vunpack.c.l.b16 %v283
    %v1008 = vunpack.c.h.b16 %v283
    %v1009 = vunpack.c.l.b16 %v284
    %v1010 = vunpack.c.h.b16 %v284
    %v1011 = vunpack.c.l.b16 %v285
    %v1012 = vunpack.c.h.b16 %v285
    %v1013 = vunpack.c.l.b16 %v286
    %v1014 = vunpack.c.h.b16 %v286
    %v1015 = vunpack.c.l.b16 %v287
    %v1016 = vunpack.c.h.b16 %v287
    %v1017 = vunpack.c.l.b16 %v288
    %v1018 = vunpack.c.h.b16 %v288
    %v1019 = vunpack.c.l.b16 %v289
    %v1020 = vunpack.c.h.b16 %v289
    %v1021 = vunpack.c.l.b16 %v290
    %v1022 = vunpack.c.h.b16 %v290
    %v1023 = vunpack.c.l.b16 %v291
    %v1024 = vunpack.c.h.b16 %v291
    %v1025 = vunpack.c.l.b16 %v292
    %v1026 = vunpack.c.h.b16 %v292
    %v1027 = vunpack.c.l.b16 %v293
    %v1028 = vunpack.c.h.b16 %v293
    %v1029 = vunpack.c.l.b16 %v294
    %v1030 = vunpack.c.h.b16 %v294
    %v1031 = vunpack.c.l.b16 %v295
    %v1032 = vunpack.c.h.b16 %v295
    %v1033 = vunpack.c.l.b16 %v296
    %v1034 = vunpack.c.h.b16 %v296
    %v1035 = vunpack.c.l.b16 %v297
    %v1036 = vunpack.c.h.b16 %v297
    %v1037 = vunpack.c.l.b16 %v298
    %v1038 = vunpack.c.h.b16 %v298
    %v1039 = vunpack.c.l.b16 %v299
    %v1040 = vunpack.c.h.b16 %v299
    %v1041 = vunpack.c.l.b16 %v300
    %v1042 = vunpack.c.h.b16 %v300
    %v1043 = vunpack.c.l.b16 %v301
    %v1044 = vunpack.c.h.b16 %v301
    %v1045 = vunpack.c.l.b16 %v302
    %v1046 = vunpack.c.h.b16 %v302
    %v1047 = vunpack.c.l.b16 %v303
    %v1048 = vunpack.c.h.b16 %v303
    %v1049 = vunpack.c.l.b16 %v304
    %v1050 = vunpack.c.h.b16 %v304
    %v1051 = vunpack.c.l.b16 %v305
    %v1052 = vunpack.c.h.b16 %v305
    %v1053 = vunpack.c.l.b16 %v306
    %v1054 = vunpack.c.h.b16 %v306
    %v1055 = vunpack.c.l.b16 %v307
    %v1056 = vunpack.c.h.b16 %v307
    %v1057 = vunpack.c.l.b16 %v308
    %v1058 = vunpack.c.h.b16 %v308
    %v1059 = vunpack.c.l.b16 %v309
    %v1060 = vunpack.c.h.b16 %v309
    %v1061 = vunpack.c.l.b16 %v310
    %v1062 = vunpack.c.h.b16 %v310
    %v1063 = vunpack.c.l.b16 %v311
    %v1064 = vunpack.c.h.b16 %v311
    %v1065 = vunpack.c.l.b16 %v312
    %v1066 = vunpack.c.h.b16 %v312
    %v1067 = vunpack.c.l.b16 %v313
    %v1068 = vunpack.c.h.b16 %v313
    %v1069 = vunpack.c.l.b16 %v314
    %v1070 = vunpack.c.h.b16 %v314
    %v1071 = vunpack.c.l.b16 %v315
    %v1072 = vunpack.c.h.b16 %v315
    %v1073 = vunpack.c.l.b16 %v316
    %v1074 = vunpack.c.h.b16 %v316
    %v1075 = vunpack.c.l.b16 %v317
    %v1076 = vunpack.c.h.b16 %v317
    %v1077 = vunpack.c.l.b16 %v318
    %v1078 = vunpack.c.h.b16 %v318
    %v1079 = vunpack.c.l.b16 %v319
    %v1080 = vunpack.c.h.b16 %v319
    %v1081 = vunpack.c.l.b16 %v320
    %v1082 = vunpack.c.h.b16 %v320
    %v1083 = vunpack.c.l.b16 %v321
    %v1084 = vunpack.c.h.b16 %v321
    %v1085 = vunpack.c.l.b16 %v322
    %v1086 = vunpack.c.h.b16 %v322
    %v1087 = vunpack.c.l.b16 %v323
    %v1088 = vunpack.c.h.b16 %v323
    %v1089 = vunpack.c.l.b16 %v324
    %v1090 = vunpack.c.h.b16 %v324
    %v1091 = vunpack.c.l.b16 %v325
    %v1092 = vunpack.c.h.b16 %v325
    %v1093 = vunpack.c.l.b16 %v326
    %v1094 = vunpack.c.h.b16 %v326
    %v1095 = vunpack.c.l.b16 %v327
    %v1096 = vunpack.c.h.b16 %v327
    %v1097 = vunpack.c.l.b16 %v328
    %v1098 = vunpack.c.h.b16 %v328
    %v1099 = vunpack.c.l.b16 %v329
    %v1100 = vunpack.c.h.b16 %v329
    %v1101 = vunpack.c.l.b16 %v330
    %v1102 = vunpack.c.h.b16 %v330
    %v1103 = vunpack.c.l.b16 %v331
    %v1104 = vunpack.c.h.b16 %v331
    %v1105 = vunpack.c.l.b16 %v332
    %v1106 = vunpack.c.h.b16 %v332
    %v1107 = vunpack.c.l.b16 %v333
    %v1108 = vunpack.c.h.b16 %v333
    %v1109 = vunpack.c.l.b16 %v334
    %v1110 = vunpack.c.h.b16 %v334
    %v1111 = vunpack.c.l.b16 %v335
    %v1112 = vunpack.c.h.b16 %v335
    %v1113 = vunpack.c.l.b16 %v336
    %v1114 = vunpack.c.h.b16 %v336
    %v1115 = vunpack.c.l.b16 %v337
    %v1116 = vunpack.c.h.b16 %v337
    %v1117 = vunpack.c.l.b16 %v338
    %v1118 = vunpack.c.h.b16 %v338
    %v1119 = vunpack.c.l.b16 %v339
    %v1120 = vunpack.c.h.b16 %v339
    %v1121 = vunpack.c.l.b16 %v340
    %v1122 = vunpack.c.h.b16 %v340
    %v1123 = vunpack.c.l.b16 %v341
    %v1124 = vunpack.c.h.b16 %v341
    %v1125 = vunpack.c.l.b16 %v342
    %v1126 = vunpack.c.h.b16 %v342
    %v1127 = vunpack.c.l.b16 %v343
    %v1128 = vunpack.c.h.b16 %v343
    %v1129 = vunpack.c.l.b16 %v344
    %v1130 = vunpack.c.h.b16 %v344
    %v1131 = vunpack.c.l.b16 %v345
    %v1132 = vunpack.c.h.b16 %v345
    %v1133 = vunpack.c.l.b16 %v346
    %v1134 = vunpack.c.h.b16 %v346
    %v1135 = vunpack.c.l.b16 %v347
    %v1136 = vunpack.c.h.b16 %v347
    %v1137 = vunpack.c.l.b16 %v348
    %v1138 = vunpack.c.h.b16 %v348
    %v1139 = vunpack.c.l.b16 %v349
    %v1140 = vunpack.c.h.b16 %v349
    %v1141 = vunpack.c.l.b16 %v350
    %v1142 = vunpack.c.h.b16 %v350
    %v1143 = vunpack.c.l.b16 %v351
    %v1144 = vunpack.c.h.b16 %v351
    %v1145 = vunpack.c.l.b16 %v352
    %v1146 = vunpack.c.h.b16 %v352
    %v1147 = vunpack.c.l.b16 %v353
    %v1148 = vunpack.c.h.b16 %v353
    %v1149 = vunpack.c.l.b16 %v354
    %v1150 = vunpack.c.h.b16 %v354
    %v1151 = vunpack.c.l.b16 %v355
    %v1152 = vunpack.c.h.b16 %v355
    %v1153 = vunpack.c.l.b16 %v356
    %v1154 = vunpack.c.h.b16 %v356
    %v1155 = vunpack.c.l.b16 %v357
    %v1156 = vunpack.c.h.b16 %v357
    %v1157 = vunpack.c.l.b16 %v358
    %v1158 = vunpack.c.h.b16 %v358
    %v1159 = vunpack.c.l.b16 %v359
    %v1160 = vunpack.c.h.b16 %v359
    %v1161 = vunpack.c.l.b16 %v360
    %v1162 = vunpack.c.h.b16 %v360
    %v1163 = vunpack.c.l.b16 %v361
    %v1164 = vunpack.c.h.b16 %v361
    %v1165 = vunpack.c.l.b16 %v362
    %v1166 = vunpack.c.h.b16 %v362
    %v1167 = vunpack.c.l.b16 %v363
    %v1168 = vunpack.c.h.b16 %v363
    %v1169 = vunpack.c.l.b16 %v364
    %v1170 = vunpack.c.h.b16 %v364
    %v1171 = vunpack.c.l.b16 %v365
    %v1172 = vunpack.c.h.b16 %v365
    %v1173 = vunpack.c.l.b16 %v366
    %v1174 = vunpack.c.h.b16 %v366
    %v1175 = vunpack.c.l.b16 %v367
    %v1176 = vunpack.c.h.b16 %v367
    %v1177 = vunpack.c.l.b16 %v368
    %v1178 = vunpack.c.h.b16 %v368
    %v1179 = vpack.c.b16 %v675, %v667
    %v1180 = vpack.c.b16 %v676, %v668
    %v1181 = vpack.c.b16 %v677, %v669
    %v1182 = vpack.c.b16 %v678, %v670
    %v1183 = vpack.c.b16 %v679, %v671
    %v1184 = vpack.c.b16 %v680, %v672
    %v1185 = vpack.c.b16 %v681, %v673
    %v1186 = vpack.c.b16 %v682, %v674
    %v1187 = vpack.c.b16 %v691, %v683
    %v1188 = vpack.c.b16 %v692, %v684
    %v1189 = vpack.c.b16 %v693, %v685
    %v1190 = vpack.c.b16 %v694, %v686
    %v1191 = vpack.c.b16 %v695, %v687
    %v1192 = vpack.c.b16 %v696, %v688
    %v1193 = vpack.c.b16 %v697, %v689
    %v1194 = vpack.c.b16 %v698, %v690
    %v1195 = vpack.c.b16 %v707, %v699
    %v1196 = vpack.c.b16 %v708, %v700
    %v1197 = vpack.c.b16 %v709, %v701
    %v1198 = vpack.c.b16 %v710, %v702
    %v1199 = vpack.c.b16 %v711, %v703
    %v1200 = vpack.c.b16 %v712, %v704
    %v1201 = vpack.c.b16 %v713, %v705
    %v1202 = vpack.c.b16 %v714, %v706
    %v1203 = vpack.c.b16 %v723, %v715
    %v1204 = vpack.c.b16 %v724, %v716
    %v1205 = vpack.c.b16 %v725, %v717
    %v1206 = vpack.c.b16 %v726, %v718
    %v1207 = vpack.c.b16 %v727, %v719
    %v1208 = vpack.c.b16 %v728, %v720
    %v1209 = vpack.c.b16 %v729, %v721
    %v1210 = vpack.c.b16 %v730, %v722
    %v1211 = vpack.c.b16 %v739, %v731
    %v1212 = vpack.c.b16 %v740, %v732
    %v1213 = vpack.c.b16 %v741, %v733
    %v1214 = vpack.c.b16 %v742, %v734
    %v1215 = vpack.c.b16 %v743, %v735
    %v1216 = vpack.c.b16 %v744, %v736
    %v1217 = vpack.c.b16 %v745, %v737
    %v1218 = vpack.c.b16 %v746, %v738
    %v1219 = vpack.c.b16 %v755, %v747
    %v1220 = vpack.c.b16 %v756, %v748
    %v1221 = vpack.c.b16 %v757, %v749
    %v1222 = vpack.c.b16 %v758, %v750
    %v1223 = vpack.c.b16 %v759, %v751
    %v1224 = vpack.c.b16 %v760, %v752
    %v1225 = vpack.c.b16 %v761, %v753
    %v1226 = vpack.c.b16 %v762, %v754
    %v1227 = vpack.c.b16 %v771, %v763
    %v1228 = vpack.c.b16 %v772, %v764
    %v1229 = vpack.c.b16 %v773, %v765
    %v1230 = vpack.c.b16 %v774, %v766
    %v1231 = vpack.c.b16 %v775, %v767
    %v1232 = vpack.c.b16 %v776, %v768
    %v1233 = vpack.c.b16 %v777, %v769
    %v1234 = vpack.c.b16 %v778, %v770
    %v1235 = vpack.c.b16 %v787, %v779
    %v1236 = vpack.c.b16 %v788, %v780
    %v1237 = vpack.c.b16 %v789, %v781
    %v1238 = vpack.c.b16 %v790, %v782
    %v1239 = vpack.c.b16 %v791, %v783
    %v1240 = vpack.c.b16 %v792, %v784
    %v1241 = vpack.c.b16 %v793, %v785
    %v1242 = vpack.c.b16 %v794, %v786
    %v1243 = vpack.c.b16 %v803, %v795
    %v1244 = vpack.c.b16 %v804, %v796
    %v1245 = vpack.c.b16 %v805, %v797
    %v1246 = vpack.c.b16 %v806, %v798
    %v1247 = vpack.c.b16 %v807, %v799
    %v1248 = vpack.c.b16 %v808, %v800
    %v1249 = vpack.c.b16 %v809, %v801
    %v1250 = vpack.c.b16 %v810, %v802
    %v1251 = vpack.c.b16 %v819, %v811
    %v1252 = vpack.c.b16 %v820, %v812
    %v1253 = vpack.c.b16 %v821, %v813
    %v1254 = vpack.c.b16 %v822, %v814
    %v1255 = vpack.c.b16 %v823, %v815
    %v1256 = vpack.c.b16 %v824, %v816
    %v1257 = vpack.c.b16 %v825, %v817
    %v1258 = vpack.c.b16 %v826, %v818
    %v1259 = vpack.c.b16 %v835, %v827
    %v1260 = vpack.c.b16 %v836, %v828
    %v1261 = vpack.c.b16 %v837, %v829
    %v1262 = vpack.c.b16 %v838, %v830
    %v1263 = vpack.c.b16 %v839, %v831
    %v1264 = vpack.c.b16 %v840, %v832
    %v1265 = vpack.c.b16 %v841, %v833
    %v1266 = vpack.c.b16 %v842, %v834
    %v1267 = vpack.c.b16 %v851, %v843
    %v1268 = vpack.c.b16 %v852, %v844
    %v1269 = vpack.c.b16 %v853, %v845
    %v1270 = vpack.c.b16 %v854, %v846
    %v1271 = vpack.c.b16 %v855, %v847
    %v1272 = vpack.c.b16 %v856, %v848
    %v1273 = vpack.c.b16 %v857, %v849
    %v1274 = vpack.c.b16 %v858, %v850
    %v1275 = vpack.c.b16 %v867, %v859
    %v1276 = vpack.c.b16 %v868, %v860
    %v1277 = vpack.c.b16 %v869, %v861
    %v1278 = vpack.c.b16 %v870, %v862
    %v1279 = vpack.c.b16 %v871, %v863
    %v1280 = vpack.c.b16 %v872, %v864
    %v1281 = vpack.c.b16 %v873, %v865
    %v1282 = vpack.c.b16 %v874, %v866
    %v1283 = vpack.c.b16 %v883, %v875
    %v1284 = vpack.c.b16 %v884, %v876
    %v1285 = vpack.c.b16 %v885, %v877
    %v1286 = vpack.c.b16 %v886, %v878
    %v1287 = vpack.c.b16 %v887, %v879
    %v1288 = vpack.c.b16 %v888, %v880
    %v1289 = vpack.c.b16 %v889, %v881
    %v1290 = vpack.c.b16 %v890, %v882
    %v1291 = vpack.c.b16 %v899, %v891
    %v1292 = vpack.c.b16 %v900, %v892
    %v1293 = vpack.c.b16 %v901, %v893
    %v1294 = vpack.c.b16 %v902, %v894
    %v1295 = vpack.c.b16 %v903, %v895
    %v1296 = vpack.c.b16 %v904, %v896
    %v1297 = vpack.c.b16 %v905, %v897
    %v1298 = vpack.c.b16 %v906, %v898
    %v1299 = vpack.c.b16 %v915, %v907
    %v1300 = vpack.c.b16 %v916, %v908
    %v1301 = vpack.c.b16 %v917, %v909
    %v1302 = vpack.c.b16 %v918, %v910
    %v1303 = vpack.c.b16 %v919, %v911
    %v1304 = vpack.c.b16 %v920, %v912
    %v1305 = vpack.c.b16 %v921, %v913
    %v1306 = vpack.c.b16 %v922, %v914
    %v1307 = vpack.c.b16 %v931, %v923
    %v1308 = vpack.c.b16 %v932, %v924
    %v1309 = vpack.c.b16 %v933, %v925
    %v1310 = vpack.c.b16 %v934, %v926
    %v1311 = vpack.c.b16 %v935, %v927
    %v1312 = vpack.c.b16 %v936, %v928
    %v1313 = vpack.c.b16 %v937, %v929
    %v1314 = vpack.c.b16 %v938, %v930
    %v1315 = vpack.c.b16 %v947, %v939
    %v1316 = vpack.c.b16 %v948, %v940
    %v1317 = vpack.c.b16 %v949, %v941
    %v1318 = vpack.c.b16 %v950, %v942
    %v1319 = vpack.c.b16 %v951, %v943
    %v1320 = vpack.c.b16 %v952, %v944
    %v1321 = vpack.c.b16 %v953, %v945
    %v1322 = vpack.c.b16 %v954, %v946
    %v1323 = vpack.c.b16 %v963, %v955
    %v1324 = vpack.c.b16 %v964, %v956
    %v1325 = vpack.c.b16 %v965, %v957
    %v1326 = vpack.c.b16 %v966, %v958
    %v1327 = vpack.c.b16 %v967, %v959
    %v1328 = vpack.c.b16 %v968, %v960
    %v1329 = vpack.c.b16 %v969, %v961
    %v1330 = vpack.c.b16 %v970, %v962
    %v1331 = vpack.c.b16 %v979, %v971
    %v1332 = vpack.c.b16 %v980, %v972
    %v1333 = vpack.c.b16 %v981, %v973
    %v1334 = vpack.c.b16 %v982, %v974
    %v1335 = vpack.c.b16 %v983, %v975
    %v1336 = vpack.c.b16 %v984, %v976
    %v1337 = vpack.c.b16 %v985, %v977
    %v1338 = vpack.c.b16 %v986, %v978
    %v1339 = vpack.c.b16 %v995, %v987
    %v1340 = vpack.c.b16 %v996, %v988
    %v1341 = vpack.c.b16 %v997, %v989
    %v1342 = vpack.c.b16 %v998, %v990
    %v1343 = vpack.c.b16 %v999, %v991
    %v1344 = vpack.c.b16 %v1000, %v992
    %v1345 = vpack.c.b16 %v1001, %v993
    %v1346 = vpack.c.b16 %v1002, %v994
    %v1347 = vpack.c.b16 %v1011, %v1003
    %v1348 = vpack.c.b16 %v1012, %v1004
    %v1349 = vpack.c.b16 %v1013, %v1005
    %v1350 = vpack.c.b16 %v1014, %v1006
    %v1351 = vpack.c.b16 %v1015, %v1007
    %v1352 = vpack.c.b16 %v1016, %v1008
    %v1353 = vpack.c.b16 %v1017, %v1009
    %v1354 = vpack.c.b16 %v1018, %v1010
    %v1355 = vpack.c.b16 %v1027, %v1019
    %v1356 = vpack.c.b16 %v1028, %v1020
    %v1357 = vpack.c.b16 %v1029, %v1021
    %v1358 = vpack.c.b16 %v1030, %v1022
    %v1359 = vpack.c.b16 %v1031, %v1023
    %v1360 = vpack.c.b16 %v1032, %v1024
    %v1361 = vpack.c.b16 %v1033, %v1025
    %v1362 = vpack.c.b16 %v1034, %v1026
    %v1363 = vpack.c.b16 %v1043, %v1035
    %v1364 = vpack.c.b16 %v1044, %v1036
    %v1365 = vpack.c.b16 %v1045, %v1037
    %v1366 = vpack.c.b16 %v1046, %v1038
    %v1367 = vpack.c.b16 %v1047, %v1039
    %v1368 = vpack.c.b16 %v1048, %v1040
    %v1369 = vpack.c.b16 %v1049, %v1041
    %v1370 = vpack.c.b16 %v1050, %v1042
    %v1371 = vpack.c.b16 %v1059, %v1051
    %v1372 = vpack.c.b16 %v1060, %v1052
    %v1373 = vpack.c.b16 %v1061, %v1053
    %v1374 = vpack.c.b16 %v1062, %v1054
    %v1375 = vpack.c.b16 %v1063, %v1055
    %v1376 = vpack.c.b16 %v1064, %v1056
    %v1377 = vpack.c.b16 %v1065, %v1057
    %v1378 = vpack.c.b16 %v1066, %v1058
    %v1379 = vpack.c.b16 %v1075, %v1067
    %v1380 = vpack.c.b16 %v1076, %v1068
    %v1381 = vpack.c.b16 %v1077, %v1069
    %v1382 = vpack.c.b16 %v1078, %v1070
    %v1383 = vpack.c.b16 %v1079, %v1071
    %v1384 = vpack.c.b16 %v1080, %v1072
    %v1385 = vpack.c.b16 %v1081, %v1073
    %v1386 = vpack.c.b16 %v1082, %v1074
    %v1387 = vpack.c.b16 %v1091, %v1083
    %v1388 = vpack.c.b16 %v1092, %v1084
    %v1389 = vpack.c.b16 %v1093, %v1085
    %v1390 = vpack.c.b16 %v1094, %v1086
    %v1391 = vpack.c.b16 %v1095, %v1087
    %v1392 = vpack.c.b16 %v1096, %v1088
    %v1393 = vpack.c.b16 %v1097, %v1089
    %v1394 = vpack.c.b16 %v1098, %v1090
    %v1395 = vpack.c.b16 %v1107, %v1099
    %v1396 = vpack.c.b16 %v1108, %v1100
    %v1397 = vpack.c.b16 %v1109, %v1101
    %v1398 = vpack.c.b16 %v1110, %v1102
    %v1399 = vpack.c.b16 %v1111, %v1103
    %v1400 = vpack.c.b16 %v1112, %v1104
    %v1401 = vpack.c.b16 %v1113, %v1105
    %v1402 = vpack.c.b16 %v1114, %v1106
    %v1403 = vpack.c.b16 %v1123, %v1115
    %v1404 = vpack.c.b16 %v1124, %v1116
    %v1405 = vpack.c.b16 %v1125, %v1117
    %v1406 = vpack.c.b16 %v1126, %v1118
    %v1407 = vpack.c.b16 %v1127, %v1119
    %v1408 = vpack.c.b16 %v1128, %v1120
    %v1409 = vpack.c.b16 %v1129, %v1121
    %v1410 = vpack.c.b16 %v1130, %v1122
    %v1411 = vpack.c.b16 %v1139, %v1131
    %v1412 = vpack.c.b16 %v1140, %v1132
    %v1413 = vpack.c.b16 %v1141, %v1133
    %v1414 = vpack.c.b16 %v1142, %v1134
    %v1415 = vpack.c.b16 %v1143, %v1135
    %v1416 = vpack.c.b16 %v1144, %v1136
    %v1417 = vpack.c.b16 %v1145, %v1137
    %v1418 = vpack.c.b16 %v1146, %v1138
    %v1419 = vpack.c.b16 %v1155, %v1147
    %v1420 = vpack.c.b16 %v1156, %v1148
    %v1421 = vpack.c.b16 %v1157, %v1149
    %v1422 = vpack.c.b16 %v1158, %v1150
    %v1423 = vpack.c.b16 %v1159, %v1151
    %v1424 = vpack.c.b16 %v1160, %v1152
    %v1425 = vpack.c.b16 %v1161, %v1153
    %v1426 = vpack.c.b16 %v1162, %v1154
    %v1427 = vpack.c.b16 %v1171, %v1163
    %v1428 = vpack.c.b16 %v1172, %v1164
    %v1429 = vpack.c.b16 %v1173, %v1165
    %v1430 = vpack.c.b16 %v1174, %v1166
    %v1431 = vpack.c.b16 %v1175, %v1167
    %v1432 = vpack.c.b16 %v1176, %v1168
    %v1433 = vpack.c.b16 %v1177, %v1169
    %v1434 = vpack.c.b16 %v1178, %v1170
    %1691 = vmatprep.subr.bf16.mxu0 %v1236
    %1692 = vmatpush1.bf16.msra.mxu0 %v1235
    %1693 = vmatprep.subr.bf16.mxu0 %v1228
    %1694 = vmatpush1.bf16.msra.mxu0 %v1227
    %1695 = vmatprep.subr.bf16.mxu0 %v1220
    %1696 = vmatpush1.bf16.msra.mxu0 %v1219
    %1697 = vmatprep.subr.bf16.mxu0 %v1212
    %1698 = vmatpush1.bf16.msra.mxu0 %v1211
    %1699 = vmatprep.subr.bf16.mxu0 %v1204
    %1700 = vmatpush1.bf16.msra.mxu0 %v1203
    %1701 = vmatprep.subr.bf16.mxu0 %v1196
    %1702 = vmatpush1.bf16.msra.mxu0 %v1195
    %1703 = vmatprep.subr.bf16.mxu0 %v1188
    %1704 = vmatpush1.bf16.msra.mxu0 %v1187
    %1705 = vmatprep.subr.bf16.mxu0 %v1180
    %1706 = vmatpush1.bf16.msra.mxu0 %v1179
    %1707 = vmatprep.subr.bf16.mxu0 %v1300
    %1708 = vmatpush2.bf16.msra.mxu0 %v1299
    %1709 = vmatprep.subr.bf16.mxu0 %v1292
    %1710 = vmatpush2.bf16.msra.mxu0 %v1291
    %1711 = vmatprep.subr.bf16.mxu0 %v1284
    %1712 = vmatpush2.bf16.msra.mxu0 %v1283
    %1713 = vmatprep.subr.bf16.mxu0 %v1276
    %1714 = vmatpush2.bf16.msra.mxu0 %v1275
    %1715 = vmatprep.subr.bf16.mxu0 %v1268
    %1716 = vmatpush2.bf16.msra.mxu0 %v1267
    %1717 = vmatprep.subr.bf16.mxu0 %v1260
    %1718 = vmatpush2.bf16.msra.mxu0 %v1259
    %1719 = vmatprep.subr.bf16.mxu0 %v1252
    %1720 = vmatpush2.bf16.msra.mxu0 %v1251
    %1721 = vmatprep.subr.bf16.mxu0 %v1244
    %1722 = vmatpush2.bf16.msra.mxu0 %v1243
    %1723 = vmatprep.mubr.bf16.mxu0 %v110
    %1724 = vmatmul.mubr.bf16.gmra.mxu0 %v109
    %v1725 = vpop.f32.mrf.mxu0
    %v1726 = vadd.f32 %v374, %v1725
    %v1727 = vpop.f32.mrf.mxu0
    %v1728 = vadd.f32 %v378, %v1727
    %v1729 = vpop.f32.mrf.mxu0
    %v1730 = vpop.f32.mrf.mxu0
    %1731 = vdwg.mxu0
    %1732 = vmatprep.subr.bf16.mxu0 %v1364
    %1733 = vmatpush1.bf16.msra.mxu0 %v1363
    %1734 = vmatprep.subr.bf16.mxu0 %v1356
    %1735 = vmatpush1.bf16.msra.mxu0 %v1355
    %1736 = vmatprep.subr.bf16.mxu0 %v1348
    %1737 = vmatpush1.bf16.msra.mxu0 %v1347
    %1738 = vmatprep.subr.bf16.mxu0 %v1340
    %1739 = vmatpush1.bf16.msra.mxu0 %v1339
    %1740 = vmatprep.subr.bf16.mxu0 %v1332
    %1741 = vmatpush1.bf16.msra.mxu0 %v1331
    %1742 = vmatprep.subr.bf16.mxu0 %v1324
    %1743 = vmatpush1.bf16.msra.mxu0 %v1323
    %1744 = vmatprep.subr.bf16.mxu0 %v1316
    %1745 = vmatpush1.bf16.msra.mxu0 %v1315
    %1746 = vmatprep.subr.bf16.mxu0 %v1308
    %1747 = vmatpush1.bf16.msra.mxu0 %v1307
    %1748 = vmatprep.subr.bf16.mxu0 %v1428
    %1749 = vmatpush2.bf16.msra.mxu0 %v1427
    %1750 = vmatprep.subr.bf16.mxu0 %v1420
    %1751 = vmatpush2.bf16.msra.mxu0 %v1419
    %1752 = vmatprep.subr.bf16.mxu0 %v1412
    %1753 = vmatpush2.bf16.msra.mxu0 %v1411
    %1754 = vmatprep.subr.bf16.mxu0 %v1404
    %1755 = vmatpush2.bf16.msra.mxu0 %v1403
    %1756 = vmatprep.subr.bf16.mxu0 %v1396
    %1757 = vmatpush2.bf16.msra.mxu0 %v1395
    %1758 = vmatprep.subr.bf16.mxu0 %v1388
    %1759 = vmatpush2.bf16.msra.mxu0 %v1387
    %1760 = vmatprep.subr.bf16.mxu0 %v1380
    %1761 = vmatpush2.bf16.msra.mxu0 %v1379
    %1762 = vmatprep.subr.bf16.mxu0 %v1372
    %1763 = vmatpush2.bf16.msra.mxu0 %v1371
    %1764 = vmatprep.mubr.bf16.mxu0 %v112
    %1765 = vmatmul.mubr.bf16.gmra.mxu0 %v111
    %v1766 = vpop.f32.mrf.mxu0
    %v1767 = vadd.f32 %v1726, %v1766
    %v1768 = vpop.f32.mrf.mxu0
    %v1769 = vadd.f32 %v1728, %v1768
    %v1770 = vpop.f32.mrf.mxu0
    %v1771 = vpop.f32.mrf.mxu0
    %1772 = vdwg.mxu0
    %1773 = vmatprep.subr.bf16.mxu0 %v1238
    %1774 = vmatpush1.bf16.msra.mxu0 %v1237
    %1775 = vmatprep.subr.bf16.mxu0 %v1230
    %1776 = vmatpush1.bf16.msra.mxu0 %v1229
    %1777 = vmatprep.subr.bf16.mxu0 %v1222
    %1778 = vmatpush1.bf16.msra.mxu0 %v1221
    %1779 = vmatprep.subr.bf16.mxu0 %v1214
    %1780 = vmatpush1.bf16.msra.mxu0 %v1213
    %1781 = vmatprep.subr.bf16.mxu0 %v1206
    %1782 = vmatpush1.bf16.msra.mxu0 %v1205
    %1783 = vmatprep.subr.bf16.mxu0 %v1198
    %1784 = vmatpush1.bf16.msra.mxu0 %v1197
    %1785 = vmatprep.subr.bf16.mxu0 %v1190
    %1786 = vmatpush1.bf16.msra.mxu0 %v1189
    %1787 = vmatprep.subr.bf16.mxu0 %v1182
    %1788 = vmatpush1.bf16.msra.mxu0 %v1181
    %1789 = vmatprep.subr.bf16.mxu0 %v1302
    %1790 = vmatpush2.bf16.msra.mxu0 %v1301
    %1791 = vmatprep.subr.bf16.mxu0 %v1294
    %1792 = vmatpush2.bf16.msra.mxu0 %v1293
    %1793 = vmatprep.subr.bf16.mxu0 %v1286
    %1794 = vmatpush2.bf16.msra.mxu0 %v1285
    %1795 = vmatprep.subr.bf16.mxu0 %v1278
    %1796 = vmatpush2.bf16.msra.mxu0 %v1277
    %1797 = vmatprep.subr.bf16.mxu0 %v1270
    %1798 = vmatpush2.bf16.msra.mxu0 %v1269
    %1799 = vmatprep.subr.bf16.mxu0 %v1262
    %1800 = vmatpush2.bf16.msra.mxu0 %v1261
    %1801 = vmatprep.subr.bf16.mxu0 %v1254
    %1802 = vmatpush2.bf16.msra.mxu0 %v1253
    %1803 = vmatprep.subr.bf16.mxu0 %v1246
    %1804 = vmatpush2.bf16.msra.mxu0 %v1245
    %1805 = vmatprep.mubr.bf16.mxu0 %v110
    %1806 = vmatmul.mubr.bf16.gmra.mxu0 %v109
    %v1807 = vpop.f32.mrf.mxu0
    %v1808 = vadd.f32 %v382, %v1807
    %v1809 = vpop.f32.mrf.mxu0
    %v1810 = vadd.f32 %v386, %v1809
    %v1811 = vpop.f32.mrf.mxu0
    %v1812 = vpop.f32.mrf.mxu0
    %1813 = vdwg.mxu0
    %1814 = vmatprep.subr.bf16.mxu0 %v1366
    %1815 = vmatpush1.bf16.msra.mxu0 %v1365
    %1816 = vmatprep.subr.bf16.mxu0 %v1358
    %1817 = vmatpush1.bf16.msra.mxu0 %v1357
    %1818 = vmatprep.subr.bf16.mxu0 %v1350
    %1819 = vmatpush1.bf16.msra.mxu0 %v1349
    %1820 = vmatprep.subr.bf16.mxu0 %v1342
    %1821 = vmatpush1.bf16.msra.mxu0 %v1341
    %1822 = vmatprep.subr.bf16.mxu0 %v1334
    %1823 = vmatpush1.bf16.msra.mxu0 %v1333
    %1824 = vmatprep.subr.bf16.mxu0 %v1326
    %1825 = vmatpush1.bf16.msra.mxu0 %v1325
    %1826 = vmatprep.subr.bf16.mxu0 %v1318
    %1827 = vmatpush1.bf16.msra.mxu0 %v1317
    %1828 = vmatprep.subr.bf16.mxu0 %v1310
    %1829 = vmatpush1.bf16.msra.mxu0 %v1309
    %1830 = vmatprep.subr.bf16.mxu0 %v1430
    %1831 = vmatpush2.bf16.msra.mxu0 %v1429
    %1832 = vmatprep.subr.bf16.mxu0 %v1422
    %1833 = vmatpush2.bf16.msra.mxu0 %v1421
    %1834 = vmatprep.subr.bf16.mxu0 %v1414
    %1835 = vmatpush2.bf16.msra.mxu0 %v1413
    %1836 = vmatprep.subr.bf16.mxu0 %v1406
    %1837 = vmatpush2.bf16.msra.mxu0 %v1405
    %1838 = vmatprep.subr.bf16.mxu0 %v1398
    %1839 = vmatpush2.bf16.msra.mxu0 %v1397
    %1840 = vmatprep.subr.bf16.mxu0 %v1390
    %1841 = vmatpush2.bf16.msra.mxu0 %v1389
    %1842 = vmatprep.subr.bf16.mxu0 %v1382
    %1843 = vmatpush2.bf16.msra.mxu0 %v1381
    %1844 = vmatprep.subr.bf16.mxu0 %v1374
    %1845 = vmatpush2.bf16.msra.mxu0 %v1373
    %1846 = vmatprep.mubr.bf16.mxu0 %v112
    %1847 = vmatmul.mubr.bf16.gmra.mxu0 %v111
    %v1848 = vpop.f32.mrf.mxu0
    %v1849 = vadd.f32 %v1808, %v1848
    %v1850 = vpop.f32.mrf.mxu0
    %v1851 = vadd.f32 %v1810, %v1850
    %v1852 = vpop.f32.mrf.mxu0
    %v1853 = vpop.f32.mrf.mxu0
    %1854 = vdwg.mxu0
    %1855 = vmatprep.subr.bf16.mxu0 %v1240
    %1856 = vmatpush1.bf16.msra.mxu0 %v1239
    %1857 = vmatprep.subr.bf16.mxu0 %v1232
    %1858 = vmatpush1.bf16.msra.mxu0 %v1231
    %1859 = vmatprep.subr.bf16.mxu0 %v1224
    %1860 = vmatpush1.bf16.msra.mxu0 %v1223
    %1861 = vmatprep.subr.bf16.mxu0 %v1216
    %1862 = vmatpush1.bf16.msra.mxu0 %v1215
    %1863 = vmatprep.subr.bf16.mxu0 %v1208
    %1864 = vmatpush1.bf16.msra.mxu0 %v1207
    %1865 = vmatprep.subr.bf16.mxu0 %v1200
    %1866 = vmatpush1.bf16.msra.mxu0 %v1199
    %1867 = vmatprep.subr.bf16.mxu0 %v1192
    %1868 = vmatpush1.bf16.msra.mxu0 %v1191
    %1869 = vmatprep.subr.bf16.mxu0 %v1184
    %1870 = vmatpush1.bf16.msra.mxu0 %v1183
    %1871 = vmatprep.subr.bf16.mxu0 %v1304
    %1872 = vmatpush2.bf16.msra.mxu0 %v1303
    %1873 = vmatprep.subr.bf16.mxu0 %v1296
    %1874 = vmatpush2.bf16.msra.mxu0 %v1295
    %1875 = vmatprep.subr.bf16.mxu0 %v1288
    %1876 = vmatpush2.bf16.msra.mxu0 %v1287
    %1877 = vmatprep.subr.bf16.mxu0 %v1280
    %1878 = vmatpush2.bf16.msra.mxu0 %v1279
    %1879 = vmatprep.subr.bf16.mxu0 %v1272
    %1880 = vmatpush2.bf16.msra.mxu0 %v1271
    %1881 = vmatprep.subr.bf16.mxu0 %v1264
    %1882 = vmatpush2.bf16.msra.mxu0 %v1263
    %1883 = vmatprep.subr.bf16.mxu0 %v1256
    %1884 = vmatpush2.bf16.msra.mxu0 %v1255
    %1885 = vmatprep.subr.bf16.mxu0 %v1248
    %1886 = vmatpush2.bf16.msra.mxu0 %v1247
    %1887 = vmatprep.mubr.bf16.mxu0 %v110
    %1888 = vmatmul.mubr.bf16.gmra.mxu0 %v109
    %v1889 = vpop.f32.mrf.mxu0
    %v1890 = vadd.f32 %v390, %v1889
    %v1891 = vpop.f32.mrf.mxu0
    %v1892 = vadd.f32 %v394, %v1891
    %v1893 = vpop.f32.mrf.mxu0
    %v1894 = vpop.f32.mrf.mxu0
    %1895 = vdwg.mxu0
    %1896 = vmatprep.subr.bf16.mxu0 %v1368
    %1897 = vmatpush1.bf16.msra.mxu0 %v1367
    %1898 = vmatprep.subr.bf16.mxu0 %v1360
    %1899 = vmatpush1.bf16.msra.mxu0 %v1359
    %1900 = vmatprep.subr.bf16.mxu0 %v1352
    %1901 = vmatpush1.bf16.msra.mxu0 %v1351
    %1902 = vmatprep.subr.bf16.mxu0 %v1344
    %1903 = vmatpush1.bf16.msra.mxu0 %v1343
    %1904 = vmatprep.subr.bf16.mxu0 %v1336
    %1905 = vmatpush1.bf16.msra.mxu0 %v1335
    %1906 = vmatprep.subr.bf16.mxu0 %v1328
    %1907 = vmatpush1.bf16.msra.mxu0 %v1327
    %1908 = vmatprep.subr.bf16.mxu0 %v1320
    %1909 = vmatpush1.bf16.msra.mxu0 %v1319
    %1910 = vmatprep.subr.bf16.mxu0 %v1312
    %1911 = vmatpush1.bf16.msra.mxu0 %v1311
    %1912 = vmatprep.subr.bf16.mxu0 %v1432
    %1913 = vmatpush2.bf16.msra.mxu0 %v1431
    %1914 = vmatprep.subr.bf16.mxu0 %v1424
    %1915 = vmatpush2.bf16.msra.mxu0 %v1423
    %1916 = vmatprep.subr.bf16.mxu0 %v1416
    %1917 = vmatpush2.bf16.msra.mxu0 %v1415
    %1918 = vmatprep.subr.bf16.mxu0 %v1408
    %1919 = vmatpush2.bf16.msra.mxu0 %v1407
    %1920 = vmatprep.subr.bf16.mxu0 %v1400
    %1921 = vmatpush2.bf16.msra.mxu0 %v1399
    %1922 = vmatprep.subr.bf16.mxu0 %v1392
    %1923 = vmatpush2.bf16.msra.mxu0 %v1391
    %1924 = vmatprep.subr.bf16.mxu0 %v1384
    %1925 = vmatpush2.bf16.msra.mxu0 %v1383
    %1926 = vmatprep.subr.bf16.mxu0 %v1376
    %1927 = vmatpush2.bf16.msra.mxu0 %v1375
    %1928 = vmatprep.mubr.bf16.mxu0 %v112
    %1929 = vmatmul.mubr.bf16.gmra.mxu0 %v111
    %v1930 = vpop.f32.mrf.mxu0
    %v1931 = vadd.f32 %v1890, %v1930
    %v1932 = vpop.f32.mrf.mxu0
    %v1933 = vadd.f32 %v1892, %v1932
    %v1934 = vpop.f32.mrf.mxu0
    %v1935 = vpop.f32.mrf.mxu0
    %1936 = vdwg.mxu0
    %1937 = vmatprep.subr.bf16.mxu0 %v1242
    %1938 = vmatpush1.bf16.msra.mxu0 %v1241
    %1939 = vmatprep.subr.bf16.mxu0 %v1234
    %1940 = vmatpush1.bf16.msra.mxu0 %v1233
    %1941 = vmatprep.subr.bf16.mxu0 %v1226
    %1942 = vmatpush1.bf16.msra.mxu0 %v1225
    %1943 = vmatprep.subr.bf16.mxu0 %v1218
    %1944 = vmatpush1.bf16.msra.mxu0 %v1217
    %1945 = vmatprep.subr.bf16.mxu0 %v1210
    %1946 = vmatpush1.bf16.msra.mxu0 %v1209
    %1947 = vmatprep.subr.bf16.mxu0 %v1202
    %1948 = vmatpush1.bf16.msra.mxu0 %v1201
    %1949 = vmatprep.subr.bf16.mxu0 %v1194
    %1950 = vmatpush1.bf16.msra.mxu0 %v1193
    %1951 = vmatprep.subr.bf16.mxu0 %v1186
    %1952 = vmatpush1.bf16.msra.mxu0 %v1185
    %1953 = vmatprep.subr.bf16.mxu0 %v1306
    %1954 = vmatpush2.bf16.msra.mxu0 %v1305
    %1955 = vmatprep.subr.bf16.mxu0 %v1298
    %1956 = vmatpush2.bf16.msra.mxu0 %v1297
    %1957 = vmatprep.subr.bf16.mxu0 %v1290
    %1958 = vmatpush2.bf16.msra.mxu0 %v1289
    %1959 = vmatprep.subr.bf16.mxu0 %v1282
    %1960 = vmatpush2.bf16.msra.mxu0 %v1281
    %1961 = vmatprep.subr.bf16.mxu0 %v1274
    %1962 = vmatpush2.bf16.msra.mxu0 %v1273
    %1963 = vmatprep.subr.bf16.mxu0 %v1266
    %1964 = vmatpush2.bf16.msra.mxu0 %v1265
    %1965 = vmatprep.subr.bf16.mxu0 %v1258
    %1966 = vmatpush2.bf16.msra.mxu0 %v1257
    %1967 = vmatprep.subr.bf16.mxu0 %v1250
    %1968 = vmatpush2.bf16.msra.mxu0 %v1249
    %1969 = vmatprep.mubr.bf16.mxu0 %v110
    %1970 = vmatmul.mubr.bf16.gmra.mxu0 %v109
    %v1971 = vpop.f32.mrf.mxu0
    %v1972 = vadd.f32 %v398, %v1971
    %v1973 = vpop.f32.mrf.mxu0
    %v1974 = vadd.f32 %v402, %v1973
    %v1975 = vpop.f32.mrf.mxu0
    %v1976 = vpop.f32.mrf.mxu0
    %1977 = vdwg.mxu0
    %1978 = vmatprep.subr.bf16.mxu0 %v1370
    %1979 = vmatpush1.bf16.msra.mxu0 %v1369
    %1980 = vmatprep.subr.bf16.mxu0 %v1362
    %1981 = vmatpush1.bf16.msra.mxu0 %v1361
    %1982 = vmatprep.subr.bf16.mxu0 %v1354
    %1983 = vmatpush1.bf16.msra.mxu0 %v1353
    %1984 = vmatprep.subr.bf16.mxu0 %v1346
    %1985 = vmatpush1.bf16.msra.mxu0 %v1345
    %1986 = vmatprep.subr.bf16.mxu0 %v1338
    %1987 = vmatpush1.bf16.msra.mxu0 %v1337
    %1988 = vmatprep.subr.bf16.mxu0 %v1330
    %1989 = vmatpush1.bf16.msra.mxu0 %v1329
    %1990 = vmatprep.subr.bf16.mxu0 %v1322
    %1991 = vmatpush1.bf16.msra.mxu0 %v1321
    %1992 = vmatprep.subr.bf16.mxu0 %v1314
    %1993 = vmatpush1.bf16.msra.mxu0 %v1313
    %1994 = vmatprep.subr.bf16.mxu0 %v1434
    %1995 = vmatpush2.bf16.msra.mxu0 %v1433
    %1996 = vmatprep.subr.bf16.mxu0 %v1426
    %1997 = vmatpush2.bf16.msra.mxu0 %v1425
    %1998 = vmatprep.subr.bf16.mxu0 %v1418
    %1999 = vmatpush2.bf16.msra.mxu0 %v1417
    %2000 = vmatprep.subr.bf16.mxu0 %v1410
    %2001 = vmatpush2.bf16.msra.mxu0 %v1409
    %2002 = vmatprep.subr.bf16.mxu0 %v1402
    %2003 = vmatpush2.bf16.msra.mxu0 %v1401
    %2004 = vmatprep.subr.bf16.mxu0 %v1394
    %2005 = vmatpush2.bf16.msra.mxu0 %v1393
    %2006 = vmatprep.subr.bf16.mxu0 %v1386
    %2007 = vmatpush2.bf16.msra.mxu0 %v1385
    %2008 = vmatprep.subr.bf16.mxu0 %v1378
    %2009 = vmatpush2.bf16.msra.mxu0 %v1377
    %2010 = vmatprep.mubr.bf16.mxu0 %v112
    %2011 = vmatmul.mubr.bf16.gmra.mxu0 %v111
    %v2012 = vpop.f32.mrf.mxu0
    %v2013 = vadd.f32 %v1972, %v2012
    %v2014 = vpop.f32.mrf.mxu0
    %v2015 = vadd.f32 %v1974, %v2014
    %v2016 = vpop.f32.mrf.mxu0
    %v2017 = vpop.f32.mrf.mxu0
    %2018 = vdwg.mxu0
    %v2019 = vmax.f32 %v1767, 0.0
    %v2020 = vmax.f32 %v1769, 0.0
    %v2021 = vmax.f32 %v1849, 0.0
    %v2022 = vmax.f32 %v1851, 0.0
    %v2023 = vmax.f32 %v1931, 0.0
    %v2024 = vmax.f32 %v1933, 0.0
    %v2025 = vmax.f32 %v2013, 0.0
    %v2026 = vmax.f32 %v2015, 0.0
    %v2027 = vpack.c.bf16 %v2019, %v2019
    %v2028 = vpack.c.bf16 %v2020, %v2020
    %v2029 = vpack.c.bf16 %v2021, %v2021
    %v2030 = vpack.c.bf16 %v2022, %v2022
    %v2031 = vpack.c.bf16 %v2023, %v2023
    %v2032 = vpack.c.bf16 %v2024, %v2024
    %v2033 = vpack.c.bf16 %v2025, %v2025
    %v2034 = vpack.c.bf16 %v2026, %v2026
    %v2035 = vld [vmem:[%s5] sm:$0xff]
    %v2036 = vld [vmem:[#allocation7] sm:$0xff]
    %v2037 = vld [vmem:[#allocation7 + $0x8] sm:$0xff]
    %v2038 = vld [vmem:[#allocation7 + $0x10] sm:$0xff]
    %v2039 = vld [vmem:[#allocation7 + $0x18] sm:$0xff]
    %v2040 = vld [vmem:[#allocation7 + $0x20] sm:$0xff]
    %v2041 = vld [vmem:[#allocation7 + $0x28] sm:$0xff]
    %v2042 = vld [vmem:[#allocation7 + $0x30] sm:$0xff]
    %v2043 = vld [vmem:[#allocation7 + $0x38] sm:$0xff]
    %v2044 = vld [vmem:[#allocation7 + $0x40] sm:$0xff]
    %v2045 = vld [vmem:[#allocation7 + $0x48] sm:$0xff]
    %v2046 = vld [vmem:[#allocation7 + $0x50] sm:$0xff]
    %v2047 = vld [vmem:[#allocation7 + $0x58] sm:$0xff]
    %v2048 = vld [vmem:[#allocation7 + $0x60] sm:$0xff]
    %v2049 = vld [vmem:[#allocation7 + $0x68] sm:$0xff]
    %v2050 = vld [vmem:[#allocation7 + $0x70] sm:$0xff]
    %v2051 = vld [vmem:[#allocation7 + $0x78] sm:$0xff]
    %v2052 = vld [vmem:[#allocation7 + $0x80] sm:$0xff]
    %v2053 = vld [vmem:[#allocation7 + $0x88] sm:$0xff]
    %v2054 = vld [vmem:[#allocation7 + $0x90] sm:$0xff]
    %v2055 = vld [vmem:[#allocation7 + $0x98] sm:$0xff]
    %v2056 = vld [vmem:[#allocation7 + $0xa0] sm:$0xff]
    %v2057 = vld [vmem:[#allocation7 + $0xa8] sm:$0xff]
    %v2058 = vld [vmem:[#allocation7 + $0xb0] sm:$0xff]
    %v2059 = vld [vmem:[#allocation7 + $0xb8] sm:$0xff]
    %v2060 = vld [vmem:[#allocation7 + $0xc0] sm:$0xff]
    %v2061 = vld [vmem:[#allocation7 + $0xc8] sm:$0xff]
    %v2062 = vld [vmem:[#allocation7 + $0xd0] sm:$0xff]
    %v2063 = vld [vmem:[#allocation7 + $0xd8] sm:$0xff]
    %v2064 = vld [vmem:[#allocation7 + $0xe0] sm:$0xff]
    %v2065 = vld [vmem:[#allocation7 + $0xe8] sm:$0xff]
    %v2066 = vld [vmem:[#allocation7 + $0xf0] sm:$0xff]
    %v2067 = vld [vmem:[#allocation7 + $0xf8] sm:$0xff]
    %v2068 = vld [vmem:[#allocation7 + $0x100] sm:$0xff]
    %v2069 = vld [vmem:[#allocation7 + $0x108] sm:$0xff]
    %v2070 = vld [vmem:[#allocation7 + $0x110] sm:$0xff]
    %v2071 = vld [vmem:[#allocation7 + $0x118] sm:$0xff]
    %v2072 = vld [vmem:[#allocation7 + $0x120] sm:$0xff]
    %v2073 = vld [vmem:[#allocation7 + $0x128] sm:$0xff]
    %v2074 = vld [vmem:[#allocation7 + $0x130] sm:$0xff]
    %v2075 = vld [vmem:[#allocation7 + $0x138] sm:$0xff]
    %v2076 = vld [vmem:[#allocation7 + $0x140] sm:$0xff]
    %v2077 = vld [vmem:[#allocation7 + $0x148] sm:$0xff]
    %v2078 = vld [vmem:[#allocation7 + $0x150] sm:$0xff]
    %v2079 = vld [vmem:[#allocation7 + $0x158] sm:$0xff]
    %v2080 = vld [vmem:[#allocation7 + $0x160] sm:$0xff]
    %v2081 = vld [vmem:[#allocation7 + $0x168] sm:$0xff]
    %v2082 = vld [vmem:[#allocation7 + $0x170] sm:$0xff]
    %v2083 = vld [vmem:[#allocation7 + $0x178] sm:$0xff]
    %v2084 = vld [vmem:[#allocation7 + $0x180] sm:$0xff]
    %v2085 = vld [vmem:[#allocation7 + $0x188] sm:$0xff]
    %v2086 = vld [vmem:[#allocation7 + $0x190] sm:$0xff]
    %v2087 = vld [vmem:[#allocation7 + $0x198] sm:$0xff]
    %v2088 = vld [vmem:[#allocation7 + $0x1a0] sm:$0xff]
    %v2089 = vld [vmem:[#allocation7 + $0x1a8] sm:$0xff]
    %v2090 = vld [vmem:[#allocation7 + $0x1b0] sm:$0xff]
    %v2091 = vld [vmem:[#allocation7 + $0x1b8] sm:$0xff]
    %v2092 = vld [vmem:[#allocation7 + $0x1c0] sm:$0xff]
    %v2093 = vld [vmem:[#allocation7 + $0x1c8] sm:$0xff]
    %v2094 = vld [vmem:[#allocation7 + $0x1d0] sm:$0xff]
    %v2095 = vld [vmem:[#allocation7 + $0x1d8] sm:$0xff]
    %v2096 = vld [vmem:[#allocation7 + $0x1e0] sm:$0xff]
    %v2097 = vld [vmem:[#allocation7 + $0x1e8] sm:$0xff]
    %v2098 = vld [vmem:[#allocation7 + $0x1f0] sm:$0xff]
    %v2099 = vld [vmem:[#allocation7 + $0x1f8] sm:$0xff]
    %v2100 = vld [vmem:[#allocation7 + $0x200] sm:$0xff]
    %v2101 = vld [vmem:[#allocation7 + $0x208] sm:$0xff]
    %v2102 = vld [vmem:[#allocation7 + $0x210] sm:$0xff]
    %v2103 = vld [vmem:[#allocation7 + $0x218] sm:$0xff]
    %v2104 = vld [vmem:[#allocation7 + $0x220] sm:$0xff]
    %v2105 = vld [vmem:[#allocation7 + $0x228] sm:$0xff]
    %v2106 = vld [vmem:[#allocation7 + $0x230] sm:$0xff]
    %v2107 = vld [vmem:[#allocation7 + $0x238] sm:$0xff]
    %v2108 = vld [vmem:[#allocation7 + $0x240] sm:$0xff]
    %v2109 = vld [vmem:[#allocation7 + $0x248] sm:$0xff]
    %v2110 = vld [vmem:[#allocation7 + $0x250] sm:$0xff]
    %v2111 = vld [vmem:[#allocation7 + $0x258] sm:$0xff]
    %v2112 = vld [vmem:[#allocation7 + $0x260] sm:$0xff]
    %v2113 = vld [vmem:[#allocation7 + $0x268] sm:$0xff]
    %v2114 = vld [vmem:[#allocation7 + $0x270] sm:$0xff]
    %v2115 = vld [vmem:[#allocation7 + $0x278] sm:$0xff]
    %v2116 = vld [vmem:[#allocation7 + $0x280] sm:$0xff]
    %v2117 = vld [vmem:[#allocation7 + $0x288] sm:$0xff]
    %v2118 = vld [vmem:[#allocation7 + $0x290] sm:$0xff]
    %v2119 = vld [vmem:[#allocation7 + $0x298] sm:$0xff]
    %v2120 = vld [vmem:[#allocation7 + $0x2a0] sm:$0xff]
    %v2121 = vld [vmem:[#allocation7 + $0x2a8] sm:$0xff]
    %v2122 = vld [vmem:[#allocation7 + $0x2b0] sm:$0xff]
    %v2123 = vld [vmem:[#allocation7 + $0x2b8] sm:$0xff]
    %v2124 = vld [vmem:[#allocation7 + $0x2c0] sm:$0xff]
    %v2125 = vld [vmem:[#allocation7 + $0x2c8] sm:$0xff]
    %v2126 = vld [vmem:[#allocation7 + $0x2d0] sm:$0xff]
    %v2127 = vld [vmem:[#allocation7 + $0x2d8] sm:$0xff]
    %v2128 = vld [vmem:[#allocation7 + $0x2e0] sm:$0xff]
    %v2129 = vld [vmem:[#allocation7 + $0x2e8] sm:$0xff]
    %v2130 = vld [vmem:[#allocation7 + $0x2f0] sm:$0xff]
    %v2131 = vld [vmem:[#allocation7 + $0x2f8] sm:$0xff]
    %v2132 = vld [vmem:[#allocation7 + $0x300] sm:$0xff]
    %v2133 = vld [vmem:[#allocation7 + $0x308] sm:$0xff]
    %v2134 = vld [vmem:[#allocation7 + $0x310] sm:$0xff]
    %v2135 = vld [vmem:[#allocation7 + $0x318] sm:$0xff]
    %v2136 = vld [vmem:[#allocation7 + $0x320] sm:$0xff]
    %v2137 = vld [vmem:[#allocation7 + $0x328] sm:$0xff]
    %v2138 = vld [vmem:[#allocation7 + $0x330] sm:$0xff]
    %v2139 = vld [vmem:[#allocation7 + $0x338] sm:$0xff]
    %v2140 = vld [vmem:[#allocation7 + $0x340] sm:$0xff]
    %v2141 = vld [vmem:[#allocation7 + $0x348] sm:$0xff]
    %v2142 = vld [vmem:[#allocation7 + $0x350] sm:$0xff]
    %v2143 = vld [vmem:[#allocation7 + $0x358] sm:$0xff]
    %v2144 = vld [vmem:[#allocation7 + $0x360] sm:$0xff]
    %v2145 = vld [vmem:[#allocation7 + $0x368] sm:$0xff]
    %v2146 = vld [vmem:[#allocation7 + $0x370] sm:$0xff]
    %v2147 = vld [vmem:[#allocation7 + $0x378] sm:$0xff]
    %v2148 = vld [vmem:[#allocation7 + $0x380] sm:$0xff]
    %v2149 = vld [vmem:[#allocation7 + $0x388] sm:$0xff]
    %v2150 = vld [vmem:[#allocation7 + $0x390] sm:$0xff]
    %v2151 = vld [vmem:[#allocation7 + $0x398] sm:$0xff]
    %v2152 = vld [vmem:[#allocation7 + $0x3a0] sm:$0xff]
    %v2153 = vld [vmem:[#allocation7 + $0x3a8] sm:$0xff]
    %v2154 = vld [vmem:[#allocation7 + $0x3b0] sm:$0xff]
    %v2155 = vld [vmem:[#allocation7 + $0x3b8] sm:$0xff]
    %v2156 = vld [vmem:[#allocation7 + $0x3c0] sm:$0xff]
    %v2157 = vld [vmem:[#allocation7 + $0x3c8] sm:$0xff]
    %v2158 = vld [vmem:[#allocation7 + $0x3d0] sm:$0xff]
    %v2159 = vld [vmem:[#allocation7 + $0x3d8] sm:$0xff]
    %v2160 = vld [vmem:[#allocation7 + $0x3e0] sm:$0xff]
    %v2161 = vld [vmem:[#allocation7 + $0x3e8] sm:$0xff]
    %v2162 = vld [vmem:[#allocation7 + $0x3f0] sm:$0xff]
    %v2163 = vld [vmem:[#allocation7 + $0x3f8] sm:$0xff]
    %v2165 = vlaneseq
    %v2166 = vshrl.u32 %v2165, 7
    %v2167 = vsub.s32 0, %v2166
    %v2168 = vrot.slane %v2035, %v2167
    %v2169 = vlaneseq
    %v2170 = vshrl.u32 %v2169, 7
    %v2171 = vsub.s32 2, %v2170
    %v2172 = vrot.slane %v2035, %v2171
    %v2173 = vlaneseq
    %v2174 = vshrl.u32 %v2173, 7
    %v2175 = vsub.s32 4, %v2174
    %v2176 = vrot.slane %v2035, %v2175
    %v2177 = vlaneseq
    %v2178 = vshrl.u32 %v2177, 7
    %v2179 = vsub.s32 6, %v2178
    %v2180 = vrot.slane %v2035, %v2179
    %v2185 = vlaneseq
    %v2186 = vshrl.u32 %v2185, 7
    %v2187 = vsub.s32 0, %v2186
    %v2188 = vrot.slane %v2168, %v2187
    %v2189 = vlaneseq
    %v2190 = vshrl.u32 %v2189, 7
    %v2191 = vsub.s32 0, %v2190
    %v2192 = vrot.slane %v2172, %v2191
    %v2193 = vlaneseq
    %v2194 = vshrl.u32 %v2193, 7
    %v2195 = vsub.s32 0, %v2194
    %v2196 = vrot.slane %v2176, %v2195
    %v2197 = vlaneseq
    %v2198 = vshrl.u32 %v2197, 7
    %v2199 = vsub.s32 0, %v2198
    %v2200 = vrot.slane %v2180, %v2199
    %v2329 = vunpack.c.l.b16 %v2036
    %v2330 = vunpack.c.h.b16 %v2036
    %v2331 = vunpack.c.l.b16 %v2037
    %v2332 = vunpack.c.h.b16 %v2037
    %v2333 = vunpack.c.l.b16 %v2038
    %v2334 = vunpack.c.h.b16 %v2038
    %v2335 = vunpack.c.l.b16 %v2039
    %v2336 = vunpack.c.h.b16 %v2039
    %v2337 = vunpack.c.l.b16 %v2040
    %v2338 = vunpack.c.h.b16 %v2040
    %v2339 = vunpack.c.l.b16 %v2041
    %v2340 = vunpack.c.h.b16 %v2041
    %v2341 = vunpack.c.l.b16 %v2042
    %v2342 = vunpack.c.h.b16 %v2042
    %v2343 = vunpack.c.l.b16 %v2043
    %v2344 = vunpack.c.h.b16 %v2043
    %v2345 = vunpack.c.l.b16 %v2044
    %v2346 = vunpack.c.h.b16 %v2044
    %v2347 = vunpack.c.l.b16 %v2045
    %v2348 = vunpack.c.h.b16 %v2045
    %v2349 = vunpack.c.l.b16 %v2046
    %v2350 = vunpack.c.h.b16 %v2046
    %v2351 = vunpack.c.l.b16 %v2047
    %v2352 = vunpack.c.h.b16 %v2047
    %v2353 = vunpack.c.l.b16 %v2048
    %v2354 = vunpack.c.h.b16 %v2048
    %v2355 = vunpack.c.l.b16 %v2049
    %v2356 = vunpack.c.h.b16 %v2049
    %v2357 = vunpack.c.l.b16 %v2050
    %v2358 = vunpack.c.h.b16 %v2050
    %v2359 = vunpack.c.l.b16 %v2051
    %v2360 = vunpack.c.h.b16 %v2051
    %v2361 = vunpack.c.l.b16 %v2052
    %v2362 = vunpack.c.h.b16 %v2052
    %v2363 = vunpack.c.l.b16 %v2053
    %v2364 = vunpack.c.h.b16 %v2053
    %v2365 = vunpack.c.l.b16 %v2054
    %v2366 = vunpack.c.h.b16 %v2054
    %v2367 = vunpack.c.l.b16 %v2055
    %v2368 = vunpack.c.h.b16 %v2055
    %v2369 = vunpack.c.l.b16 %v2056
    %v2370 = vunpack.c.h.b16 %v2056
    %v2371 = vunpack.c.l.b16 %v2057
    %v2372 = vunpack.c.h.b16 %v2057
    %v2373 = vunpack.c.l.b16 %v2058
    %v2374 = vunpack.c.h.b16 %v2058
    %v2375 = vunpack.c.l.b16 %v2059
    %v2376 = vunpack.c.h.b16 %v2059
    %v2377 = vunpack.c.l.b16 %v2060
    %v2378 = vunpack.c.h.b16 %v2060
    %v2379 = vunpack.c.l.b16 %v2061
    %v2380 = vunpack.c.h.b16 %v2061
    %v2381 = vunpack.c.l.b16 %v2062
    %v2382 = vunpack.c.h.b16 %v2062
    %v2383 = vunpack.c.l.b16 %v2063
    %v2384 = vunpack.c.h.b16 %v2063
    %v2385 = vunpack.c.l.b16 %v2064
    %v2386 = vunpack.c.h.b16 %v2064
    %v2387 = vunpack.c.l.b16 %v2065
    %v2388 = vunpack.c.h.b16 %v2065
    %v2389 = vunpack.c.l.b16 %v2066
    %v2390 = vunpack.c.h.b16 %v2066
    %v2391 = vunpack.c.l.b16 %v2067
    %v2392 = vunpack.c.h.b16 %v2067
    %v2393 = vunpack.c.l.b16 %v2068
    %v2394 = vunpack.c.h.b16 %v2068
    %v2395 = vunpack.c.l.b16 %v2069
    %v2396 = vunpack.c.h.b16 %v2069
    %v2397 = vunpack.c.l.b16 %v2070
    %v2398 = vunpack.c.h.b16 %v2070
    %v2399 = vunpack.c.l.b16 %v2071
    %v2400 = vunpack.c.h.b16 %v2071
    %v2401 = vunpack.c.l.b16 %v2072
    %v2402 = vunpack.c.h.b16 %v2072
    %v2403 = vunpack.c.l.b16 %v2073
    %v2404 = vunpack.c.h.b16 %v2073
    %v2405 = vunpack.c.l.b16 %v2074
    %v2406 = vunpack.c.h.b16 %v2074
    %v2407 = vunpack.c.l.b16 %v2075
    %v2408 = vunpack.c.h.b16 %v2075
    %v2409 = vunpack.c.l.b16 %v2076
    %v2410 = vunpack.c.h.b16 %v2076
    %v2411 = vunpack.c.l.b16 %v2077
    %v2412 = vunpack.c.h.b16 %v2077
    %v2413 = vunpack.c.l.b16 %v2078
    %v2414 = vunpack.c.h.b16 %v2078
    %v2415 = vunpack.c.l.b16 %v2079
    %v2416 = vunpack.c.h.b16 %v2079
    %v2417 = vunpack.c.l.b16 %v2080
    %v2418 = vunpack.c.h.b16 %v2080
    %v2419 = vunpack.c.l.b16 %v2081
    %v2420 = vunpack.c.h.b16 %v2081
    %v2421 = vunpack.c.l.b16 %v2082
    %v2422 = vunpack.c.h.b16 %v2082
    %v2423 = vunpack.c.l.b16 %v2083
    %v2424 = vunpack.c.h.b16 %v2083
    %v2425 = vunpack.c.l.b16 %v2084
    %v2426 = vunpack.c.h.b16 %v2084
    %v2427 = vunpack.c.l.b16 %v2085
    %v2428 = vunpack.c.h.b16 %v2085
    %v2429 = vunpack.c.l.b16 %v2086
    %v2430 = vunpack.c.h.b16 %v2086
    %v2431 = vunpack.c.l.b16 %v2087
    %v2432 = vunpack.c.h.b16 %v2087
    %v2433 = vunpack.c.l.b16 %v2088
    %v2434 = vunpack.c.h.b16 %v2088
    %v2435 = vunpack.c.l.b16 %v2089
    %v2436 = vunpack.c.h.b16 %v2089
    %v2437 = vunpack.c.l.b16 %v2090
    %v2438 = vunpack.c.h.b16 %v2090
    %v2439 = vunpack.c.l.b16 %v2091
    %v2440 = vunpack.c.h.b16 %v2091
    %v2441 = vunpack.c.l.b16 %v2092
    %v2442 = vunpack.c.h.b16 %v2092
    %v2443 = vunpack.c.l.b16 %v2093
    %v2444 = vunpack.c.h.b16 %v2093
    %v2445 = vunpack.c.l.b16 %v2094
    %v2446 = vunpack.c.h.b16 %v2094
    %v2447 = vunpack.c.l.b16 %v2095
    %v2448 = vunpack.c.h.b16 %v2095
    %v2449 = vunpack.c.l.b16 %v2096
    %v2450 = vunpack.c.h.b16 %v2096
    %v2451 = vunpack.c.l.b16 %v2097
    %v2452 = vunpack.c.h.b16 %v2097
    %v2453 = vunpack.c.l.b16 %v2098
    %v2454 = vunpack.c.h.b16 %v2098
    %v2455 = vunpack.c.l.b16 %v2099
    %v2456 = vunpack.c.h.b16 %v2099
    %v2457 = vunpack.c.l.b16 %v2100
    %v2458 = vunpack.c.h.b16 %v2100
    %v2459 = vunpack.c.l.b16 %v2101
    %v2460 = vunpack.c.h.b16 %v2101
    %v2461 = vunpack.c.l.b16 %v2102
    %v2462 = vunpack.c.h.b16 %v2102
    %v2463 = vunpack.c.l.b16 %v2103
    %v2464 = vunpack.c.h.b16 %v2103
    %v2465 = vunpack.c.l.b16 %v2104
    %v2466 = vunpack.c.h.b16 %v2104
    %v2467 = vunpack.c.l.b16 %v2105
    %v2468 = vunpack.c.h.b16 %v2105
    %v2469 = vunpack.c.l.b16 %v2106
    %v2470 = vunpack.c.h.b16 %v2106
    %v2471 = vunpack.c.l.b16 %v2107
    %v2472 = vunpack.c.h.b16 %v2107
    %v2473 = vunpack.c.l.b16 %v2108
    %v2474 = vunpack.c.h.b16 %v2108
    %v2475 = vunpack.c.l.b16 %v2109
    %v2476 = vunpack.c.h.b16 %v2109
    %v2477 = vunpack.c.l.b16 %v2110
    %v2478 = vunpack.c.h.b16 %v2110
    %v2479 = vunpack.c.l.b16 %v2111
    %v2480 = vunpack.c.h.b16 %v2111
    %v2481 = vunpack.c.l.b16 %v2112
    %v2482 = vunpack.c.h.b16 %v2112
    %v2483 = vunpack.c.l.b16 %v2113
    %v2484 = vunpack.c.h.b16 %v2113
    %v2485 = vunpack.c.l.b16 %v2114
    %v2486 = vunpack.c.h.b16 %v2114
    %v2487 = vunpack.c.l.b16 %v2115
    %v2488 = vunpack.c.h.b16 %v2115
    %v2489 = vunpack.c.l.b16 %v2116
    %v2490 = vunpack.c.h.b16 %v2116
    %v2491 = vunpack.c.l.b16 %v2117
    %v2492 = vunpack.c.h.b16 %v2117
    %v2493 = vunpack.c.l.b16 %v2118
    %v2494 = vunpack.c.h.b16 %v2118
    %v2495 = vunpack.c.l.b16 %v2119
    %v2496 = vunpack.c.h.b16 %v2119
    %v2497 = vunpack.c.l.b16 %v2120
    %v2498 = vunpack.c.h.b16 %v2120
    %v2499 = vunpack.c.l.b16 %v2121
    %v2500 = vunpack.c.h.b16 %v2121
    %v2501 = vunpack.c.l.b16 %v2122
    %v2502 = vunpack.c.h.b16 %v2122
    %v2503 = vunpack.c.l.b16 %v2123
    %v2504 = vunpack.c.h.b16 %v2123
    %v2505 = vunpack.c.l.b16 %v2124
    %v2506 = vunpack.c.h.b16 %v2124
    %v2507 = vunpack.c.l.b16 %v2125
    %v2508 = vunpack.c.h.b16 %v2125
    %v2509 = vunpack.c.l.b16 %v2126
    %v2510 = vunpack.c.h.b16 %v2126
    %v2511 = vunpack.c.l.b16 %v2127
    %v2512 = vunpack.c.h.b16 %v2127
    %v2513 = vunpack.c.l.b16 %v2128
    %v2514 = vunpack.c.h.b16 %v2128
    %v2515 = vunpack.c.l.b16 %v2129
    %v2516 = vunpack.c.h.b16 %v2129
    %v2517 = vunpack.c.l.b16 %v2130
    %v2518 = vunpack.c.h.b16 %v2130
    %v2519 = vunpack.c.l.b16 %v2131
    %v2520 = vunpack.c.h.b16 %v2131
    %v2521 = vunpack.c.l.b16 %v2132
    %v2522 = vunpack.c.h.b16 %v2132
    %v2523 = vunpack.c.l.b16 %v2133
    %v2524 = vunpack.c.h.b16 %v2133
    %v2525 = vunpack.c.l.b16 %v2134
    %v2526 = vunpack.c.h.b16 %v2134
    %v2527 = vunpack.c.l.b16 %v2135
    %v2528 = vunpack.c.h.b16 %v2135
    %v2529 = vunpack.c.l.b16 %v2136
    %v2530 = vunpack.c.h.b16 %v2136
    %v2531 = vunpack.c.l.b16 %v2137
    %v2532 = vunpack.c.h.b16 %v2137
    %v2533 = vunpack.c.l.b16 %v2138
    %v2534 = vunpack.c.h.b16 %v2138
    %v2535 = vunpack.c.l.b16 %v2139
    %v2536 = vunpack.c.h.b16 %v2139
    %v2537 = vunpack.c.l.b16 %v2140
    %v2538 = vunpack.c.h.b16 %v2140
    %v2539 = vunpack.c.l.b16 %v2141
    %v2540 = vunpack.c.h.b16 %v2141
    %v2541 = vunpack.c.l.b16 %v2142
    %v2542 = vunpack.c.h.b16 %v2142
    %v2543 = vunpack.c.l.b16 %v2143
    %v2544 = vunpack.c.h.b16 %v2143
    %v2545 = vunpack.c.l.b16 %v2144
    %v2546 = vunpack.c.h.b16 %v2144
    %v2547 = vunpack.c.l.b16 %v2145
    %v2548 = vunpack.c.h.b16 %v2145
    %v2549 = vunpack.c.l.b16 %v2146
    %v2550 = vunpack.c.h.b16 %v2146
    %v2551 = vunpack.c.l.b16 %v2147
    %v2552 = vunpack.c.h.b16 %v2147
    %v2553 = vunpack.c.l.b16 %v2148
    %v2554 = vunpack.c.h.b16 %v2148
    %v2555 = vunpack.c.l.b16 %v2149
    %v2556 = vunpack.c.h.b16 %v2149
    %v2557 = vunpack.c.l.b16 %v2150
    %v2558 = vunpack.c.h.b16 %v2150
    %v2559 = vunpack.c.l.b16 %v2151
    %v2560 = vunpack.c.h.b16 %v2151
    %v2561 = vunpack.c.l.b16 %v2152
    %v2562 = vunpack.c.h.b16 %v2152
    %v2563 = vunpack.c.l.b16 %v2153
    %v2564 = vunpack.c.h.b16 %v2153
    %v2565 = vunpack.c.l.b16 %v2154
    %v2566 = vunpack.c.h.b16 %v2154
    %v2567 = vunpack.c.l.b16 %v2155
    %v2568 = vunpack.c.h.b16 %v2155
    %v2569 = vunpack.c.l.b16 %v2156
    %v2570 = vunpack.c.h.b16 %v2156
    %v2571 = vunpack.c.l.b16 %v2157
    %v2572 = vunpack.c.h.b16 %v2157
    %v2573 = vunpack.c.l.b16 %v2158
    %v2574 = vunpack.c.h.b16 %v2158
    %v2575 = vunpack.c.l.b16 %v2159
    %v2576 = vunpack.c.h.b16 %v2159
    %v2577 = vunpack.c.l.b16 %v2160
    %v2578 = vunpack.c.h.b16 %v2160
    %v2579 = vunpack.c.l.b16 %v2161
    %v2580 = vunpack.c.h.b16 %v2161
    %v2581 = vunpack.c.l.b16 %v2162
    %v2582 = vunpack.c.h.b16 %v2162
    %v2583 = vunpack.c.l.b16 %v2163
    %v2584 = vunpack.c.h.b16 %v2163
    %v2585 = vpack.c.b16 %v2333, %v2329
    %v2586 = vpack.c.b16 %v2334, %v2330
    %v2587 = vpack.c.b16 %v2335, %v2331
    %v2588 = vpack.c.b16 %v2336, %v2332
    %v2589 = vpack.c.b16 %v2341, %v2337
    %v2590 = vpack.c.b16 %v2342, %v2338
    %v2591 = vpack.c.b16 %v2343, %v2339
    %v2592 = vpack.c.b16 %v2344, %v2340
    %v2593 = vpack.c.b16 %v2349, %v2345
    %v2594 = vpack.c.b16 %v2350, %v2346
    %v2595 = vpack.c.b16 %v2351, %v2347
    %v2596 = vpack.c.b16 %v2352, %v2348
    %v2597 = vpack.c.b16 %v2357, %v2353
    %v2598 = vpack.c.b16 %v2358, %v2354
    %v2599 = vpack.c.b16 %v2359, %v2355
    %v2600 = vpack.c.b16 %v2360, %v2356
    %v2601 = vpack.c.b16 %v2365, %v2361
    %v2602 = vpack.c.b16 %v2366, %v2362
    %v2603 = vpack.c.b16 %v2367, %v2363
    %v2604 = vpack.c.b16 %v2368, %v2364
    %v2605 = vpack.c.b16 %v2373, %v2369
    %v2606 = vpack.c.b16 %v2374, %v2370
    %v2607 = vpack.c.b16 %v2375, %v2371
    %v2608 = vpack.c.b16 %v2376, %v2372
    %v2609 = vpack.c.b16 %v2381, %v2377
    %v2610 = vpack.c.b16 %v2382, %v2378
    %v2611 = vpack.c.b16 %v2383, %v2379
    %v2612 = vpack.c.b16 %v2384, %v2380
    %v2613 = vpack.c.b16 %v2389, %v2385
    %v2614 = vpack.c.b16 %v2390, %v2386
    %v2615 = vpack.c.b16 %v2391, %v2387
    %v2616 = vpack.c.b16 %v2392, %v2388
    %v2617 = vpack.c.b16 %v2397, %v2393
    %v2618 = vpack.c.b16 %v2398, %v2394
    %v2619 = vpack.c.b16 %v2399, %v2395
    %v2620 = vpack.c.b16 %v2400, %v2396
    %v2621 = vpack.c.b16 %v2405, %v2401
    %v2622 = vpack.c.b16 %v2406, %v2402
    %v2623 = vpack.c.b16 %v2407, %v2403
    %v2624 = vpack.c.b16 %v2408, %v2404
    %v2625 = vpack.c.b16 %v2413, %v2409
    %v2626 = vpack.c.b16 %v2414, %v2410
    %v2627 = vpack.c.b16 %v2415, %v2411
    %v2628 = vpack.c.b16 %v2416, %v2412
    %v2629 = vpack.c.b16 %v2421, %v2417
    %v2630 = vpack.c.b16 %v2422, %v2418
    %v2631 = vpack.c.b16 %v2423, %v2419
    %v2632 = vpack.c.b16 %v2424, %v2420
    %v2633 = vpack.c.b16 %v2429, %v2425
    %v2634 = vpack.c.b16 %v2430, %v2426
    %v2635 = vpack.c.b16 %v2431, %v2427
    %v2636 = vpack.c.b16 %v2432, %v2428
    %v2637 = vpack.c.b16 %v2437, %v2433
    %v2638 = vpack.c.b16 %v2438, %v2434
    %v2639 = vpack.c.b16 %v2439, %v2435
    %v2640 = vpack.c.b16 %v2440, %v2436
    %v2641 = vpack.c.b16 %v2445, %v2441
    %v2642 = vpack.c.b16 %v2446, %v2442
    %v2643 = vpack.c.b16 %v2447, %v2443
    %v2644 = vpack.c.b16 %v2448, %v2444
    %v2645 = vpack.c.b16 %v2453, %v2449
    %v2646 = vpack.c.b16 %v2454, %v2450
    %v2647 = vpack.c.b16 %v2455, %v2451
    %v2648 = vpack.c.b16 %v2456, %v2452
    %v2649 = vpack.c.b16 %v2461, %v2457
    %v2650 = vpack.c.b16 %v2462, %v2458
    %v2651 = vpack.c.b16 %v2463, %v2459
    %v2652 = vpack.c.b16 %v2464, %v2460
    %v2653 = vpack.c.b16 %v2469, %v2465
    %v2654 = vpack.c.b16 %v2470, %v2466
    %v2655 = vpack.c.b16 %v2471, %v2467
    %v2656 = vpack.c.b16 %v2472, %v2468
    %v2657 = vpack.c.b16 %v2477, %v2473
    %v2658 = vpack.c.b16 %v2478, %v2474
    %v2659 = vpack.c.b16 %v2479, %v2475
    %v2660 = vpack.c.b16 %v2480, %v2476
    %v2661 = vpack.c.b16 %v2485, %v2481
    %v2662 = vpack.c.b16 %v2486, %v2482
    %v2663 = vpack.c.b16 %v2487, %v2483
    %v2664 = vpack.c.b16 %v2488, %v2484
    %v2665 = vpack.c.b16 %v2493, %v2489
    %v2666 = vpack.c.b16 %v2494, %v2490
    %v2667 = vpack.c.b16 %v2495, %v2491
    %v2668 = vpack.c.b16 %v2496, %v2492
    %v2669 = vpack.c.b16 %v2501, %v2497
    %v2670 = vpack.c.b16 %v2502, %v2498
    %v2671 = vpack.c.b16 %v2503, %v2499
    %v2672 = vpack.c.b16 %v2504, %v2500
    %v2673 = vpack.c.b16 %v2509, %v2505
    %v2674 = vpack.c.b16 %v2510, %v2506
    %v2675 = vpack.c.b16 %v2511, %v2507
    %v2676 = vpack.c.b16 %v2512, %v2508
    %v2677 = vpack.c.b16 %v2517, %v2513
    %v2678 = vpack.c.b16 %v2518, %v2514
    %v2679 = vpack.c.b16 %v2519, %v2515
    %v2680 = vpack.c.b16 %v2520, %v2516
    %v2681 = vpack.c.b16 %v2525, %v2521
    %v2682 = vpack.c.b16 %v2526, %v2522
    %v2683 = vpack.c.b16 %v2527, %v2523
    %v2684 = vpack.c.b16 %v2528, %v2524
    %v2685 = vpack.c.b16 %v2533, %v2529
    %v2686 = vpack.c.b16 %v2534, %v2530
    %v2687 = vpack.c.b16 %v2535, %v2531
    %v2688 = vpack.c.b16 %v2536, %v2532
    %v2689 = vpack.c.b16 %v2541, %v2537
    %v2690 = vpack.c.b16 %v2542, %v2538
    %v2691 = vpack.c.b16 %v2543, %v2539
    %v2692 = vpack.c.b16 %v2544, %v2540
    %v2693 = vpack.c.b16 %v2549, %v2545
    %v2694 = vpack.c.b16 %v2550, %v2546
    %v2695 = vpack.c.b16 %v2551, %v2547
    %v2696 = vpack.c.b16 %v2552, %v2548
    %v2697 = vpack.c.b16 %v2557, %v2553
    %v2698 = vpack.c.b16 %v2558, %v2554
    %v2699 = vpack.c.b16 %v2559, %v2555
    %v2700 = vpack.c.b16 %v2560, %v2556
    %v2701 = vpack.c.b16 %v2565, %v2561
    %v2702 = vpack.c.b16 %v2566, %v2562
    %v2703 = vpack.c.b16 %v2567, %v2563
    %v2704 = vpack.c.b16 %v2568, %v2564
    %v2705 = vpack.c.b16 %v2573, %v2569
    %v2706 = vpack.c.b16 %v2574, %v2570
    %v2707 = vpack.c.b16 %v2575, %v2571
    %v2708 = vpack.c.b16 %v2576, %v2572
    %v2709 = vpack.c.b16 %v2581, %v2577
    %v2710 = vpack.c.b16 %v2582, %v2578
    %v2711 = vpack.c.b16 %v2583, %v2579
    %v2712 = vpack.c.b16 %v2584, %v2580
    %2841 = vmatprep.subr.bf16.mxu0 %v2614
    %2842 = vmatpush1.bf16.msra.mxu0 %v2613
    %2843 = vmatprep.subr.bf16.mxu0 %v2610
    %2844 = vmatpush1.bf16.msra.mxu0 %v2609
    %2845 = vmatprep.subr.bf16.mxu0 %v2606
    %2846 = vmatpush1.bf16.msra.mxu0 %v2605
    %2847 = vmatprep.subr.bf16.mxu0 %v2602
    %2848 = vmatpush1.bf16.msra.mxu0 %v2601
    %2849 = vmatprep.subr.bf16.mxu0 %v2598
    %2850 = vmatpush1.bf16.msra.mxu0 %v2597
    %2851 = vmatprep.subr.bf16.mxu0 %v2594
    %2852 = vmatpush1.bf16.msra.mxu0 %v2593
    %2853 = vmatprep.subr.bf16.mxu0 %v2590
    %2854 = vmatpush1.bf16.msra.mxu0 %v2589
    %2855 = vmatprep.subr.bf16.mxu0 %v2586
    %2856 = vmatpush1.bf16.msra.mxu0 %v2585
    %2857 = vmatprep.subr.bf16.mxu0 %v2646
    %2858 = vmatpush2.bf16.msra.mxu0 %v2645
    %2859 = vmatprep.subr.bf16.mxu0 %v2642
    %2860 = vmatpush2.bf16.msra.mxu0 %v2641
    %2861 = vmatprep.subr.bf16.mxu0 %v2638
    %2862 = vmatpush2.bf16.msra.mxu0 %v2637
    %2863 = vmatprep.subr.bf16.mxu0 %v2634
    %2864 = vmatpush2.bf16.msra.mxu0 %v2633
    %2865 = vmatprep.subr.bf16.mxu0 %v2630
    %2866 = vmatpush2.bf16.msra.mxu0 %v2629
    %2867 = vmatprep.subr.bf16.mxu0 %v2626
    %2868 = vmatpush2.bf16.msra.mxu0 %v2625
    %2869 = vmatprep.subr.bf16.mxu0 %v2622
    %2870 = vmatpush2.bf16.msra.mxu0 %v2621
    %2871 = vmatprep.subr.bf16.mxu0 %v2618
    %2872 = vmatpush2.bf16.msra.mxu0 %v2617
    %2873 = vmatprep.mubr.bf16.mxu0 %v2028
    %2874 = vmatmul.mubr.bf16.gmra.mxu0 %v2027
    %v2875 = vpop.f32.mrf.mxu0
    %v2876 = vadd.f32 %v2188, %v2875
    %v2877 = vpop.f32.mrf.mxu0
    %v2878 = vadd.f32 %v2192, %v2877
    %v2879 = vpop.f32.mrf.mxu0
    %v2880 = vpop.f32.mrf.mxu0
    %2881 = vdwg.mxu0
    %2882 = vmatprep.subr.bf16.mxu0 %v2678
    %2883 = vmatpush1.bf16.msra.mxu0 %v2677
    %2884 = vmatprep.subr.bf16.mxu0 %v2674
    %2885 = vmatpush1.bf16.msra.mxu0 %v2673
    %2886 = vmatprep.subr.bf16.mxu0 %v2670
    %2887 = vmatpush1.bf16.msra.mxu0 %v2669
    %2888 = vmatprep.subr.bf16.mxu0 %v2666
    %2889 = vmatpush1.bf16.msra.mxu0 %v2665
    %2890 = vmatprep.subr.bf16.mxu0 %v2662
    %2891 = vmatpush1.bf16.msra.mxu0 %v2661
    %2892 = vmatprep.subr.bf16.mxu0 %v2658
    %2893 = vmatpush1.bf16.msra.mxu0 %v2657
    %2894 = vmatprep.subr.bf16.mxu0 %v2654
    %2895 = vmatpush1.bf16.msra.mxu0 %v2653
    %2896 = vmatprep.subr.bf16.mxu0 %v2650
    %2897 = vmatpush1.bf16.msra.mxu0 %v2649
    %2898 = vmatprep.subr.bf16.mxu0 %v2710
    %2899 = vmatpush2.bf16.msra.mxu0 %v2709
    %2900 = vmatprep.subr.bf16.mxu0 %v2706
    %2901 = vmatpush2.bf16.msra.mxu0 %v2705
    %2902 = vmatprep.subr.bf16.mxu0 %v2702
    %2903 = vmatpush2.bf16.msra.mxu0 %v2701
    %2904 = vmatprep.subr.bf16.mxu0 %v2698
    %2905 = vmatpush2.bf16.msra.mxu0 %v2697
    %2906 = vmatprep.subr.bf16.mxu0 %v2694
    %2907 = vmatpush2.bf16.msra.mxu0 %v2693
    %2908 = vmatprep.subr.bf16.mxu0 %v2690
    %2909 = vmatpush2.bf16.msra.mxu0 %v2689
    %2910 = vmatprep.subr.bf16.mxu0 %v2686
    %2911 = vmatpush2.bf16.msra.mxu0 %v2685
    %2912 = vmatprep.subr.bf16.mxu0 %v2682
    %2913 = vmatpush2.bf16.msra.mxu0 %v2681
    %2914 = vmatprep.mubr.bf16.mxu0 %v2030
    %2915 = vmatmul.mubr.bf16.gmra.mxu0 %v2029
    %v2916 = vpop.f32.mrf.mxu0
    %v2917 = vadd.f32 %v2876, %v2916
    %v2918 = vpop.f32.mrf.mxu0
    %v2919 = vadd.f32 %v2878, %v2918
    %v2920 = vpop.f32.mrf.mxu0
    %v2921 = vpop.f32.mrf.mxu0
    %2922 = vdwg.mxu0
    %2923 = vmatprep.subr.bf16.mxu0 %v2616
    %2924 = vmatpush1.bf16.msra.mxu0 %v2615
    %2925 = vmatprep.subr.bf16.mxu0 %v2612
    %2926 = vmatpush1.bf16.msra.mxu0 %v2611
    %2927 = vmatprep.subr.bf16.mxu0 %v2608
    %2928 = vmatpush1.bf16.msra.mxu0 %v2607
    %2929 = vmatprep.subr.bf16.mxu0 %v2604
    %2930 = vmatpush1.bf16.msra.mxu0 %v2603
    %2931 = vmatprep.subr.bf16.mxu0 %v2600
    %2932 = vmatpush1.bf16.msra.mxu0 %v2599
    %2933 = vmatprep.subr.bf16.mxu0 %v2596
    %2934 = vmatpush1.bf16.msra.mxu0 %v2595
    %2935 = vmatprep.subr.bf16.mxu0 %v2592
    %2936 = vmatpush1.bf16.msra.mxu0 %v2591
    %2937 = vmatprep.subr.bf16.mxu0 %v2588
    %2938 = vmatpush1.bf16.msra.mxu0 %v2587
    %2939 = vmatprep.subr.bf16.mxu0 %v2648
    %2940 = vmatpush2.bf16.msra.mxu0 %v2647
    %2941 = vmatprep.subr.bf16.mxu0 %v2644
    %2942 = vmatpush2.bf16.msra.mxu0 %v2643
    %2943 = vmatprep.subr.bf16.mxu0 %v2640
    %2944 = vmatpush2.bf16.msra.mxu0 %v2639
    %2945 = vmatprep.subr.bf16.mxu0 %v2636
    %2946 = vmatpush2.bf16.msra.mxu0 %v2635
    %2947 = vmatprep.subr.bf16.mxu0 %v2632
    %2948 = vmatpush2.bf16.msra.mxu0 %v2631
    %2949 = vmatprep.subr.bf16.mxu0 %v2628
    %2950 = vmatpush2.bf16.msra.mxu0 %v2627
    %2951 = vmatprep.subr.bf16.mxu0 %v2624
    %2952 = vmatpush2.bf16.msra.mxu0 %v2623
    %2953 = vmatprep.subr.bf16.mxu0 %v2620
    %2954 = vmatpush2.bf16.msra.mxu0 %v2619
    %2955 = vmatprep.mubr.bf16.mxu0 %v2028
    %2956 = vmatmul.mubr.bf16.gmra.mxu0 %v2027
    %v2957 = vpop.f32.mrf.mxu0
    %v2958 = vadd.f32 %v2196, %v2957
    %v2959 = vpop.f32.mrf.mxu0
    %v2960 = vadd.f32 %v2200, %v2959
    %v2961 = vpop.f32.mrf.mxu0
    %v2962 = vpop.f32.mrf.mxu0
    %2963 = vdwg.mxu0
    %2964 = vmatprep.subr.bf16.mxu0 %v2680
    %2965 = vmatpush1.bf16.msra.mxu0 %v2679
    %2966 = vmatprep.subr.bf16.mxu0 %v2676
    %2967 = vmatpush1.bf16.msra.mxu0 %v2675
    %2968 = vmatprep.subr.bf16.mxu0 %v2672
    %2969 = vmatpush1.bf16.msra.mxu0 %v2671
    %2970 = vmatprep.subr.bf16.mxu0 %v2668
    %2971 = vmatpush1.bf16.msra.mxu0 %v2667
    %2972 = vmatprep.subr.bf16.mxu0 %v2664
    %2973 = vmatpush1.bf16.msra.mxu0 %v2663
    %2974 = vmatprep.subr.bf16.mxu0 %v2660
    %2975 = vmatpush1.bf16.msra.mxu0 %v2659
    %2976 = vmatprep.subr.bf16.mxu0 %v2656
    %2977 = vmatpush1.bf16.msra.mxu0 %v2655
    %2978 = vmatprep.subr.bf16.mxu0 %v2652
    %2979 = vmatpush1.bf16.msra.mxu0 %v2651
    %2980 = vmatprep.subr.bf16.mxu0 %v2712
    %2981 = vmatpush2.bf16.msra.mxu0 %v2711
    %2982 = vmatprep.subr.bf16.mxu0 %v2708
    %2983 = vmatpush2.bf16.msra.mxu0 %v2707
    %2984 = vmatprep.subr.bf16.mxu0 %v2704
    %2985 = vmatpush2.bf16.msra.mxu0 %v2703
    %2986 = vmatprep.subr.bf16.mxu0 %v2700
    %2987 = vmatpush2.bf16.msra.mxu0 %v2699
    %2988 = vmatprep.subr.bf16.mxu0 %v2696
    %2989 = vmatpush2.bf16.msra.mxu0 %v2695
    %2990 = vmatprep.subr.bf16.mxu0 %v2692
    %2991 = vmatpush2.bf16.msra.mxu0 %v2691
    %2992 = vmatprep.subr.bf16.mxu0 %v2688
    %2993 = vmatpush2.bf16.msra.mxu0 %v2687
    %2994 = vmatprep.subr.bf16.mxu0 %v2684
    %2995 = vmatpush2.bf16.msra.mxu0 %v2683
    %2996 = vmatprep.mubr.bf16.mxu0 %v2030
    %2997 = vmatmul.mubr.bf16.gmra.mxu0 %v2029
    %v2998 = vpop.f32.mrf.mxu0
    %v2999 = vadd.f32 %v2958, %v2998
    %v3000 = vpop.f32.mrf.mxu0
    %v3001 = vadd.f32 %v2960, %v3000
    %v3002 = vpop.f32.mrf.mxu0
    %v3003 = vpop.f32.mrf.mxu0
    %3004 = vdwg.mxu0
    %v3005 = vmax.f32 %v2917, 0.0
    %v3006 = vmax.f32 %v2919, 0.0
    %v3007 = vmax.f32 %v2999, 0.0
    %v3008 = vmax.f32 %v3001, 0.0
    %v3009 = vld [vmem:[#allocation9] sm:$0xff]
    %v3010 = vld [vmem:[#allocation9 + $0x8] sm:$0xff]
    %v3011 = vld [vmem:[#allocation9 + $0x10] sm:$0xff]
    %v3012 = vld [vmem:[#allocation9 + $0x18] sm:$0xff]
    %v3013 = vld [vmem:[#allocation9 + $0x20] sm:$0xff]
    %v3014 = vld [vmem:[#allocation9 + $0x28] sm:$0xff]
    %v3015 = vld [vmem:[#allocation9 + $0x30] sm:$0xff]
    %v3016 = vld [vmem:[#allocation9 + $0x38] sm:$0xff]
    %v3017 = vld [vmem:[#allocation9 + $0x40] sm:$0xff]
    %v3018 = vld [vmem:[#allocation9 + $0x48] sm:$0xff]
    %v3019 = vld [vmem:[#allocation9 + $0x50] sm:$0xff]
    %v3020 = vld [vmem:[#allocation9 + $0x58] sm:$0xff]
    %v3021 = vld [vmem:[#allocation9 + $0x60] sm:$0xff]
    %v3022 = vld [vmem:[#allocation9 + $0x68] sm:$0xff]
    %v3023 = vld [vmem:[#allocation9 + $0x70] sm:$0xff]
    %v3024 = vld [vmem:[#allocation9 + $0x78] sm:$0xff]
    %v3025 = vld [vmem:[#allocation9 + $0x80] sm:$0xff]
    %v3026 = vld [vmem:[#allocation9 + $0x88] sm:$0xff]
    %v3027 = vld [vmem:[#allocation9 + $0x90] sm:$0xff]
    %v3028 = vld [vmem:[#allocation9 + $0x98] sm:$0xff]
    %v3029 = vld [vmem:[#allocation9 + $0xa0] sm:$0xff]
    %v3030 = vld [vmem:[#allocation9 + $0xa8] sm:$0xff]
    %v3031 = vld [vmem:[#allocation9 + $0xb0] sm:$0xff]
    %v3032 = vld [vmem:[#allocation9 + $0xb8] sm:$0xff]
    %v3033 = vld [vmem:[#allocation9 + $0xc0] sm:$0xff]
    %v3034 = vld [vmem:[#allocation9 + $0xc8] sm:$0xff]
    %v3035 = vld [vmem:[#allocation9 + $0xd0] sm:$0xff]
    %v3036 = vld [vmem:[#allocation9 + $0xd8] sm:$0xff]
    %v3037 = vld [vmem:[#allocation9 + $0xe0] sm:$0xff]
    %v3038 = vld [vmem:[#allocation9 + $0xe8] sm:$0xff]
    %v3039 = vld [vmem:[#allocation9 + $0xf0] sm:$0xff]
    %v3040 = vld [vmem:[#allocation9 + $0xf8] sm:$0xff]
    %v3041 = vld [vmem:[#allocation9 + $0x100] sm:$0xff]
    %v3042 = vld [vmem:[#allocation9 + $0x108] sm:$0xff]
    %v3043 = vld [vmem:[#allocation9 + $0x110] sm:$0xff]
    %v3044 = vld [vmem:[#allocation9 + $0x118] sm:$0xff]
    %v3045 = vld [vmem:[#allocation9 + $0x120] sm:$0xff]
    %v3046 = vld [vmem:[#allocation9 + $0x128] sm:$0xff]
    %v3047 = vld [vmem:[#allocation9 + $0x130] sm:$0xff]
    %v3048 = vld [vmem:[#allocation9 + $0x138] sm:$0xff]
    %v3049 = vld [vmem:[#allocation9 + $0x140] sm:$0xff]
    %v3050 = vld [vmem:[#allocation9 + $0x148] sm:$0xff]
    %v3051 = vld [vmem:[#allocation9 + $0x150] sm:$0xff]
    %v3052 = vld [vmem:[#allocation9 + $0x158] sm:$0xff]
    %v3053 = vld [vmem:[#allocation9 + $0x160] sm:$0xff]
    %v3054 = vld [vmem:[#allocation9 + $0x168] sm:$0xff]
    %v3055 = vld [vmem:[#allocation9 + $0x170] sm:$0xff]
    %v3056 = vld [vmem:[#allocation9 + $0x178] sm:$0xff]
    %v3057 = vld [vmem:[#allocation9 + $0x180] sm:$0xff]
    %v3058 = vld [vmem:[#allocation9 + $0x188] sm:$0xff]
    %v3059 = vld [vmem:[#allocation9 + $0x190] sm:$0xff]
    %v3060 = vld [vmem:[#allocation9 + $0x198] sm:$0xff]
    %v3061 = vld [vmem:[#allocation9 + $0x1a0] sm:$0xff]
    %v3062 = vld [vmem:[#allocation9 + $0x1a8] sm:$0xff]
    %v3063 = vld [vmem:[#allocation9 + $0x1b0] sm:$0xff]
    %v3064 = vld [vmem:[#allocation9 + $0x1b8] sm:$0xff]
    %v3065 = vld [vmem:[#allocation9 + $0x1c0] sm:$0xff]
    %v3066 = vld [vmem:[#allocation9 + $0x1c8] sm:$0xff]
    %v3067 = vld [vmem:[#allocation9 + $0x1d0] sm:$0xff]
    %v3068 = vld [vmem:[#allocation9 + $0x1d8] sm:$0xff]
    %v3069 = vld [vmem:[#allocation9 + $0x1e0] sm:$0xff]
    %v3070 = vld [vmem:[#allocation9 + $0x1e8] sm:$0xff]
    %v3071 = vld [vmem:[#allocation9 + $0x1f0] sm:$0xff]
    %v3072 = vld [vmem:[#allocation9 + $0x1f8] sm:$0xff]
    %v3073 = vld [vmem:[#allocation9 + $0x200] sm:$0xff]
    %v3074 = vld [vmem:[#allocation9 + $0x208] sm:$0xff]
    %v3075 = vld [vmem:[#allocation9 + $0x210] sm:$0xff]
    %v3076 = vld [vmem:[#allocation9 + $0x218] sm:$0xff]
    %v3077 = vld [vmem:[#allocation9 + $0x220] sm:$0xff]
    %v3078 = vld [vmem:[#allocation9 + $0x228] sm:$0xff]
    %v3079 = vld [vmem:[#allocation9 + $0x230] sm:$0xff]
    %v3080 = vld [vmem:[#allocation9 + $0x238] sm:$0xff]
    %v3081 = vld [vmem:[#allocation9 + $0x240] sm:$0xff]
    %v3082 = vld [vmem:[#allocation9 + $0x248] sm:$0xff]
    %v3083 = vld [vmem:[#allocation9 + $0x250] sm:$0xff]
    %v3084 = vld [vmem:[#allocation9 + $0x258] sm:$0xff]
    %v3085 = vld [vmem:[#allocation9 + $0x260] sm:$0xff]
    %v3086 = vld [vmem:[#allocation9 + $0x268] sm:$0xff]
    %v3087 = vld [vmem:[#allocation9 + $0x270] sm:$0xff]
    %v3088 = vld [vmem:[#allocation9 + $0x278] sm:$0xff]
    %v3089 = vld [vmem:[#allocation9 + $0x280] sm:$0xff]
    %v3090 = vld [vmem:[#allocation9 + $0x288] sm:$0xff]
    %v3091 = vld [vmem:[#allocation9 + $0x290] sm:$0xff]
    %v3092 = vld [vmem:[#allocation9 + $0x298] sm:$0xff]
    %v3093 = vld [vmem:[#allocation9 + $0x2a0] sm:$0xff]
    %v3094 = vld [vmem:[#allocation9 + $0x2a8] sm:$0xff]
    %v3095 = vld [vmem:[#allocation9 + $0x2b0] sm:$0xff]
    %v3096 = vld [vmem:[#allocation9 + $0x2b8] sm:$0xff]
    %v3097 = vld [vmem:[#allocation9 + $0x2c0] sm:$0xff]
    %v3098 = vld [vmem:[#allocation9 + $0x2c8] sm:$0xff]
    %v3099 = vld [vmem:[#allocation9 + $0x2d0] sm:$0xff]
    %v3100 = vld [vmem:[#allocation9 + $0x2d8] sm:$0xff]
    %v3101 = vld [vmem:[#allocation9 + $0x2e0] sm:$0xff]
    %v3102 = vld [vmem:[#allocation9 + $0x2e8] sm:$0xff]
    %v3103 = vld [vmem:[#allocation9 + $0x2f0] sm:$0xff]
    %v3104 = vld [vmem:[#allocation9 + $0x2f8] sm:$0xff]
    %v3105 = vld [vmem:[#allocation9 + $0x300] sm:$0xff]
    %v3106 = vld [vmem:[#allocation9 + $0x308] sm:$0xff]
    %v3107 = vld [vmem:[#allocation9 + $0x310] sm:$0xff]
    %v3108 = vld [vmem:[#allocation9 + $0x318] sm:$0xff]
    %v3109 = vld [vmem:[#allocation9 + $0x320] sm:$0xff]
    %v3110 = vld [vmem:[#allocation9 + $0x328] sm:$0xff]
    %v3111 = vld [vmem:[#allocation9 + $0x330] sm:$0xff]
    %v3112 = vld [vmem:[#allocation9 + $0x338] sm:$0xff]
    %v3113 = vld [vmem:[#allocation9 + $0x340] sm:$0xff]
    %v3114 = vld [vmem:[#allocation9 + $0x348] sm:$0xff]
    %v3115 = vld [vmem:[#allocation9 + $0x350] sm:$0xff]
    %v3116 = vld [vmem:[#allocation9 + $0x358] sm:$0xff]
    %v3117 = vld [vmem:[#allocation9 + $0x360] sm:$0xff]
    %v3118 = vld [vmem:[#allocation9 + $0x368] sm:$0xff]
    %v3119 = vld [vmem:[#allocation9 + $0x370] sm:$0xff]
    %v3120 = vld [vmem:[#allocation9 + $0x378] sm:$0xff]
    %v3121 = vld [vmem:[#allocation9 + $0x380] sm:$0xff]
    %v3122 = vld [vmem:[#allocation9 + $0x388] sm:$0xff]
    %v3123 = vld [vmem:[#allocation9 + $0x390] sm:$0xff]
    %v3124 = vld [vmem:[#allocation9 + $0x398] sm:$0xff]
    %v3125 = vld [vmem:[#allocation9 + $0x3a0] sm:$0xff]
    %v3126 = vld [vmem:[#allocation9 + $0x3a8] sm:$0xff]
    %v3127 = vld [vmem:[#allocation9 + $0x3b0] sm:$0xff]
    %v3128 = vld [vmem:[#allocation9 + $0x3b8] sm:$0xff]
    %v3129 = vld [vmem:[#allocation9 + $0x3c0] sm:$0xff]
    %v3130 = vld [vmem:[#allocation9 + $0x3c8] sm:$0xff]
    %v3131 = vld [vmem:[#allocation9 + $0x3d0] sm:$0xff]
    %v3132 = vld [vmem:[#allocation9 + $0x3d8] sm:$0xff]
    %v3133 = vld [vmem:[#allocation9 + $0x3e0] sm:$0xff]
    %v3134 = vld [vmem:[#allocation9 + $0x3e8] sm:$0xff]
    %v3135 = vld [vmem:[#allocation9 + $0x3f0] sm:$0xff]
    %v3136 = vld [vmem:[#allocation9 + $0x3f8] sm:$0xff]
    %v3137 = vlaneseq
    %v3138 = vshrl.u32 %v3137, 7
    %v3139 = vsub.s32 1, %v3138
    %v3140 = vrot.slane %v2035, %v3139
    %v3141 = vlaneseq
    %v3142 = vshrl.u32 %v3141, 7
    %v3143 = vsub.s32 3, %v3142
    %v3144 = vrot.slane %v2035, %v3143
    %v3145 = vlaneseq
    %v3146 = vshrl.u32 %v3145, 7
    %v3147 = vsub.s32 5, %v3146
    %v3148 = vrot.slane %v2035, %v3147
    %v3149 = vlaneseq
    %v3150 = vshrl.u32 %v3149, 7
    %v3151 = vsub.s32 7, %v3150
    %v3152 = vrot.slane %v2035, %v3151
    %v3157 = vlaneseq
    %v3158 = vshrl.u32 %v3157, 7
    %v3159 = vsub.s32 1, %v3158
    %v3160 = vrot.slane %v3140, %v3159
    %v3161 = vlaneseq
    %v3162 = vshrl.u32 %v3161, 7
    %v3163 = vsub.s32 1, %v3162
    %v3164 = vrot.slane %v3144, %v3163
    %v3165 = vlaneseq
    %v3166 = vshrl.u32 %v3165, 7
    %v3167 = vsub.s32 1, %v3166
    %v3168 = vrot.slane %v3148, %v3167
    %v3169 = vlaneseq
    %v3170 = vshrl.u32 %v3169, 7
    %v3171 = vsub.s32 1, %v3170
    %v3172 = vrot.slane %v3152, %v3171
    %v3301 = vunpack.c.l.b16 %v3009
    %v3302 = vunpack.c.h.b16 %v3009
    %v3303 = vunpack.c.l.b16 %v3010
    %v3304 = vunpack.c.h.b16 %v3010
    %v3305 = vunpack.c.l.b16 %v3011
    %v3306 = vunpack.c.h.b16 %v3011
    %v3307 = vunpack.c.l.b16 %v3012
    %v3308 = vunpack.c.h.b16 %v3012
    %v3309 = vunpack.c.l.b16 %v3013
    %v3310 = vunpack.c.h.b16 %v3013
    %v3311 = vunpack.c.l.b16 %v3014
    %v3312 = vunpack.c.h.b16 %v3014
    %v3313 = vunpack.c.l.b16 %v3015
    %v3314 = vunpack.c.h.b16 %v3015
    %v3315 = vunpack.c.l.b16 %v3016
    %v3316 = vunpack.c.h.b16 %v3016
    %v3317 = vunpack.c.l.b16 %v3017
    %v3318 = vunpack.c.h.b16 %v3017
    %v3319 = vunpack.c.l.b16 %v3018
    %v3320 = vunpack.c.h.b16 %v3018
    %v3321 = vunpack.c.l.b16 %v3019
    %v3322 = vunpack.c.h.b16 %v3019
    %v3323 = vunpack.c.l.b16 %v3020
    %v3324 = vunpack.c.h.b16 %v3020
    %v3325 = vunpack.c.l.b16 %v3021
    %v3326 = vunpack.c.h.b16 %v3021
    %v3327 = vunpack.c.l.b16 %v3022
    %v3328 = vunpack.c.h.b16 %v3022
    %v3329 = vunpack.c.l.b16 %v3023
    %v3330 = vunpack.c.h.b16 %v3023
    %v3331 = vunpack.c.l.b16 %v3024
    %v3332 = vunpack.c.h.b16 %v3024
    %v3333 = vunpack.c.l.b16 %v3025
    %v3334 = vunpack.c.h.b16 %v3025
    %v3335 = vunpack.c.l.b16 %v3026
    %v3336 = vunpack.c.h.b16 %v3026
    %v3337 = vunpack.c.l.b16 %v3027
    %v3338 = vunpack.c.h.b16 %v3027
    %v3339 = vunpack.c.l.b16 %v3028
    %v3340 = vunpack.c.h.b16 %v3028
    %v3341 = vunpack.c.l.b16 %v3029
    %v3342 = vunpack.c.h.b16 %v3029
    %v3343 = vunpack.c.l.b16 %v3030
    %v3344 = vunpack.c.h.b16 %v3030
    %v3345 = vunpack.c.l.b16 %v3031
    %v3346 = vunpack.c.h.b16 %v3031
    %v3347 = vunpack.c.l.b16 %v3032
    %v3348 = vunpack.c.h.b16 %v3032
    %v3349 = vunpack.c.l.b16 %v3033
    %v3350 = vunpack.c.h.b16 %v3033
    %v3351 = vunpack.c.l.b16 %v3034
    %v3352 = vunpack.c.h.b16 %v3034
    %v3353 = vunpack.c.l.b16 %v3035
    %v3354 = vunpack.c.h.b16 %v3035
    %v3355 = vunpack.c.l.b16 %v3036
    %v3356 = vunpack.c.h.b16 %v3036
    %v3357 = vunpack.c.l.b16 %v3037
    %v3358 = vunpack.c.h.b16 %v3037
    %v3359 = vunpack.c.l.b16 %v3038
    %v3360 = vunpack.c.h.b16 %v3038
    %v3361 = vunpack.c.l.b16 %v3039
    %v3362 = vunpack.c.h.b16 %v3039
    %v3363 = vunpack.c.l.b16 %v3040
    %v3364 = vunpack.c.h.b16 %v3040
    %v3365 = vunpack.c.l.b16 %v3041
    %v3366 = vunpack.c.h.b16 %v3041
    %v3367 = vunpack.c.l.b16 %v3042
    %v3368 = vunpack.c.h.b16 %v3042
    %v3369 = vunpack.c.l.b16 %v3043
    %v3370 = vunpack.c.h.b16 %v3043
    %v3371 = vunpack.c.l.b16 %v3044
    %v3372 = vunpack.c.h.b16 %v3044
    %v3373 = vunpack.c.l.b16 %v3045
    %v3374 = vunpack.c.h.b16 %v3045
    %v3375 = vunpack.c.l.b16 %v3046
    %v3376 = vunpack.c.h.b16 %v3046
    %v3377 = vunpack.c.l.b16 %v3047
    %v3378 = vunpack.c.h.b16 %v3047
    %v3379 = vunpack.c.l.b16 %v3048
    %v3380 = vunpack.c.h.b16 %v3048
    %v3381 = vunpack.c.l.b16 %v3049
    %v3382 = vunpack.c.h.b16 %v3049
    %v3383 = vunpack.c.l.b16 %v3050
    %v3384 = vunpack.c.h.b16 %v3050
    %v3385 = vunpack.c.l.b16 %v3051
    %v3386 = vunpack.c.h.b16 %v3051
    %v3387 = vunpack.c.l.b16 %v3052
    %v3388 = vunpack.c.h.b16 %v3052
    %v3389 = vunpack.c.l.b16 %v3053
    %v3390 = vunpack.c.h.b16 %v3053
    %v3391 = vunpack.c.l.b16 %v3054
    %v3392 = vunpack.c.h.b16 %v3054
    %v3393 = vunpack.c.l.b16 %v3055
    %v3394 = vunpack.c.h.b16 %v3055
    %v3395 = vunpack.c.l.b16 %v3056
    %v3396 = vunpack.c.h.b16 %v3056
    %v3397 = vunpack.c.l.b16 %v3057
    %v3398 = vunpack.c.h.b16 %v3057
    %v3399 = vunpack.c.l.b16 %v3058
    %v3400 = vunpack.c.h.b16 %v3058
    %v3401 = vunpack.c.l.b16 %v3059
    %v3402 = vunpack.c.h.b16 %v3059
    %v3403 = vunpack.c.l.b16 %v3060
    %v3404 = vunpack.c.h.b16 %v3060
    %v3405 = vunpack.c.l.b16 %v3061
    %v3406 = vunpack.c.h.b16 %v3061
    %v3407 = vunpack.c.l.b16 %v3062
    %v3408 = vunpack.c.h.b16 %v3062
    %v3409 = vunpack.c.l.b16 %v3063
    %v3410 = vunpack.c.h.b16 %v3063
    %v3411 = vunpack.c.l.b16 %v3064
    %v3412 = vunpack.c.h.b16 %v3064
    %v3413 = vunpack.c.l.b16 %v3065
    %v3414 = vunpack.c.h.b16 %v3065
    %v3415 = vunpack.c.l.b16 %v3066
    %v3416 = vunpack.c.h.b16 %v3066
    %v3417 = vunpack.c.l.b16 %v3067
    %v3418 = vunpack.c.h.b16 %v3067
    %v3419 = vunpack.c.l.b16 %v3068
    %v3420 = vunpack.c.h.b16 %v3068
    %v3421 = vunpack.c.l.b16 %v3069
    %v3422 = vunpack.c.h.b16 %v3069
    %v3423 = vunpack.c.l.b16 %v3070
    %v3424 = vunpack.c.h.b16 %v3070
    %v3425 = vunpack.c.l.b16 %v3071
    %v3426 = vunpack.c.h.b16 %v3071
    %v3427 = vunpack.c.l.b16 %v3072
    %v3428 = vunpack.c.h.b16 %v3072
    %v3429 = vunpack.c.l.b16 %v3073
    %v3430 = vunpack.c.h.b16 %v3073
    %v3431 = vunpack.c.l.b16 %v3074
    %v3432 = vunpack.c.h.b16 %v3074
    %v3433 = vunpack.c.l.b16 %v3075
    %v3434 = vunpack.c.h.b16 %v3075
    %v3435 = vunpack.c.l.b16 %v3076
    %v3436 = vunpack.c.h.b16 %v3076
    %v3437 = vunpack.c.l.b16 %v3077
    %v3438 = vunpack.c.h.b16 %v3077
    %v3439 = vunpack.c.l.b16 %v3078
    %v3440 = vunpack.c.h.b16 %v3078
    %v3441 = vunpack.c.l.b16 %v3079
    %v3442 = vunpack.c.h.b16 %v3079
    %v3443 = vunpack.c.l.b16 %v3080
    %v3444 = vunpack.c.h.b16 %v3080
    %v3445 = vunpack.c.l.b16 %v3081
    %v3446 = vunpack.c.h.b16 %v3081
    %v3447 = vunpack.c.l.b16 %v3082
    %v3448 = vunpack.c.h.b16 %v3082
    %v3449 = vunpack.c.l.b16 %v3083
    %v3450 = vunpack.c.h.b16 %v3083
    %v3451 = vunpack.c.l.b16 %v3084
    %v3452 = vunpack.c.h.b16 %v3084
    %v3453 = vunpack.c.l.b16 %v3085
    %v3454 = vunpack.c.h.b16 %v3085
    %v3455 = vunpack.c.l.b16 %v3086
    %v3456 = vunpack.c.h.b16 %v3086
    %v3457 = vunpack.c.l.b16 %v3087
    %v3458 = vunpack.c.h.b16 %v3087
    %v3459 = vunpack.c.l.b16 %v3088
    %v3460 = vunpack.c.h.b16 %v3088
    %v3461 = vunpack.c.l.b16 %v3089
    %v3462 = vunpack.c.h.b16 %v3089
    %v3463 = vunpack.c.l.b16 %v3090
    %v3464 = vunpack.c.h.b16 %v3090
    %v3465 = vunpack.c.l.b16 %v3091
    %v3466 = vunpack.c.h.b16 %v3091
    %v3467 = vunpack.c.l.b16 %v3092
    %v3468 = vunpack.c.h.b16 %v3092
    %v3469 = vunpack.c.l.b16 %v3093
    %v3470 = vunpack.c.h.b16 %v3093
    %v3471 = vunpack.c.l.b16 %v3094
    %v3472 = vunpack.c.h.b16 %v3094
    %v3473 = vunpack.c.l.b16 %v3095
    %v3474 = vunpack.c.h.b16 %v3095
    %v3475 = vunpack.c.l.b16 %v3096
    %v3476 = vunpack.c.h.b16 %v3096
    %v3477 = vunpack.c.l.b16 %v3097
    %v3478 = vunpack.c.h.b16 %v3097
    %v3479 = vunpack.c.l.b16 %v3098
    %v3480 = vunpack.c.h.b16 %v3098
    %v3481 = vunpack.c.l.b16 %v3099
    %v3482 = vunpack.c.h.b16 %v3099
    %v3483 = vunpack.c.l.b16 %v3100
    %v3484 = vunpack.c.h.b16 %v3100
    %v3485 = vunpack.c.l.b16 %v3101
    %v3486 = vunpack.c.h.b16 %v3101
    %v3487 = vunpack.c.l.b16 %v3102
    %v3488 = vunpack.c.h.b16 %v3102
    %v3489 = vunpack.c.l.b16 %v3103
    %v3490 = vunpack.c.h.b16 %v3103
    %v3491 = vunpack.c.l.b16 %v3104
    %v3492 = vunpack.c.h.b16 %v3104
    %v3493 = vunpack.c.l.b16 %v3105
    %v3494 = vunpack.c.h.b16 %v3105
    %v3495 = vunpack.c.l.b16 %v3106
    %v3496 = vunpack.c.h.b16 %v3106
    %v3497 = vunpack.c.l.b16 %v3107
    %v3498 = vunpack.c.h.b16 %v3107
    %v3499 = vunpack.c.l.b16 %v3108
    %v3500 = vunpack.c.h.b16 %v3108
    %v3501 = vunpack.c.l.b16 %v3109
    %v3502 = vunpack.c.h.b16 %v3109
    %v3503 = vunpack.c.l.b16 %v3110
    %v3504 = vunpack.c.h.b16 %v3110
    %v3505 = vunpack.c.l.b16 %v3111
    %v3506 = vunpack.c.h.b16 %v3111
    %v3507 = vunpack.c.l.b16 %v3112
    %v3508 = vunpack.c.h.b16 %v3112
    %v3509 = vunpack.c.l.b16 %v3113
    %v3510 = vunpack.c.h.b16 %v3113
    %v3511 = vunpack.c.l.b16 %v3114
    %v3512 = vunpack.c.h.b16 %v3114
    %v3513 = vunpack.c.l.b16 %v3115
    %v3514 = vunpack.c.h.b16 %v3115
    %v3515 = vunpack.c.l.b16 %v3116
    %v3516 = vunpack.c.h.b16 %v3116
    %v3517 = vunpack.c.l.b16 %v3117
    %v3518 = vunpack.c.h.b16 %v3117
    %v3519 = vunpack.c.l.b16 %v3118
    %v3520 = vunpack.c.h.b16 %v3118
    %v3521 = vunpack.c.l.b16 %v3119
    %v3522 = vunpack.c.h.b16 %v3119
    %v3523 = vunpack.c.l.b16 %v3120
    %v3524 = vunpack.c.h.b16 %v3120
    %v3525 = vunpack.c.l.b16 %v3121
    %v3526 = vunpack.c.h.b16 %v3121
    %v3527 = vunpack.c.l.b16 %v3122
    %v3528 = vunpack.c.h.b16 %v3122
    %v3529 = vunpack.c.l.b16 %v3123
    %v3530 = vunpack.c.h.b16 %v3123
    %v3531 = vunpack.c.l.b16 %v3124
    %v3532 = vunpack.c.h.b16 %v3124
    %v3533 = vunpack.c.l.b16 %v3125
    %v3534 = vunpack.c.h.b16 %v3125
    %v3535 = vunpack.c.l.b16 %v3126
    %v3536 = vunpack.c.h.b16 %v3126
    %v3537 = vunpack.c.l.b16 %v3127
    %v3538 = vunpack.c.h.b16 %v3127
    %v3539 = vunpack.c.l.b16 %v3128
    %v3540 = vunpack.c.h.b16 %v3128
    %v3541 = vunpack.c.l.b16 %v3129
    %v3542 = vunpack.c.h.b16 %v3129
    %v3543 = vunpack.c.l.b16 %v3130
    %v3544 = vunpack.c.h.b16 %v3130
    %v3545 = vunpack.c.l.b16 %v3131
    %v3546 = vunpack.c.h.b16 %v3131
    %v3547 = vunpack.c.l.b16 %v3132
    %v3548 = vunpack.c.h.b16 %v3132
    %v3549 = vunpack.c.l.b16 %v3133
    %v3550 = vunpack.c.h.b16 %v3133
    %v3551 = vunpack.c.l.b16 %v3134
    %v3552 = vunpack.c.h.b16 %v3134
    %v3553 = vunpack.c.l.b16 %v3135
    %v3554 = vunpack.c.h.b16 %v3135
    %v3555 = vunpack.c.l.b16 %v3136
    %v3556 = vunpack.c.h.b16 %v3136
    %v3557 = vpack.c.b16 %v3305, %v3301
    %v3558 = vpack.c.b16 %v3306, %v3302
    %v3559 = vpack.c.b16 %v3307, %v3303
    %v3560 = vpack.c.b16 %v3308, %v3304
    %v3561 = vpack.c.b16 %v3313, %v3309
    %v3562 = vpack.c.b16 %v3314, %v3310
    %v3563 = vpack.c.b16 %v3315, %v3311
    %v3564 = vpack.c.b16 %v3316, %v3312
    %v3565 = vpack.c.b16 %v3321, %v3317
    %v3566 = vpack.c.b16 %v3322, %v3318
    %v3567 = vpack.c.b16 %v3323, %v3319
    %v3568 = vpack.c.b16 %v3324, %v3320
    %v3569 = vpack.c.b16 %v3329, %v3325
    %v3570 = vpack.c.b16 %v3330, %v3326
    %v3571 = vpack.c.b16 %v3331, %v3327
    %v3572 = vpack.c.b16 %v3332, %v3328
    %v3573 = vpack.c.b16 %v3337, %v3333
    %v3574 = vpack.c.b16 %v3338, %v3334
    %v3575 = vpack.c.b16 %v3339, %v3335
    %v3576 = vpack.c.b16 %v3340, %v3336
    %v3577 = vpack.c.b16 %v3345, %v3341
    %v3578 = vpack.c.b16 %v3346, %v3342
    %v3579 = vpack.c.b16 %v3347, %v3343
    %v3580 = vpack.c.b16 %v3348, %v3344
    %v3581 = vpack.c.b16 %v3353, %v3349
    %v3582 = vpack.c.b16 %v3354, %v3350
    %v3583 = vpack.c.b16 %v3355, %v3351
    %v3584 = vpack.c.b16 %v3356, %v3352
    %v3585 = vpack.c.b16 %v3361, %v3357
    %v3586 = vpack.c.b16 %v3362, %v3358
    %v3587 = vpack.c.b16 %v3363, %v3359
    %v3588 = vpack.c.b16 %v3364, %v3360
    %v3589 = vpack.c.b16 %v3369, %v3365
    %v3590 = vpack.c.b16 %v3370, %v3366
    %v3591 = vpack.c.b16 %v3371, %v3367
    %v3592 = vpack.c.b16 %v3372, %v3368
    %v3593 = vpack.c.b16 %v3377, %v3373
    %v3594 = vpack.c.b16 %v3378, %v3374
    %v3595 = vpack.c.b16 %v3379, %v3375
    %v3596 = vpack.c.b16 %v3380, %v3376
    %v3597 = vpack.c.b16 %v3385, %v3381
    %v3598 = vpack.c.b16 %v3386, %v3382
    %v3599 = vpack.c.b16 %v3387, %v3383
    %v3600 = vpack.c.b16 %v3388, %v3384
    %v3601 = vpack.c.b16 %v3393, %v3389
    %v3602 = vpack.c.b16 %v3394, %v3390
    %v3603 = vpack.c.b16 %v3395, %v3391
    %v3604 = vpack.c.b16 %v3396, %v3392
    %v3605 = vpack.c.b16 %v3401, %v3397
    %v3606 = vpack.c.b16 %v3402, %v3398
    %v3607 = vpack.c.b16 %v3403, %v3399
    %v3608 = vpack.c.b16 %v3404, %v3400
    %v3609 = vpack.c.b16 %v3409, %v3405
    %v3610 = vpack.c.b16 %v3410, %v3406
    %v3611 = vpack.c.b16 %v3411, %v3407
    %v3612 = vpack.c.b16 %v3412, %v3408
    %v3613 = vpack.c.b16 %v3417, %v3413
    %v3614 = vpack.c.b16 %v3418, %v3414
    %v3615 = vpack.c.b16 %v3419, %v3415
    %v3616 = vpack.c.b16 %v3420, %v3416
    %v3617 = vpack.c.b16 %v3425, %v3421
    %v3618 = vpack.c.b16 %v3426, %v3422
    %v3619 = vpack.c.b16 %v3427, %v3423
    %v3620 = vpack.c.b16 %v3428, %v3424
    %v3621 = vpack.c.b16 %v3433, %v3429
    %v3622 = vpack.c.b16 %v3434, %v3430
    %v3623 = vpack.c.b16 %v3435, %v3431
    %v3624 = vpack.c.b16 %v3436, %v3432
    %v3625 = vpack.c.b16 %v3441, %v3437
    %v3626 = vpack.c.b16 %v3442, %v3438
    %v3627 = vpack.c.b16 %v3443, %v3439
    %v3628 = vpack.c.b16 %v3444, %v3440
    %v3629 = vpack.c.b16 %v3449, %v3445
    %v3630 = vpack.c.b16 %v3450, %v3446
    %v3631 = vpack.c.b16 %v3451, %v3447
    %v3632 = vpack.c.b16 %v3452, %v3448
    %v3633 = vpack.c.b16 %v3457, %v3453
    %v3634 = vpack.c.b16 %v3458, %v3454
    %v3635 = vpack.c.b16 %v3459, %v3455
    %v3636 = vpack.c.b16 %v3460, %v3456
    %v3637 = vpack.c.b16 %v3465, %v3461
    %v3638 = vpack.c.b16 %v3466, %v3462
    %v3639 = vpack.c.b16 %v3467, %v3463
    %v3640 = vpack.c.b16 %v3468, %v3464
    %v3641 = vpack.c.b16 %v3473, %v3469
    %v3642 = vpack.c.b16 %v3474, %v3470
    %v3643 = vpack.c.b16 %v3475, %v3471
    %v3644 = vpack.c.b16 %v3476, %v3472
    %v3645 = vpack.c.b16 %v3481, %v3477
    %v3646 = vpack.c.b16 %v3482, %v3478
    %v3647 = vpack.c.b16 %v3483, %v3479
    %v3648 = vpack.c.b16 %v3484, %v3480
    %v3649 = vpack.c.b16 %v3489, %v3485
    %v3650 = vpack.c.b16 %v3490, %v3486
    %v3651 = vpack.c.b16 %v3491, %v3487
    %v3652 = vpack.c.b16 %v3492, %v3488
    %v3653 = vpack.c.b16 %v3497, %v3493
    %v3654 = vpack.c.b16 %v3498, %v3494
    %v3655 = vpack.c.b16 %v3499, %v3495
    %v3656 = vpack.c.b16 %v3500, %v3496
    %v3657 = vpack.c.b16 %v3505, %v3501
    %v3658 = vpack.c.b16 %v3506, %v3502
    %v3659 = vpack.c.b16 %v3507, %v3503
    %v3660 = vpack.c.b16 %v3508, %v3504
    %v3661 = vpack.c.b16 %v3513, %v3509
    %v3662 = vpack.c.b16 %v3514, %v3510
    %v3663 = vpack.c.b16 %v3515, %v3511
    %v3664 = vpack.c.b16 %v3516, %v3512
    %v3665 = vpack.c.b16 %v3521, %v3517
    %v3666 = vpack.c.b16 %v3522, %v3518
    %v3667 = vpack.c.b16 %v3523, %v3519
    %v3668 = vpack.c.b16 %v3524, %v3520
    %v3669 = vpack.c.b16 %v3529, %v3525
    %v3670 = vpack.c.b16 %v3530, %v3526
    %v3671 = vpack.c.b16 %v3531, %v3527
    %v3672 = vpack.c.b16 %v3532, %v3528
    %v3673 = vpack.c.b16 %v3537, %v3533
    %v3674 = vpack.c.b16 %v3538, %v3534
    %v3675 = vpack.c.b16 %v3539, %v3535
    %v3676 = vpack.c.b16 %v3540, %v3536
    %v3677 = vpack.c.b16 %v3545, %v3541
    %v3678 = vpack.c.b16 %v3546, %v3542
    %v3679 = vpack.c.b16 %v3547, %v3543
    %v3680 = vpack.c.b16 %v3548, %v3544
    %v3681 = vpack.c.b16 %v3553, %v3549
    %v3682 = vpack.c.b16 %v3554, %v3550
    %v3683 = vpack.c.b16 %v3555, %v3551
    %v3684 = vpack.c.b16 %v3556, %v3552
    %3813 = vmatprep.subr.bf16.mxu0 %v3586
    %3814 = vmatpush1.bf16.msra.mxu0 %v3585
    %3815 = vmatprep.subr.bf16.mxu0 %v3582
    %3816 = vmatpush1.bf16.msra.mxu0 %v3581
    %3817 = vmatprep.subr.bf16.mxu0 %v3578
    %3818 = vmatpush1.bf16.msra.mxu0 %v3577
    %3819 = vmatprep.subr.bf16.mxu0 %v3574
    %3820 = vmatpush1.bf16.msra.mxu0 %v3573
    %3821 = vmatprep.subr.bf16.mxu0 %v3570
    %3822 = vmatpush1.bf16.msra.mxu0 %v3569
    %3823 = vmatprep.subr.bf16.mxu0 %v3566
    %3824 = vmatpush1.bf16.msra.mxu0 %v3565
    %3825 = vmatprep.subr.bf16.mxu0 %v3562
    %3826 = vmatpush1.bf16.msra.mxu0 %v3561
    %3827 = vmatprep.subr.bf16.mxu0 %v3558
    %3828 = vmatpush1.bf16.msra.mxu0 %v3557
    %3829 = vmatprep.subr.bf16.mxu0 %v3618
    %3830 = vmatpush2.bf16.msra.mxu0 %v3617
    %3831 = vmatprep.subr.bf16.mxu0 %v3614
    %3832 = vmatpush2.bf16.msra.mxu0 %v3613
    %3833 = vmatprep.subr.bf16.mxu0 %v3610
    %3834 = vmatpush2.bf16.msra.mxu0 %v3609
    %3835 = vmatprep.subr.bf16.mxu0 %v3606
    %3836 = vmatpush2.bf16.msra.mxu0 %v3605
    %3837 = vmatprep.subr.bf16.mxu0 %v3602
    %3838 = vmatpush2.bf16.msra.mxu0 %v3601
    %3839 = vmatprep.subr.bf16.mxu0 %v3598
    %3840 = vmatpush2.bf16.msra.mxu0 %v3597
    %3841 = vmatprep.subr.bf16.mxu0 %v3594
    %3842 = vmatpush2.bf16.msra.mxu0 %v3593
    %3843 = vmatprep.subr.bf16.mxu0 %v3590
    %3844 = vmatpush2.bf16.msra.mxu0 %v3589
    %3845 = vmatprep.mubr.bf16.mxu0 %v2032
    %3846 = vmatmul.mubr.bf16.gmra.mxu0 %v2031
    %v3847 = vpop.f32.mrf.mxu0
    %v3848 = vadd.f32 %v3160, %v3847
    %v3849 = vpop.f32.mrf.mxu0
    %v3850 = vadd.f32 %v3164, %v3849
    %v3851 = vpop.f32.mrf.mxu0
    %v3852 = vpop.f32.mrf.mxu0
    %3853 = vdwg.mxu0
    %3854 = vmatprep.subr.bf16.mxu0 %v3650
    %3855 = vmatpush1.bf16.msra.mxu0 %v3649
    %3856 = vmatprep.subr.bf16.mxu0 %v3646
    %3857 = vmatpush1.bf16.msra.mxu0 %v3645
    %3858 = vmatprep.subr.bf16.mxu0 %v3642
    %3859 = vmatpush1.bf16.msra.mxu0 %v3641
    %3860 = vmatprep.subr.bf16.mxu0 %v3638
    %3861 = vmatpush1.bf16.msra.mxu0 %v3637
    %3862 = vmatprep.subr.bf16.mxu0 %v3634
    %3863 = vmatpush1.bf16.msra.mxu0 %v3633
    %3864 = vmatprep.subr.bf16.mxu0 %v3630
    %3865 = vmatpush1.bf16.msra.mxu0 %v3629
    %3866 = vmatprep.subr.bf16.mxu0 %v3626
    %3867 = vmatpush1.bf16.msra.mxu0 %v3625
    %3868 = vmatprep.subr.bf16.mxu0 %v3622
    %3869 = vmatpush1.bf16.msra.mxu0 %v3621
    %3870 = vmatprep.subr.bf16.mxu0 %v3682
    %3871 = vmatpush2.bf16.msra.mxu0 %v3681
    %3872 = vmatprep.subr.bf16.mxu0 %v3678
    %3873 = vmatpush2.bf16.msra.mxu0 %v3677
    %3874 = vmatprep.subr.bf16.mxu0 %v3674
    %3875 = vmatpush2.bf16.msra.mxu0 %v3673
    %3876 = vmatprep.subr.bf16.mxu0 %v3670
    %3877 = vmatpush2.bf16.msra.mxu0 %v3669
    %3878 = vmatprep.subr.bf16.mxu0 %v3666
    %3879 = vmatpush2.bf16.msra.mxu0 %v3665
    %3880 = vmatprep.subr.bf16.mxu0 %v3662
    %3881 = vmatpush2.bf16.msra.mxu0 %v3661
    %3882 = vmatprep.subr.bf16.mxu0 %v3658
    %3883 = vmatpush2.bf16.msra.mxu0 %v3657
    %3884 = vmatprep.subr.bf16.mxu0 %v3654
    %3885 = vmatpush2.bf16.msra.mxu0 %v3653
    %3886 = vmatprep.mubr.bf16.mxu0 %v2034
    %3887 = vmatmul.mubr.bf16.gmra.mxu0 %v2033
    %v3888 = vpop.f32.mrf.mxu0
    %v3889 = vadd.f32 %v3848, %v3888
    %v3890 = vpop.f32.mrf.mxu0
    %v3891 = vadd.f32 %v3850, %v3890
    %v3892 = vpop.f32.mrf.mxu0
    %v3893 = vpop.f32.mrf.mxu0
    %3894 = vdwg.mxu0
    %3895 = vmatprep.subr.bf16.mxu0 %v3588
    %3896 = vmatpush1.bf16.msra.mxu0 %v3587
    %3897 = vmatprep.subr.bf16.mxu0 %v3584
    %3898 = vmatpush1.bf16.msra.mxu0 %v3583
    %3899 = vmatprep.subr.bf16.mxu0 %v3580
    %3900 = vmatpush1.bf16.msra.mxu0 %v3579
    %3901 = vmatprep.subr.bf16.mxu0 %v3576
    %3902 = vmatpush1.bf16.msra.mxu0 %v3575
    %3903 = vmatprep.subr.bf16.mxu0 %v3572
    %3904 = vmatpush1.bf16.msra.mxu0 %v3571
    %3905 = vmatprep.subr.bf16.mxu0 %v3568
    %3906 = vmatpush1.bf16.msra.mxu0 %v3567
    %3907 = vmatprep.subr.bf16.mxu0 %v3564
    %3908 = vmatpush1.bf16.msra.mxu0 %v3563
    %3909 = vmatprep.subr.bf16.mxu0 %v3560
    %3910 = vmatpush1.bf16.msra.mxu0 %v3559
    %3911 = vmatprep.subr.bf16.mxu0 %v3620
    %3912 = vmatpush2.bf16.msra.mxu0 %v3619
    %3913 = vmatprep.subr.bf16.mxu0 %v3616
    %3914 = vmatpush2.bf16.msra.mxu0 %v3615
    %3915 = vmatprep.subr.bf16.mxu0 %v3612
    %3916 = vmatpush2.bf16.msra.mxu0 %v3611
    %3917 = vmatprep.subr.bf16.mxu0 %v3608
    %3918 = vmatpush2.bf16.msra.mxu0 %v3607
    %3919 = vmatprep.subr.bf16.mxu0 %v3604
    %3920 = vmatpush2.bf16.msra.mxu0 %v3603
    %3921 = vmatprep.subr.bf16.mxu0 %v3600
    %3922 = vmatpush2.bf16.msra.mxu0 %v3599
    %3923 = vmatprep.subr.bf16.mxu0 %v3596
    %3924 = vmatpush2.bf16.msra.mxu0 %v3595
    %3925 = vmatprep.subr.bf16.mxu0 %v3592
    %3926 = vmatpush2.bf16.msra.mxu0 %v3591
    %3927 = vmatprep.mubr.bf16.mxu0 %v2032
    %3928 = vmatmul.mubr.bf16.gmra.mxu0 %v2031
    %v3929 = vpop.f32.mrf.mxu0
    %v3930 = vadd.f32 %v3168, %v3929
    %v3931 = vpop.f32.mrf.mxu0
    %v3932 = vadd.f32 %v3172, %v3931
    %v3933 = vpop.f32.mrf.mxu0
    %v3934 = vpop.f32.mrf.mxu0
    %3935 = vdwg.mxu0
    %3936 = vmatprep.subr.bf16.mxu0 %v3652
    %3937 = vmatpush1.bf16.msra.mxu0 %v3651
    %3938 = vmatprep.subr.bf16.mxu0 %v3648
    %3939 = vmatpush1.bf16.msra.mxu0 %v3647
    %3940 = vmatprep.subr.bf16.mxu0 %v3644
    %3941 = vmatpush1.bf16.msra.mxu0 %v3643
    %3942 = vmatprep.subr.bf16.mxu0 %v3640
    %3943 = vmatpush1.bf16.msra.mxu0 %v3639
    %3944 = vmatprep.subr.bf16.mxu0 %v3636
    %3945 = vmatpush1.bf16.msra.mxu0 %v3635
    %3946 = vmatprep.subr.bf16.mxu0 %v3632
    %3947 = vmatpush1.bf16.msra.mxu0 %v3631
    %3948 = vmatprep.subr.bf16.mxu0 %v3628
    %3949 = vmatpush1.bf16.msra.mxu0 %v3627
    %3950 = vmatprep.subr.bf16.mxu0 %v3624
    %3951 = vmatpush1.bf16.msra.mxu0 %v3623
    %3952 = vmatprep.subr.bf16.mxu0 %v3684
    %3953 = vmatpush2.bf16.msra.mxu0 %v3683
    %3954 = vmatprep.subr.bf16.mxu0 %v3680
    %3955 = vmatpush2.bf16.msra.mxu0 %v3679
    %3956 = vmatprep.subr.bf16.mxu0 %v3676
    %3957 = vmatpush2.bf16.msra.mxu0 %v3675
    %3958 = vmatprep.subr.bf16.mxu0 %v3672
    %3959 = vmatpush2.bf16.msra.mxu0 %v3671
    %3960 = vmatprep.subr.bf16.mxu0 %v3668
    %3961 = vmatpush2.bf16.msra.mxu0 %v3667
    %3962 = vmatprep.subr.bf16.mxu0 %v3664
    %3963 = vmatpush2.bf16.msra.mxu0 %v3663
    %3964 = vmatprep.subr.bf16.mxu0 %v3660
    %3965 = vmatpush2.bf16.msra.mxu0 %v3659
    %3966 = vmatprep.subr.bf16.mxu0 %v3656
    %3967 = vmatpush2.bf16.msra.mxu0 %v3655
    %3968 = vmatprep.mubr.bf16.mxu0 %v2034
    %3969 = vmatmul.mubr.bf16.gmra.mxu0 %v2033
    %v3970 = vpop.f32.mrf.mxu0
    %v3971 = vadd.f32 %v3930, %v3970
    %v3972 = vpop.f32.mrf.mxu0
    %v3973 = vadd.f32 %v3932, %v3972
    %v3974 = vpop.f32.mrf.mxu0
    %v3975 = vpop.f32.mrf.mxu0
    %3976 = vdwg.mxu0
    %v3977 = vmax.f32 %v3889, 0.0
    %v3978 = vmax.f32 %v3891, 0.0
    %v3979 = vmax.f32 %v3971, 0.0
    %v3980 = vmax.f32 %v3973, 0.0
    %v3981 = vld [vmem:[#allocation10] sm:$0xff]
    %v3983 = vlaneseq
    %v3984 = vshrl.u32 %v3983, 7
    %v3985 = vsub.s32 0, %v3984
    %v3986 = vrot.slane %v3981, %v3985
    %v3987 = vlaneseq
    %v3988 = vshrl.u32 %v3987, 7
    %v3989 = vsub.s32 2, %v3988
    %v3990 = vrot.slane %v3981, %v3989
    %v3991 = vlaneseq
    %v3992 = vshrl.u32 %v3991, 7
    %v3993 = vsub.s32 4, %v3992
    %v3994 = vrot.slane %v3981, %v3993
    %v3995 = vlaneseq
    %v3996 = vshrl.u32 %v3995, 7
    %v3997 = vsub.s32 6, %v3996
    %v3998 = vrot.slane %v3981, %v3997
    %v4003 = vlaneseq
    %v4004 = vshrl.u32 %v4003, 7
    %v4005 = vsub.s32 0, %v4004
    %v4006 = vrot.slane %v3986, %v4005
    %v4007 = vlaneseq
    %v4008 = vshrl.u32 %v4007, 7
    %v4009 = vsub.s32 0, %v4008
    %v4010 = vrot.slane %v3990, %v4009
    %v4011 = vlaneseq
    %v4012 = vshrl.u32 %v4011, 7
    %v4013 = vsub.s32 0, %v4012
    %v4014 = vrot.slane %v3994, %v4013
    %v4015 = vlaneseq
    %v4016 = vshrl.u32 %v4015, 7
    %v4017 = vsub.s32 0, %v4016
    %v4018 = vrot.slane %v3998, %v4017
    %v4019 = vmul.f32 %v3005, %v4006
    %v4020 = vmul.f32 %v3006, %v4010
    %v4021 = vmul.f32 %v3007, %v4014
    %v4022 = vmul.f32 %v3008, %v4018
    %v4023 = vadd.f32 %v4019, %v4020
    %v4024 = vadd.f32 %v4023, %v4021
    %v4025 = vadd.f32 %v4024, %v4022
    %4026 = vadd.xlane.f32.xlu0 %v4025
    %v4027 = vpop.xlane.xlu0 %4026
    %v4028 = vlaneseq
    %v4029 = vshrl.u32 %v4028, 7
    %v4030 = vsub.s32 1, %v4029
    %v4031 = vrot.slane %v3981, %v4030
    %v4032 = vlaneseq
    %v4033 = vshrl.u32 %v4032, 7
    %v4034 = vsub.s32 3, %v4033
    %v4035 = vrot.slane %v3981, %v4034
    %v4036 = vlaneseq
    %v4037 = vshrl.u32 %v4036, 7
    %v4038 = vsub.s32 5, %v4037
    %v4039 = vrot.slane %v3981, %v4038
    %v4040 = vlaneseq
    %v4041 = vshrl.u32 %v4040, 7
    %v4042 = vsub.s32 7, %v4041
    %v4043 = vrot.slane %v3981, %v4042
    %v4048 = vlaneseq
    %v4049 = vshrl.u32 %v4048, 7
    %v4050 = vsub.s32 1, %v4049
    %v4051 = vrot.slane %v4031, %v4050
    %v4052 = vlaneseq
    %v4053 = vshrl.u32 %v4052, 7
    %v4054 = vsub.s32 1, %v4053
    %v4055 = vrot.slane %v4035, %v4054
    %v4056 = vlaneseq
    %v4057 = vshrl.u32 %v4056, 7
    %v4058 = vsub.s32 1, %v4057
    %v4059 = vrot.slane %v4039, %v4058
    %v4060 = vlaneseq
    %v4061 = vshrl.u32 %v4060, 7
    %v4062 = vsub.s32 1, %v4061
    %v4063 = vrot.slane %v4043, %v4062
    %v4064 = vmul.f32 %v3977, %v4051
    %v4065 = vmul.f32 %v3978, %v4055
    %v4066 = vmul.f32 %v3979, %v4059
    %v4067 = vmul.f32 %v3980, %v4063
    %v4068 = vadd.f32 %v4064, %v4065
    %v4069 = vadd.f32 %v4068, %v4066
    %v4070 = vadd.f32 %v4069, %v4067
    %4071 = vadd.xlane.f32.xlu0 %v4070
    %v4072 = vpop.xlane.xlu0 %4071
    %vm4073 = vcmask 7168
    %v4074 = vsel %vm4073, %v4027, %v4072
    %v4075 = vld [vmem:[%s7] sm:$0x1]
    %v4077 = vlaneseq
    %v4078 = vshrl.u32 %v4077, 7
    %v4079 = vsub.s32 0, %v4078
    %v4080 = vrot.slane %v4075, %v4079
    %v4082 = vadd.f32 %v4074, %v4080
    %vm4083 = vcmask 15360
    %4084 = vst.msk [vmem:[%s8] sm:$0xff] %vm4083, %v4082
    // Predicated region
    $region58: #{tpu_custom_call.1} parent=1 // pred_check
      _
    $region59: #{tpu_custom_call.1} parent=1 // pred_check_branch
      %4086 = sbr.rel (0) target = $region61
    $region60: #{tpu_custom_call.1} parent=1 // pred_region
      _
    $region61: #{tpu_custom_call.1} parent=1 // pred_fallthru
      _
    // Predicated region
    $region62: #{tpu_custom_call.1} parent=1 // pred_check
      _
    $region63: #{tpu_custom_call.1} parent=1 // pred_check_branch
      %4088 = sbr.rel (0) target = $region65
    $region64: #{tpu_custom_call.1} parent=1 // pred_region
      _
    $region65: #{tpu_custom_call.1} parent=1 // pred_fallthru
      _
    %4089 = vsyncpa [#allocation3], 1
    %4090 = vsyncpa [#allocation5], 1
    %4091 = vsyncpa [#allocation8], 1
    %4092 = vsyncpa [#allocation11], 1

</llo_original>
